<compile_context>
chip_gen: v6e
topology: v6e:2x2x1
jax: 0.10.0
libtpu: 0.0.40
codegen_flags: <defaults>
</compile_context>

<pallas_src>
import functools

import jax
import jax.numpy as jnp
from jax.experimental import pallas as pl
from jax.experimental.pallas import tpu as pltpu


def _addmm_kernel(inp_ref, a_ref, b_ref, o_ref, *, mxu_dtype):
    k = pl.program_id(2)

    # Output block stays resident across the k axis (index_map constant in k);
    # seed it with the bias once and accumulate MXU partial products into it.
    @pl.when(k == 0)
    def _():
        o_ref[...] = inp_ref[...]

    o_ref[...] += jnp.dot(a_ref[...].astype(mxu_dtype),
                          b_ref[...].astype(mxu_dtype),
                          preferred_element_type=jnp.float32)


def _round_up(x, m):
    return x + (-x) % m


def _pick_tile(dim, pref, align=128):
    """Tile size <= pref (multiple of `align`), preferring an exact divisor of
    `dim` near `pref` so no padding is needed."""
    dim_p = _round_up(dim, align)
    pref = max(align, min(_round_up(pref, align), dim_p))
    if dim % align == 0:
        for t in range(pref, max(align, pref // 2) - 1, -align):
            if dim % t == 0:
                return t
    return pref


def _pad2d(x, rm, cm):
    r, c = x.shape
    pr, pc = (-r) % rm, (-c) % cm
    if pr or pc:
        x = jnp.pad(x, ((0, pr), (0, pc)))
    return x


def addmm_pallas(inp, x1, x2, *, tm=512, tn=512, tk=2048,
                 mxu_dtype=jnp.bfloat16):
    """Tiled addmm: out = inp + x1 @ x2 (f32 output, f32 accumulation)."""
    M, K = x1.shape
    K2, N = x2.shape
    assert K == K2 and inp.shape == (M, N)

    tm = _pick_tile(M, tm)
    tn = _pick_tile(N, tn)
    tk = _pick_tile(K, tk)
    Mp, Np, Kp = _round_up(M, tm), _round_up(N, tn), _round_up(K, tk)

    # v7x megacore: keep >= 2 parallel (i, j) tiles when the problem allows.
    if Mp // tm == 1 and Np // tn == 1:
        if tm >= 256:
            tm //= 2
        elif tn >= 256:
            tn //= 2

    reuse_a = Np // tn   # times A is streamed from HBM
    reuse_b = Mp // tm   # times B is streamed from HBM

    # Pre-cast to bf16 only when the operand is re-read enough times for the
    # extra wrapper-side HBM pass to pay off; otherwise cast inside the kernel.
    a = x1.astype(mxu_dtype) if (reuse_a > 2 and x1.dtype != mxu_dtype) else x1
    b = x2.astype(mxu_dtype) if (reuse_b > 2 and x2.dtype != mxu_dtype) else x2
    c = inp if inp.dtype == jnp.float32 else inp.astype(jnp.float32)

    # Zero-padding (only when a tile doesn't divide) is exact for addmm.
    a = _pad2d(a, tm, tk)
    b = _pad2d(b, tk, tn)
    c = _pad2d(c, tm, tn)
    grid = (Mp // tm, Np // tn, Kp // tk)

    cost = pl.CostEstimate(
        flops=2 * Mp * Np * Kp,
        transcendentals=0,
        bytes_accessed=int(a.size * a.dtype.itemsize * reuse_a
                           + b.size * b.dtype.itemsize * reuse_b
                           + c.size * 4 + Mp * Np * 4),
    )

    kernel = functools.partial(_addmm_kernel, mxu_dtype=mxu_dtype)
    out = pl.pallas_call(
        kernel,
        out_shape=jax.ShapeDtypeStruct((Mp, Np), jnp.float32),
        grid=grid,
        in_specs=[
            pl.BlockSpec((tm, tn), lambda i, j, k: (i, j)),  # inp (resident over k)
            pl.BlockSpec((tm, tk), lambda i, j, k: (i, k)),  # x1
            pl.BlockSpec((tk, tn), lambda i, j, k: (k, j)),  # x2
        ],
        out_specs=pl.BlockSpec((tm, tn), lambda i, j, k: (i, j)),
        compiler_params=pltpu.CompilerParams(
            dimension_semantics=("parallel", "parallel", "arbitrary"),
            vmem_limit_bytes=48 << 20),
        cost_estimate=cost,
    )(c, a, b)

    return out[:M, :N]


def addmm(inp, x1, x2, **kwargs):
    """Forward of the PyTorch Model: inp + x1 @ x2."""
    M, K = x1.shape
    _, N = x2.shape
    flops = 2 * M * N * K
    op_bytes = 4 * (M * K + K * N + 2 * M * N)
    # Small problems (e.g. the module's 3x3): Pallas launch + pad/cast HLOs +
    # per-grid-step overhead lose to XLA's fused dot+add by orders of
    # magnitude.  Only dispatch the kernel for multi-GFLOP / VMEM-scale work.
    if flops < (4 << 30) and op_bytes < (16 << 20):
        return inp + jnp.dot(x1, x2)
    return addmm_pallas(inp, x1, x2, **kwargs)


if __name__ == "__main__":
    key = jax.random.PRNGKey(0)
    k_inp, k_x1, k_x2, k_a, k_b, k_c = jax.random.split(key, 6)

    # --- Module-faithful forward: (3, 3) addmm (tiny -> fused jnp path) -----
    inp3 = jax.random.normal(k_inp, (3, 3), dtype=jnp.float32)
    x1_3 = jax.random.normal(k_x1, (3, 3), dtype=jnp.float32)
    x2_3 = jax.random.normal(k_x2, (3, 3), dtype=jnp.float32)
    out3 = jax.block_until_ready(addmm(inp3, x1_3, x2_3))
    ref3 = inp3 + jnp.dot(x1_3, x2_3)
    assert jnp.allclose(out3, ref3, atol=1e-5, rtol=1e-5), "3x3 mismatch"

    # --- Pallas kernel path (forced; below the natural GFLOP cutoff) --------
    # tm = 512 divides M, tn auto-shrinks to 384 (divides N -> no padding),
    # tk = K = 1024 -> single K step; grid = (1, 2, 1) so both v7x cores work.
    # Reuse factors are 1-2, so A/B stream as f32 and are cast in-kernel.
    M, K, N = 512, 1024, 768
    inp_l = jax.random.normal(k_c, (M, N), dtype=jnp.float32)
    a_l = jax.random.normal(k_a, (M, K), dtype=jnp.float32)
    b_l = jax.random.normal(k_b, (K, N), dtype=jnp.float32)
    out_l = jax.block_until_ready(addmm_pallas(inp_l, a_l, b_l))

    # Reference with matching bf16 operand rounding, f32 accumulation.
    ref_l = inp_l + jnp.dot(a_l.astype(jnp.bfloat16), b_l.astype(jnp.bfloat16),
                            preferred_element_type=jnp.float32)
    assert jnp.allclose(out_l, ref_l, atol=5e-2, rtol=1e-2), "tiled mismatch"

    print("KERNEL_OK")
</pallas_src>

<mosaic_0001>
module attributes {stable_mosaic.version = 11 : i64} {
  func.func @_addmm_kernel(%arg0: i32, %arg1: i32, %arg2: i32, %arg3: memref<512x384xf32, #tpu.memory_space<vmem>>, %arg4: memref<512x1024xf32, #tpu.memory_space<vmem>>, %arg5: memref<1024x384xf32, #tpu.memory_space<vmem>>, %arg6: memref<512x384xf32, #tpu.memory_space<vmem>>) attributes {dimension_semantics = [#tpu.dimension_semantics<parallel>, #tpu.dimension_semantics<parallel>, #tpu.dimension_semantics<arbitrary>], iteration_bounds = array<i64: 1, 2, 1>, scalar_prefetch = 0 : i64, scratch_operands = 0 : i64, tpu.core_type = #tpu.core_type<tc>, window_params = [{transform_indices = @transform_0, window_bounds = array<i64: 512, 384>}, {transform_indices = @transform_1, window_bounds = array<i64: 512, 1024>}, {transform_indices = @transform_2, window_bounds = array<i64: 1024, 384>}, {transform_indices = @transform_3, window_bounds = array<i64: 512, 384>}]} {
    %c0_i32 = arith.constant 0 : i32
    %0 = arith.cmpi eq, %arg2, %c0_i32 : i32
    %1 = arith.extui %0 : i1 to i32
    %c0_i32_0 = arith.constant 0 : i32
    %2 = arith.cmpi ne, %1, %c0_i32_0 : i32
    scf.if %2 {
      %c0_8 = arith.constant 0 : index
      %c0_9 = arith.constant 0 : index
      %11 = vector.load %arg3[%c0_8, %c0_9] : memref<512x384xf32, #tpu.memory_space<vmem>>, vector<512x384xf32>
      %c0_10 = arith.constant 0 : index
      %c0_11 = arith.constant 0 : index
      %12 = vector.load %arg6[%c0_10, %c0_11] : memref<512x384xf32, #tpu.memory_space<vmem>>, vector<512x384xf32>
      tpu.vector_store %arg6[%c0_10, %c0_11], %11 {strides = array<i32>} : memref<512x384xf32, #tpu.memory_space<vmem>>, vector<512x384xf32>,
    } else {
    }
    %c0 = arith.constant 0 : index
    %c0_1 = arith.constant 0 : index
    %3 = vector.load %arg6[%c0, %c0_1] : memref<512x384xf32, #tpu.memory_space<vmem>>, vector<512x384xf32>
    %c0_2 = arith.constant 0 : index
    %c0_3 = arith.constant 0 : index
    %4 = vector.load %arg4[%c0_2, %c0_3] : memref<512x1024xf32, #tpu.memory_space<vmem>>, vector<512x1024xf32>
    %5 = arith.truncf %4 : vector<512x1024xf32> to vector<512x1024xbf16>
    %c0_4 = arith.constant 0 : index
    %c0_5 = arith.constant 0 : index
    %6 = vector.load %arg5[%c0_4, %c0_5] : memref<1024x384xf32, #tpu.memory_space<vmem>>, vector<1024x384xf32>
    %7 = arith.truncf %6 : vector<1024x384xf32> to vector<1024x384xbf16>
    %cst = arith.constant dense<0.000000e+00> : vector<512x384xf32>
    %8 = tpu.matmul %5, %7, %cst {dimension_numbers = #tpu.dot_dimension_numbers<[1], [0], [0], [1], [0, 0, 1, 1], [], []>} : vector<512x1024xbf16>, vector<1024x384xbf16>, vector<512x384xf32> -> vector<512x384xf32>
    %9 = arith.addf %3, %8 : vector<512x384xf32>
    %c0_6 = arith.constant 0 : index
    %c0_7 = arith.constant 0 : index
    %10 = vector.load %arg6[%c0_6, %c0_7] : memref<512x384xf32, #tpu.memory_space<vmem>>, vector<512x384xf32>
    tpu.vector_store %arg6[%c0_6, %c0_7], %9 {strides = array<i32>} : memref<512x384xf32, #tpu.memory_space<vmem>>, vector<512x384xf32>,
    return
  }
  func.func @transform_0(%arg0: i32, %arg1: i32, %arg2: i32) -> (i32, i32) {
    %c0_i32 = arith.constant 0 : i32
    return %arg0, %arg1 : i32, i32
  }
  func.func @transform_1(%arg0: i32, %arg1: i32, %arg2: i32) -> (i32, i32) {
    %c0_i32 = arith.constant 0 : i32
    return %arg0, %arg2 : i32, i32
  }
  func.func @transform_2(%arg0: i32, %arg1: i32, %arg2: i32) -> (i32, i32) {
    %c0_i32 = arith.constant 0 : i32
    return %arg2, %arg1 : i32, i32
  }
  func.func @transform_3(%arg0: i32, %arg1: i32, %arg2: i32) -> (i32, i32) {
    %c0_i32 = arith.constant 0 : i32
    return %arg0, %arg1 : i32, i32
  }
}

</mosaic_0001>

<llo_original>
// kernel: tpu_custom_call.1
$region0: #{tpu_custom_call.1}
  #allocation0 [shape = 'u32[]', space=smem, size = 0x4, offset = 0x4, fixed_abs, tag = 'smem constant byte address 0x4 - core index']
  #allocation1 [shape = 'u32[144,128]{1,0:T(1,128)}', space=vmem, size = 0x12000, scoped, tag = 'internal scratch']
  %s0 = inlined_call_operand.hbm [shape: f32[512,768], index: 0, kind: input, shape index: {}]
  %s1 = inlined_call_operand.hbm [shape: f32[512,1024], index: 1, kind: input, shape index: {}]
  %s2 = inlined_call_operand.hbm [shape: f32[1024,768], index: 2, kind: input, shape index: {}]
  %s3 = inlined_call_operand.hbm [shape: f32[512,768], index: 3, kind: output, shape index: {}]
  %s4 = sld [smem:[#allocation0]]
  $region61: #{tpu_custom_call.1} parent=0
    _
  %s6 = ssub.s32 1, %s4
  %s7 = scalar_select 0, %s6, %s4
  $region1: #{tpu_custom_call.1} parent=0
    #allocation2 [shape = 'u8[1572864]{0}', space=vmem, size = 0x180000, scoped, tag = 'input window, operand 0']
    #allocation3 [shape = 's32[2]{0}', space=sflag, size = 0x8, scoped, tag = 'scoped memory for tpu_custom_call.1']
    #allocation4 [shape = 's32[2]{0}', space=sflag, size = 0x8, scoped, tag = 'scoped memory for tpu_custom_call.1']
    #allocation5 [shape = 'u8[2097152]{0}', space=vmem, size = 0x200000, scoped, tag = 'input window, operand 1, single buffered']
    #allocation6 [shape = 's32[1]{0}', space=sflag, size = 0x4, scoped, tag = 'scoped memory for tpu_custom_call.1']
    #allocation7 [shape = 'u8[3145728]{0}', space=vmem, size = 0x300000, scoped, tag = 'input window, operand 2']
    #allocation8 [shape = 'u8[1572864]{0}', space=vmem, size = 0x180000, scoped, tag = 'output window, operand 0']
    %8 = vsyncpa [#allocation3], 0
    %s9 = scalar_lea.sflag [#allocation3], 1
    %10 = vsyncpa %s9, 0
    %11 = vsyncpa [#allocation6], 0
    %12 = vsyncpa [#allocation4], 0
    %s13 = scalar_lea.sflag [#allocation4], 1
    %14 = vsyncpa %s13, 0
    loop: start=0, step=1, limit=4
    $region2: #{tpu_custom_call.1} parent=1 // loop_pre_header
      _
    $region3: #{tpu_custom_call.1} parent=1 // loop_header
      %s16 = sphi 0, %s20
      %p17 = scmp.ge.s32.totalorder %s16, 4
      %s23 = sphi 0, %s42
      %s24 = sphi 0, %s38
      %s25 = sphi 0, %s34
      %s26 = sphi 0, %s23
      %s27 = sphi 0, %s24
      %s28 = sphi 0, %s25
      %s29 = sphi 0, %s26
      %s30 = sphi 0, %s27
      %s31 = sphi 0, %s28
      %s47 = sphi 0, %s49
      %s50 = sphi 0, %s47
      %s51 = sphi 0, %s50
      %s67 = sphi 0, %s51
      %s75 = sphi 0, %s77
      %s78 = sphi 0, %s75
      %s79 = sphi 0, %s78
      %s95 = sphi 0, %s79
      %s103 = sphi 0, %s105
      %s106 = sphi 0, %s103
      %s107 = sphi 0, %s106
      %s123 = sphi 0, %s107
      %s131 = sphi 0, %s133
      %s134 = sphi 0, %s131
      %s135 = sphi 0, %s134
      %s151 = sphi 0, %s135
    $region4: #{tpu_custom_call.1} parent=1 // loop_header_branch
      %19 = sbr.rel (%p17) target = $region8
    $region5: #{tpu_custom_call.1} parent=1 // loop_body
      %s21 = ssub.s32 %s16, 1
      %s22 = ssub.s32 %s16, 2
      %s32 = sadd.s32 1, %s25
      %p33 = scmp.ge.s32.totalorder %s32, 1
      %s34 = scalar_select %p33, 0, %s32
      %s35 = sadd.s32 1, %s24
      %s36 = scalar_select %p33, %s35, %s24
      %p37 = scmp.ge.s32.totalorder %s36, 2
      %s38 = scalar_select %p37, 0, %s36
      %s39 = sadd.s32 1, %s23
      %s40 = scalar_select %p37, %s39, %s23
      %p41 = scmp.ge.s32.totalorder %s40, 1
      %s42 = scalar_select %p41, 0, %s40
      %s43 = ssub.s32 %s23, %s42
      %s44 = ssub.s32 %s24, %s38
      %s45 = sor.u32 %s43, %s44
      %p46 = scmp.eq.s32.totalorder %s45, 0
      %s48 = sadd.s32 %s47, 1
      %s49 = scalar_select %p46, %s47, %s48
      %p52 = pneg %p46
      %p53 = scmp.eq.s32.totalorder %s16, 1
      %p54 = por %p52, %p53
      %p55 = scmp.ne.s32.totalorder %s47, %s50
      %p56 = scmp.eq.s32.totalorder %s16, 0
      %p57 = por %p55, %p56
      %p58 = scmp.ne.s32.totalorder %s47, %s50
      %p59 = scmp.eq.s32.totalorder %s21, 1
      %p60 = por %p58, %p59
      %p61 = scmp.ne.s32.totalorder %s50, %s51
      %p62 = scmp.eq.s32.totalorder %s21, 0
      %p63 = por %p61, %p62
      %p64 = scmp.ne.s32.totalorder %s50, %s51
      %p65 = scmp.eq.s32.totalorder %s22, 1
      %p66 = por %p64, %p65
      %p68 = scmp.ne.s32.totalorder %s51, %s67
      %p69 = scmp.eq.s32.totalorder %s22, 0
      %p70 = por %p68, %p69
      %s71 = ssub.s32 %s23, %s42
      %s72 = ssub.s32 %s25, %s34
      %s73 = sor.u32 %s71, %s72
      %p74 = scmp.eq.s32.totalorder %s73, 0
      %s76 = sadd.s32 %s75, 1
      %s77 = scalar_select %p74, %s75, %s76
      %p80 = pneg %p74
      %p81 = scmp.eq.s32.totalorder %s16, 1
      %p82 = por %p80, %p81
      %p83 = scmp.ne.s32.totalorder %s75, %s78
      %p84 = scmp.eq.s32.totalorder %s16, 0
      %p85 = por %p83, %p84
      %p86 = scmp.ne.s32.totalorder %s75, %s78
      %p87 = scmp.eq.s32.totalorder %s21, 1
      %p88 = por %p86, %p87
      %p89 = scmp.ne.s32.totalorder %s78, %s79
      %p90 = scmp.eq.s32.totalorder %s21, 0
      %p91 = por %p89, %p90
      %p92 = scmp.ne.s32.totalorder %s78, %s79
      %p93 = scmp.eq.s32.totalorder %s22, 1
      %p94 = por %p92, %p93
      %p96 = scmp.ne.s32.totalorder %s79, %s95
      %p97 = scmp.eq.s32.totalorder %s22, 0
      %p98 = por %p96, %p97
      %s99 = ssub.s32 %s25, %s34
      %s100 = ssub.s32 %s24, %s38
      %s101 = sor.u32 %s99, %s100
      %p102 = scmp.eq.s32.totalorder %s101, 0
      %s104 = sadd.s32 %s103, 1
      %s105 = scalar_select %p102, %s103, %s104
      %p108 = pneg %p102
      %p109 = scmp.eq.s32.totalorder %s16, 1
      %p110 = por %p108, %p109
      %p111 = scmp.ne.s32.totalorder %s103, %s106
      %p112 = scmp.eq.s32.totalorder %s16, 0
      %p113 = por %p111, %p112
      %p114 = scmp.ne.s32.totalorder %s103, %s106
      %p115 = scmp.eq.s32.totalorder %s21, 1
      %p116 = por %p114, %p115
      %p117 = scmp.ne.s32.totalorder %s106, %s107
      %p118 = scmp.eq.s32.totalorder %s21, 0
      %p119 = por %p117, %p118
      %p120 = scmp.ne.s32.totalorder %s106, %s107
      %p121 = scmp.eq.s32.totalorder %s22, 1
      %p122 = por %p120, %p121
      %p124 = scmp.ne.s32.totalorder %s107, %s123
      %p125 = scmp.eq.s32.totalorder %s22, 0
      %p126 = por %p124, %p125
      %s127 = ssub.s32 %s23, %s42
      %s128 = ssub.s32 %s24, %s38
      %s129 = sor.u32 %s127, %s128
      %p130 = scmp.eq.s32.totalorder %s129, 0
      %s132 = sadd.s32 %s131, 1
      %s133 = scalar_select %p130, %s131, %s132
      %p136 = pneg %p130
      %p137 = scmp.eq.s32.totalorder %s16, 1
      %p138 = por %p136, %p137
      %p139 = scmp.ne.s32.totalorder %s131, %s134
      %p140 = scmp.eq.s32.totalorder %s16, 0
      %p141 = por %p139, %p140
      %p142 = scmp.ne.s32.totalorder %s131, %s134
      %p143 = scmp.eq.s32.totalorder %s21, 1
      %p144 = por %p142, %p143
      %p145 = scmp.ne.s32.totalorder %s134, %s135
      %p146 = scmp.eq.s32.totalorder %s21, 0
      %p147 = por %p145, %p146
      %p148 = scmp.ne.s32.totalorder %s134, %s135
      %p149 = scmp.eq.s32.totalorder %s22, 1
      %p150 = por %p148, %p149
      %p152 = scmp.ne.s32.totalorder %s135, %s151
      %p153 = scmp.eq.s32.totalorder %s22, 0
      %p154 = por %p152, %p153
      %p155 = scmp.le.s32.totalorder 1, %s16
      %p156 = scmp.lt.s32.totalorder %s16, 3
      %p157 = pnand %p155, %p156
      %p158 = pneg %p157
      // Predicated region
      $region9: #{tpu_custom_call.1} parent=5 // pred_check
        _
      $region10: #{tpu_custom_call.1} parent=5 // pred_check_branch
        %160 = sbr.rel (%p157) target = $region12
      $region11: #{tpu_custom_call.1} parent=5 // pred_region
        %s161 = ssub.s32 %s16, 1
        // Predicated region
        $region13: #{tpu_custom_call.1} parent=11 // pred_check
          %p162 = pneg %p91
        $region14: #{tpu_custom_call.1} parent=11 // pred_check_branch
          %164 = sbr.rel (%p162) target = $region16
        $region15: #{tpu_custom_call.1} parent=11 // pred_region
          %s165 = smul.u32 64, %s26
          %s166 = smul.u32 8, %s28
          %s168 = ssub.s32 65536, 65536
          %169 = vsyncadd [#allocation6], %s168
          %s170 = smul.addr %s165, 8
          %s171 = sadd.s32 %s166, %s170
          %s172 = smul.addr %s171, 128
          %s173 = scalar_lea.hbm %s1, %s172
          %s174 = sshll.u32 [#allocation5], 4
          %s175 = int_to_ptr.vmem [resolvable:$true] %s174
          %180 = dma.hbm_to_vmem [thread:$0]  %s173, 65536, %s175, [#allocation6], 1024, 1024, 64
        $region16: #{tpu_custom_call.1} parent=11 // pred_fallthru
          _
      $region12: #{tpu_custom_call.1} parent=5 // pred_fallthru
        _
      %p181 = scmp.lt.s32.totalorder %s16, 2
      // Predicated region
      $region17: #{tpu_custom_call.1} parent=5 // pred_check
        %p182 = pneg %p181
      $region18: #{tpu_custom_call.1} parent=5 // pred_check_branch
        %184 = sbr.rel (%p182) target = $region20
      $region19: #{tpu_custom_call.1} parent=5 // pred_region
        // Predicated region
        $region21: #{tpu_custom_call.1} parent=19 // pred_check
          %p185 = pneg %p57
        $region22: #{tpu_custom_call.1} parent=19 // pred_check_branch
          %187 = sbr.rel (%p185) target = $region24
        $region23: #{tpu_custom_call.1} parent=19 // pred_region
          %s188 = sand.u32 %s16, 1
          %s189 = scalar_lea.sflag [#allocation3], %s188
          %s190 = sand.u32 %s47, 1
          %s191 = smul.addr %s190, 1536
          %s192 = scalar_lea.vmem [#allocation2], %s191
          %s193 = smul.u32 64, %s23
          %s194 = smul.u32 3, %s24
          %s196 = ssub.s32 24576, 24576
          %197 = vsyncadd %s189, %s196
          %s198 = smul.addr %s193, 6
          %s199 = sadd.s32 %s194, %s198
          %s200 = smul.addr %s199, 128
          %s201 = scalar_lea.hbm %s0, %s200
          %s202 = sshll.u32 %s192, 4
          %s203 = int_to_ptr.vmem [resolvable:$true] %s202
          %208 = dma.hbm_to_vmem [thread:$0]  %s201, 24576, %s203, %s189, 768, 384, 24
        $region24: #{tpu_custom_call.1} parent=19 // pred_fallthru
          _
        // Predicated region
        $region25: #{tpu_custom_call.1} parent=19 // pred_check
          %p209 = pneg %p113
        $region26: #{tpu_custom_call.1} parent=19 // pred_check_branch
          %211 = sbr.rel (%p209) target = $region28
        $region27: #{tpu_custom_call.1} parent=19 // pred_region
          %s212 = sand.u32 %s16, 1
          %s213 = scalar_lea.sflag [#allocation3], %s212
          %s214 = sand.u32 %s103, 1
          %s215 = smul.addr %s214, 3072
          %s216 = scalar_lea.vmem [#allocation7], %s215
          %s217 = smul.u32 128, %s25
          %s218 = smul.u32 3, %s24
          %s220 = ssub.s32 49152, 49152
          %221 = vsyncadd %s213, %s220
          %s222 = smul.addr %s217, 6
          %s223 = sadd.s32 %s218, %s222
          %s224 = smul.addr %s223, 128
          %s225 = scalar_lea.hbm %s2, %s224
          %s226 = sshll.u32 %s216, 4
          %s227 = int_to_ptr.vmem [resolvable:$true] %s226
          %232 = dma.hbm_to_vmem [thread:$0]  %s225, 49152, %s227, %s213, 768, 384, 24
        $region28: #{tpu_custom_call.1} parent=19 // pred_fallthru
          _
      $region20: #{tpu_custom_call.1} parent=5 // pred_fallthru
        _
      %p233 = scmp.le.s32.totalorder 1, %s16
      %p234 = scmp.lt.s32.totalorder %s16, 3
      %p235 = pnand %p233, %p234
      %p236 = pneg %p235
      // Predicated region
      $region29: #{tpu_custom_call.1} parent=5 // pred_check
        _
      $region30: #{tpu_custom_call.1} parent=5 // pred_check_branch
        %238 = sbr.rel (%p235) target = $region32
      $region31: #{tpu_custom_call.1} parent=5 // pred_region
        %s239 = ssub.s32 %s16, 1
        %s240 = sand.u32 %s21, 1
        %s241 = scalar_lea.sflag [#allocation3], %s240
        %s242 = sand.u32 %s50, 1
        %s243 = smul.addr %s242, 1536
        %s244 = scalar_lea.vmem [#allocation2], %s243
        // Predicated region
        $region33: #{tpu_custom_call.1} parent=31 // pred_check
          %p245 = pneg %p63
        $region34: #{tpu_custom_call.1} parent=31 // pred_check_branch
          %247 = sbr.rel (%p245) target = $region36
        $region35: #{tpu_custom_call.1} parent=31 // pred_region
          %248 = dma.done %s241, 24576
        $region36: #{tpu_custom_call.1} parent=31 // pred_fallthru
          _
        // Predicated region
        $region37: #{tpu_custom_call.1} parent=31 // pred_check
          %p249 = pneg %p91
        $region38: #{tpu_custom_call.1} parent=31 // pred_check_branch
          %251 = sbr.rel (%p249) target = $region40
        $region39: #{tpu_custom_call.1} parent=31 // pred_region
          %252 = dma.done [#allocation6], 65536
        $region40: #{tpu_custom_call.1} parent=31 // pred_fallthru
          _
        %s253 = sand.u32 %s21, 1
        %s254 = scalar_lea.sflag [#allocation3], %s253
        %s255 = sand.u32 %s106, 1
        %s256 = smul.addr %s255, 3072
        %s257 = scalar_lea.vmem [#allocation7], %s256
        // Predicated region
        $region41: #{tpu_custom_call.1} parent=31 // pred_check
          %p258 = pneg %p119
        $region42: #{tpu_custom_call.1} parent=31 // pred_check_branch
          %260 = sbr.rel (%p258) target = $region44
        $region43: #{tpu_custom_call.1} parent=31 // pred_region
          %261 = dma.done %s254, 49152
        $region44: #{tpu_custom_call.1} parent=31 // pred_fallthru
          _
        %s262 = sand.u32 %s21, 1
        %s263 = scalar_lea.sflag [#allocation3], %s262
        %s264 = sand.u32 %s50, 1
        %s265 = smul.addr %s264, 1536
        %s266 = scalar_lea.vmem [#allocation2], %s265
        %p267 = pneg %p63
        %p268 = pneg %p60
        %p269 = pneg %p91
        %p270 = pneg %p88
        %s271 = sand.u32 %s21, 1
        %s272 = scalar_lea.sflag [#allocation3], %s271
        %s273 = sand.u32 %s106, 1
        %s274 = smul.addr %s273, 3072
        %s275 = scalar_lea.vmem [#allocation7], %s274
        %p276 = pneg %p119
        %p277 = pneg %p116
        %p278 = pneg %p147
        %p279 = pneg %p144
        %s280 = sand.u32 %s134, 1
        %s281 = scalar_lea.sflag [#allocation4], %s280
        %s282 = sand.u32 %s134, 1
        %s283 = smul.addr %s282, 1536
        %s284 = scalar_lea.vmem [#allocation8], %s283
        %s285 = smul.u32 64, %s26
        %s286 = smul.u32 3, %s27
        %s287 = smul.u32 64, %s26
        %s288 = smul.u32 8, %s28
        %s289 = smul.u32 128, %s28
        %s290 = smul.u32 3, %s27
        %s291 = smul.u32 64, %s26
        %s292 = smul.u32 3, %s27
        %p294 = scmp.eq.s32.totalorder %s28, 0
        // Predicated region
        $region45: #{tpu_custom_call.1} parent=31 // pred_check
          %p295 = pneg %p294
        $region46: #{tpu_custom_call.1} parent=31 // pred_check_branch
          %297 = sbr.rel (%p295) target = $region48
        $region47: #{tpu_custom_call.1} parent=31 // pred_region
          %v298 = vld [vmem:[%s244] sm:$0xff]
          %v299 = vld [vmem:[%s244 + $0x8] sm:$0xff]
          %v300 = vld [vmem:[%s244 + $0x10] sm:$0xff]
          %v301 = vld [vmem:[%s244 + $0x18] sm:$0xff]
          %v302 = vld [vmem:[%s244 + $0x20] sm:$0xff]
          %v303 = vld [vmem:[%s244 + $0x28] sm:$0xff]
          %v304 = vld [vmem:[%s244 + $0x30] sm:$0xff]
          %v305 = vld [vmem:[%s244 + $0x38] sm:$0xff]
          %v306 = vld [vmem:[%s244 + $0x40] sm:$0xff]
          %v307 = vld [vmem:[%s244 + $0x48] sm:$0xff]
          %v308 = vld [vmem:[%s244 + $0x50] sm:$0xff]
          %v309 = vld [vmem:[%s244 + $0x58] sm:$0xff]
          %v310 = vld [vmem:[%s244 + $0x60] sm:$0xff]
          %v311 = vld [vmem:[%s244 + $0x68] sm:$0xff]
          %v312 = vld [vmem:[%s244 + $0x70] sm:$0xff]
          %v313 = vld [vmem:[%s244 + $0x78] sm:$0xff]
          %v314 = vld [vmem:[%s244 + $0x80] sm:$0xff]
          %v315 = vld [vmem:[%s244 + $0x88] sm:$0xff]
          %v316 = vld [vmem:[%s244 + $0x90] sm:$0xff]
          %v317 = vld [vmem:[%s244 + $0x98] sm:$0xff]
          %v318 = vld [vmem:[%s244 + $0xa0] sm:$0xff]
          %v319 = vld [vmem:[%s244 + $0xa8] sm:$0xff]
          %v320 = vld [vmem:[%s244 + $0xb0] sm:$0xff]
          %v321 = vld [vmem:[%s244 + $0xb8] sm:$0xff]
          %v322 = vld [vmem:[%s244 + $0xc0] sm:$0xff]
          %v323 = vld [vmem:[%s244 + $0xc8] sm:$0xff]
          %v324 = vld [vmem:[%s244 + $0xd0] sm:$0xff]
          %v325 = vld [vmem:[%s244 + $0xd8] sm:$0xff]
          %v326 = vld [vmem:[%s244 + $0xe0] sm:$0xff]
          %v327 = vld [vmem:[%s244 + $0xe8] sm:$0xff]
          %v328 = vld [vmem:[%s244 + $0xf0] sm:$0xff]
          %v329 = vld [vmem:[%s244 + $0xf8] sm:$0xff]
          %v330 = vld [vmem:[%s244 + $0x100] sm:$0xff]
          %v331 = vld [vmem:[%s244 + $0x108] sm:$0xff]
          %v332 = vld [vmem:[%s244 + $0x110] sm:$0xff]
          %v333 = vld [vmem:[%s244 + $0x118] sm:$0xff]
          %v334 = vld [vmem:[%s244 + $0x120] sm:$0xff]
          %v335 = vld [vmem:[%s244 + $0x128] sm:$0xff]
          %v336 = vld [vmem:[%s244 + $0x130] sm:$0xff]
          %v337 = vld [vmem:[%s244 + $0x138] sm:$0xff]
          %v338 = vld [vmem:[%s244 + $0x140] sm:$0xff]
          %v339 = vld [vmem:[%s244 + $0x148] sm:$0xff]
          %v340 = vld [vmem:[%s244 + $0x150] sm:$0xff]
          %v341 = vld [vmem:[%s244 + $0x158] sm:$0xff]
          %v342 = vld [vmem:[%s244 + $0x160] sm:$0xff]
          %v343 = vld [vmem:[%s244 + $0x168] sm:$0xff]
          %v344 = vld [vmem:[%s244 + $0x170] sm:$0xff]
          %v345 = vld [vmem:[%s244 + $0x178] sm:$0xff]
          %v346 = vld [vmem:[%s244 + $0x180] sm:$0xff]
          %v347 = vld [vmem:[%s244 + $0x188] sm:$0xff]
          %v348 = vld [vmem:[%s244 + $0x190] sm:$0xff]
          %v349 = vld [vmem:[%s244 + $0x198] sm:$0xff]
          %v350 = vld [vmem:[%s244 + $0x1a0] sm:$0xff]
          %v351 = vld [vmem:[%s244 + $0x1a8] sm:$0xff]
          %v352 = vld [vmem:[%s244 + $0x1b0] sm:$0xff]
          %v353 = vld [vmem:[%s244 + $0x1b8] sm:$0xff]
          %v354 = vld [vmem:[%s244 + $0x1c0] sm:$0xff]
          %v355 = vld [vmem:[%s244 + $0x1c8] sm:$0xff]
          %v356 = vld [vmem:[%s244 + $0x1d0] sm:$0xff]
          %v357 = vld [vmem:[%s244 + $0x1d8] sm:$0xff]
          %v358 = vld [vmem:[%s244 + $0x1e0] sm:$0xff]
          %v359 = vld [vmem:[%s244 + $0x1e8] sm:$0xff]
          %v360 = vld [vmem:[%s244 + $0x1f0] sm:$0xff]
          %v361 = vld [vmem:[%s244 + $0x1f8] sm:$0xff]
          %v362 = vld [vmem:[%s244 + $0x200] sm:$0xff]
          %v363 = vld [vmem:[%s244 + $0x208] sm:$0xff]
          %v364 = vld [vmem:[%s244 + $0x210] sm:$0xff]
          %v365 = vld [vmem:[%s244 + $0x218] sm:$0xff]
          %v366 = vld [vmem:[%s244 + $0x220] sm:$0xff]
          %v367 = vld [vmem:[%s244 + $0x228] sm:$0xff]
          %v368 = vld [vmem:[%s244 + $0x230] sm:$0xff]
          %v369 = vld [vmem:[%s244 + $0x238] sm:$0xff]
          %v370 = vld [vmem:[%s244 + $0x240] sm:$0xff]
          %v371 = vld [vmem:[%s244 + $0x248] sm:$0xff]
          %v372 = vld [vmem:[%s244 + $0x250] sm:$0xff]
          %v373 = vld [vmem:[%s244 + $0x258] sm:$0xff]
          %v374 = vld [vmem:[%s244 + $0x260] sm:$0xff]
          %v375 = vld [vmem:[%s244 + $0x268] sm:$0xff]
          %v376 = vld [vmem:[%s244 + $0x270] sm:$0xff]
          %v377 = vld [vmem:[%s244 + $0x278] sm:$0xff]
          %v378 = vld [vmem:[%s244 + $0x280] sm:$0xff]
          %v379 = vld [vmem:[%s244 + $0x288] sm:$0xff]
          %v380 = vld [vmem:[%s244 + $0x290] sm:$0xff]
          %v381 = vld [vmem:[%s244 + $0x298] sm:$0xff]
          %v382 = vld [vmem:[%s244 + $0x2a0] sm:$0xff]
          %v383 = vld [vmem:[%s244 + $0x2a8] sm:$0xff]
          %v384 = vld [vmem:[%s244 + $0x2b0] sm:$0xff]
          %v385 = vld [vmem:[%s244 + $0x2b8] sm:$0xff]
          %v386 = vld [vmem:[%s244 + $0x2c0] sm:$0xff]
          %v387 = vld [vmem:[%s244 + $0x2c8] sm:$0xff]
          %v388 = vld [vmem:[%s244 + $0x2d0] sm:$0xff]
          %v389 = vld [vmem:[%s244 + $0x2d8] sm:$0xff]
          %v390 = vld [vmem:[%s244 + $0x2e0] sm:$0xff]
          %v391 = vld [vmem:[%s244 + $0x2e8] sm:$0xff]
          %v392 = vld [vmem:[%s244 + $0x2f0] sm:$0xff]
          %v393 = vld [vmem:[%s244 + $0x2f8] sm:$0xff]
          %v394 = vld [vmem:[%s244 + $0x300] sm:$0xff]
          %v395 = vld [vmem:[%s244 + $0x308] sm:$0xff]
          %v396 = vld [vmem:[%s244 + $0x310] sm:$0xff]
          %v397 = vld [vmem:[%s244 + $0x318] sm:$0xff]
          %v398 = vld [vmem:[%s244 + $0x320] sm:$0xff]
          %v399 = vld [vmem:[%s244 + $0x328] sm:$0xff]
          %v400 = vld [vmem:[%s244 + $0x330] sm:$0xff]
          %v401 = vld [vmem:[%s244 + $0x338] sm:$0xff]
          %v402 = vld [vmem:[%s244 + $0x340] sm:$0xff]
          %v403 = vld [vmem:[%s244 + $0x348] sm:$0xff]
          %v404 = vld [vmem:[%s244 + $0x350] sm:$0xff]
          %v405 = vld [vmem:[%s244 + $0x358] sm:$0xff]
          %v406 = vld [vmem:[%s244 + $0x360] sm:$0xff]
          %v407 = vld [vmem:[%s244 + $0x368] sm:$0xff]
          %v408 = vld [vmem:[%s244 + $0x370] sm:$0xff]
          %v409 = vld [vmem:[%s244 + $0x378] sm:$0xff]
          %v410 = vld [vmem:[%s244 + $0x380] sm:$0xff]
          %v411 = vld [vmem:[%s244 + $0x388] sm:$0xff]
          %v412 = vld [vmem:[%s244 + $0x390] sm:$0xff]
          %v413 = vld [vmem:[%s244 + $0x398] sm:$0xff]
          %v414 = vld [vmem:[%s244 + $0x3a0] sm:$0xff]
          %v415 = vld [vmem:[%s244 + $0x3a8] sm:$0xff]
          %v416 = vld [vmem:[%s244 + $0x3b0] sm:$0xff]
          %v417 = vld [vmem:[%s244 + $0x3b8] sm:$0xff]
          %v418 = vld [vmem:[%s244 + $0x3c0] sm:$0xff]
          %v419 = vld [vmem:[%s244 + $0x3c8] sm:$0xff]
          %v420 = vld [vmem:[%s244 + $0x3d0] sm:$0xff]
          %v421 = vld [vmem:[%s244 + $0x3d8] sm:$0xff]
          %v422 = vld [vmem:[%s244 + $0x3e0] sm:$0xff]
          %v423 = vld [vmem:[%s244 + $0x3e8] sm:$0xff]
          %v424 = vld [vmem:[%s244 + $0x3f0] sm:$0xff]
          %v425 = vld [vmem:[%s244 + $0x3f8] sm:$0xff]
          %v426 = vld [vmem:[%s244 + $0x400] sm:$0xff]
          %v427 = vld [vmem:[%s244 + $0x408] sm:$0xff]
          %v428 = vld [vmem:[%s244 + $0x410] sm:$0xff]
          %v429 = vld [vmem:[%s244 + $0x418] sm:$0xff]
          %v430 = vld [vmem:[%s244 + $0x420] sm:$0xff]
          %v431 = vld [vmem:[%s244 + $0x428] sm:$0xff]
          %v432 = vld [vmem:[%s244 + $0x430] sm:$0xff]
          %v433 = vld [vmem:[%s244 + $0x438] sm:$0xff]
          %v434 = vld [vmem:[%s244 + $0x440] sm:$0xff]
          %v435 = vld [vmem:[%s244 + $0x448] sm:$0xff]
          %v436 = vld [vmem:[%s244 + $0x450] sm:$0xff]
          %v437 = vld [vmem:[%s244 + $0x458] sm:$0xff]
          %v438 = vld [vmem:[%s244 + $0x460] sm:$0xff]
          %v439 = vld [vmem:[%s244 + $0x468] sm:$0xff]
          %v440 = vld [vmem:[%s244 + $0x470] sm:$0xff]
          %v441 = vld [vmem:[%s244 + $0x478] sm:$0xff]
          %v442 = vld [vmem:[%s244 + $0x480] sm:$0xff]
          %v443 = vld [vmem:[%s244 + $0x488] sm:$0xff]
          %v444 = vld [vmem:[%s244 + $0x490] sm:$0xff]
          %v445 = vld [vmem:[%s244 + $0x498] sm:$0xff]
          %v446 = vld [vmem:[%s244 + $0x4a0] sm:$0xff]
          %v447 = vld [vmem:[%s244 + $0x4a8] sm:$0xff]
          %v448 = vld [vmem:[%s244 + $0x4b0] sm:$0xff]
          %v449 = vld [vmem:[%s244 + $0x4b8] sm:$0xff]
          %v450 = vld [vmem:[%s244 + $0x4c0] sm:$0xff]
          %v451 = vld [vmem:[%s244 + $0x4c8] sm:$0xff]
          %v452 = vld [vmem:[%s244 + $0x4d0] sm:$0xff]
          %v453 = vld [vmem:[%s244 + $0x4d8] sm:$0xff]
          %v454 = vld [vmem:[%s244 + $0x4e0] sm:$0xff]
          %v455 = vld [vmem:[%s244 + $0x4e8] sm:$0xff]
          %v456 = vld [vmem:[%s244 + $0x4f0] sm:$0xff]
          %v457 = vld [vmem:[%s244 + $0x4f8] sm:$0xff]
          %v458 = vld [vmem:[%s244 + $0x500] sm:$0xff]
          %v459 = vld [vmem:[%s244 + $0x508] sm:$0xff]
          %v460 = vld [vmem:[%s244 + $0x510] sm:$0xff]
          %v461 = vld [vmem:[%s244 + $0x518] sm:$0xff]
          %v462 = vld [vmem:[%s244 + $0x520] sm:$0xff]
          %v463 = vld [vmem:[%s244 + $0x528] sm:$0xff]
          %v464 = vld [vmem:[%s244 + $0x530] sm:$0xff]
          %v465 = vld [vmem:[%s244 + $0x538] sm:$0xff]
          %v466 = vld [vmem:[%s244 + $0x540] sm:$0xff]
          %v467 = vld [vmem:[%s244 + $0x548] sm:$0xff]
          %v468 = vld [vmem:[%s244 + $0x550] sm:$0xff]
          %v469 = vld [vmem:[%s244 + $0x558] sm:$0xff]
          %v470 = vld [vmem:[%s244 + $0x560] sm:$0xff]
          %v471 = vld [vmem:[%s244 + $0x568] sm:$0xff]
          %v472 = vld [vmem:[%s244 + $0x570] sm:$0xff]
          %v473 = vld [vmem:[%s244 + $0x578] sm:$0xff]
          %v474 = vld [vmem:[%s244 + $0x580] sm:$0xff]
          %v475 = vld [vmem:[%s244 + $0x588] sm:$0xff]
          %v476 = vld [vmem:[%s244 + $0x590] sm:$0xff]
          %v477 = vld [vmem:[%s244 + $0x598] sm:$0xff]
          %v478 = vld [vmem:[%s244 + $0x5a0] sm:$0xff]
          %v479 = vld [vmem:[%s244 + $0x5a8] sm:$0xff]
          %v480 = vld [vmem:[%s244 + $0x5b0] sm:$0xff]
          %v481 = vld [vmem:[%s244 + $0x5b8] sm:$0xff]
          %v482 = vld [vmem:[%s244 + $0x5c0] sm:$0xff]
          %v483 = vld [vmem:[%s244 + $0x5c8] sm:$0xff]
          %v484 = vld [vmem:[%s244 + $0x5d0] sm:$0xff]
          %v485 = vld [vmem:[%s244 + $0x5d8] sm:$0xff]
          %v486 = vld [vmem:[%s244 + $0x5e0] sm:$0xff]
          %v487 = vld [vmem:[%s244 + $0x5e8] sm:$0xff]
          %v488 = vld [vmem:[%s244 + $0x5f0] sm:$0xff]
          %v489 = vld [vmem:[%s244 + $0x5f8] sm:$0xff]
          %490 = vst [vmem:[%s284] sm:$0xff] %v298
          %491 = vst [vmem:[%s284 + $0x8] sm:$0xff] %v299
          %492 = vst [vmem:[%s284 + $0x10] sm:$0xff] %v300
          %493 = vst [vmem:[%s284 + $0x18] sm:$0xff] %v301
          %494 = vst [vmem:[%s284 + $0x20] sm:$0xff] %v302
          %495 = vst [vmem:[%s284 + $0x28] sm:$0xff] %v303
          %496 = vst [vmem:[%s284 + $0x30] sm:$0xff] %v304
          %497 = vst [vmem:[%s284 + $0x38] sm:$0xff] %v305
          %498 = vst [vmem:[%s284 + $0x40] sm:$0xff] %v306
          %499 = vst [vmem:[%s284 + $0x48] sm:$0xff] %v307
          %500 = vst [vmem:[%s284 + $0x50] sm:$0xff] %v308
          %501 = vst [vmem:[%s284 + $0x58] sm:$0xff] %v309
          %502 = vst [vmem:[%s284 + $0x60] sm:$0xff] %v310
          %503 = vst [vmem:[%s284 + $0x68] sm:$0xff] %v311
          %504 = vst [vmem:[%s284 + $0x70] sm:$0xff] %v312
          %505 = vst [vmem:[%s284 + $0x78] sm:$0xff] %v313
          %506 = vst [vmem:[%s284 + $0x80] sm:$0xff] %v314
          %507 = vst [vmem:[%s284 + $0x88] sm:$0xff] %v315
          %508 = vst [vmem:[%s284 + $0x90] sm:$0xff] %v316
          %509 = vst [vmem:[%s284 + $0x98] sm:$0xff] %v317
          %510 = vst [vmem:[%s284 + $0xa0] sm:$0xff] %v318
          %511 = vst [vmem:[%s284 + $0xa8] sm:$0xff] %v319
          %512 = vst [vmem:[%s284 + $0xb0] sm:$0xff] %v320
          %513 = vst [vmem:[%s284 + $0xb8] sm:$0xff] %v321
          %514 = vst [vmem:[%s284 + $0xc0] sm:$0xff] %v322
          %515 = vst [vmem:[%s284 + $0xc8] sm:$0xff] %v323
          %516 = vst [vmem:[%s284 + $0xd0] sm:$0xff] %v324
          %517 = vst [vmem:[%s284 + $0xd8] sm:$0xff] %v325
          %518 = vst [vmem:[%s284 + $0xe0] sm:$0xff] %v326
          %519 = vst [vmem:[%s284 + $0xe8] sm:$0xff] %v327
          %520 = vst [vmem:[%s284 + $0xf0] sm:$0xff] %v328
          %521 = vst [vmem:[%s284 + $0xf8] sm:$0xff] %v329
          %522 = vst [vmem:[%s284 + $0x100] sm:$0xff] %v330
          %523 = vst [vmem:[%s284 + $0x108] sm:$0xff] %v331
          %524 = vst [vmem:[%s284 + $0x110] sm:$0xff] %v332
          %525 = vst [vmem:[%s284 + $0x118] sm:$0xff] %v333
          %526 = vst [vmem:[%s284 + $0x120] sm:$0xff] %v334
          %527 = vst [vmem:[%s284 + $0x128] sm:$0xff] %v335
          %528 = vst [vmem:[%s284 + $0x130] sm:$0xff] %v336
          %529 = vst [vmem:[%s284 + $0x138] sm:$0xff] %v337
          %530 = vst [vmem:[%s284 + $0x140] sm:$0xff] %v338
          %531 = vst [vmem:[%s284 + $0x148] sm:$0xff] %v339
          %532 = vst [vmem:[%s284 + $0x150] sm:$0xff] %v340
          %533 = vst [vmem:[%s284 + $0x158] sm:$0xff] %v341
          %534 = vst [vmem:[%s284 + $0x160] sm:$0xff] %v342
          %535 = vst [vmem:[%s284 + $0x168] sm:$0xff] %v343
          %536 = vst [vmem:[%s284 + $0x170] sm:$0xff] %v344
          %537 = vst [vmem:[%s284 + $0x178] sm:$0xff] %v345
          %538 = vst [vmem:[%s284 + $0x180] sm:$0xff] %v346
          %539 = vst [vmem:[%s284 + $0x188] sm:$0xff] %v347
          %540 = vst [vmem:[%s284 + $0x190] sm:$0xff] %v348
          %541 = vst [vmem:[%s284 + $0x198] sm:$0xff] %v349
          %542 = vst [vmem:[%s284 + $0x1a0] sm:$0xff] %v350
          %543 = vst [vmem:[%s284 + $0x1a8] sm:$0xff] %v351
          %544 = vst [vmem:[%s284 + $0x1b0] sm:$0xff] %v352
          %545 = vst [vmem:[%s284 + $0x1b8] sm:$0xff] %v353
          %546 = vst [vmem:[%s284 + $0x1c0] sm:$0xff] %v354
          %547 = vst [vmem:[%s284 + $0x1c8] sm:$0xff] %v355
          %548 = vst [vmem:[%s284 + $0x1d0] sm:$0xff] %v356
          %549 = vst [vmem:[%s284 + $0x1d8] sm:$0xff] %v357
          %550 = vst [vmem:[%s284 + $0x1e0] sm:$0xff] %v358
          %551 = vst [vmem:[%s284 + $0x1e8] sm:$0xff] %v359
          %552 = vst [vmem:[%s284 + $0x1f0] sm:$0xff] %v360
          %553 = vst [vmem:[%s284 + $0x1f8] sm:$0xff] %v361
          %554 = vst [vmem:[%s284 + $0x200] sm:$0xff] %v362
          %555 = vst [vmem:[%s284 + $0x208] sm:$0xff] %v363
          %556 = vst [vmem:[%s284 + $0x210] sm:$0xff] %v364
          %557 = vst [vmem:[%s284 + $0x218] sm:$0xff] %v365
          %558 = vst [vmem:[%s284 + $0x220] sm:$0xff] %v366
          %559 = vst [vmem:[%s284 + $0x228] sm:$0xff] %v367
          %560 = vst [vmem:[%s284 + $0x230] sm:$0xff] %v368
          %561 = vst [vmem:[%s284 + $0x238] sm:$0xff] %v369
          %562 = vst [vmem:[%s284 + $0x240] sm:$0xff] %v370
          %563 = vst [vmem:[%s284 + $0x248] sm:$0xff] %v371
          %564 = vst [vmem:[%s284 + $0x250] sm:$0xff] %v372
          %565 = vst [vmem:[%s284 + $0x258] sm:$0xff] %v373
          %566 = vst [vmem:[%s284 + $0x260] sm:$0xff] %v374
          %567 = vst [vmem:[%s284 + $0x268] sm:$0xff] %v375
          %568 = vst [vmem:[%s284 + $0x270] sm:$0xff] %v376
          %569 = vst [vmem:[%s284 + $0x278] sm:$0xff] %v377
          %570 = vst [vmem:[%s284 + $0x280] sm:$0xff] %v378
          %571 = vst [vmem:[%s284 + $0x288] sm:$0xff] %v379
          %572 = vst [vmem:[%s284 + $0x290] sm:$0xff] %v380
          %573 = vst [vmem:[%s284 + $0x298] sm:$0xff] %v381
          %574 = vst [vmem:[%s284 + $0x2a0] sm:$0xff] %v382
          %575 = vst [vmem:[%s284 + $0x2a8] sm:$0xff] %v383
          %576 = vst [vmem:[%s284 + $0x2b0] sm:$0xff] %v384
          %577 = vst [vmem:[%s284 + $0x2b8] sm:$0xff] %v385
          %578 = vst [vmem:[%s284 + $0x2c0] sm:$0xff] %v386
          %579 = vst [vmem:[%s284 + $0x2c8] sm:$0xff] %v387
          %580 = vst [vmem:[%s284 + $0x2d0] sm:$0xff] %v388
          %581 = vst [vmem:[%s284 + $0x2d8] sm:$0xff] %v389
          %582 = vst [vmem:[%s284 + $0x2e0] sm:$0xff] %v390
          %583 = vst [vmem:[%s284 + $0x2e8] sm:$0xff] %v391
          %584 = vst [vmem:[%s284 + $0x2f0] sm:$0xff] %v392
          %585 = vst [vmem:[%s284 + $0x2f8] sm:$0xff] %v393
          %586 = vst [vmem:[%s284 + $0x300] sm:$0xff] %v394
          %587 = vst [vmem:[%s284 + $0x308] sm:$0xff] %v395
          %588 = vst [vmem:[%s284 + $0x310] sm:$0xff] %v396
          %589 = vst [vmem:[%s284 + $0x318] sm:$0xff] %v397
          %590 = vst [vmem:[%s284 + $0x320] sm:$0xff] %v398
          %591 = vst [vmem:[%s284 + $0x328] sm:$0xff] %v399
          %592 = vst [vmem:[%s284 + $0x330] sm:$0xff] %v400
          %593 = vst [vmem:[%s284 + $0x338] sm:$0xff] %v401
          %594 = vst [vmem:[%s284 + $0x340] sm:$0xff] %v402
          %595 = vst [vmem:[%s284 + $0x348] sm:$0xff] %v403
          %596 = vst [vmem:[%s284 + $0x350] sm:$0xff] %v404
          %597 = vst [vmem:[%s284 + $0x358] sm:$0xff] %v405
          %598 = vst [vmem:[%s284 + $0x360] sm:$0xff] %v406
          %599 = vst [vmem:[%s284 + $0x368] sm:$0xff] %v407
          %600 = vst [vmem:[%s284 + $0x370] sm:$0xff] %v408
          %601 = vst [vmem:[%s284 + $0x378] sm:$0xff] %v409
          %602 = vst [vmem:[%s284 + $0x380] sm:$0xff] %v410
          %603 = vst [vmem:[%s284 + $0x388] sm:$0xff] %v411
          %604 = vst [vmem:[%s284 + $0x390] sm:$0xff] %v412
          %605 = vst [vmem:[%s284 + $0x398] sm:$0xff] %v413
          %606 = vst [vmem:[%s284 + $0x3a0] sm:$0xff] %v414
          %607 = vst [vmem:[%s284 + $0x3a8] sm:$0xff] %v415
          %608 = vst [vmem:[%s284 + $0x3b0] sm:$0xff] %v416
          %609 = vst [vmem:[%s284 + $0x3b8] sm:$0xff] %v417
          %610 = vst [vmem:[%s284 + $0x3c0] sm:$0xff] %v418
          %611 = vst [vmem:[%s284 + $0x3c8] sm:$0xff] %v419
          %612 = vst [vmem:[%s284 + $0x3d0] sm:$0xff] %v420
          %613 = vst [vmem:[%s284 + $0x3d8] sm:$0xff] %v421
          %614 = vst [vmem:[%s284 + $0x3e0] sm:$0xff] %v422
          %615 = vst [vmem:[%s284 + $0x3e8] sm:$0xff] %v423
          %616 = vst [vmem:[%s284 + $0x3f0] sm:$0xff] %v424
          %617 = vst [vmem:[%s284 + $0x3f8] sm:$0xff] %v425
          %618 = vst [vmem:[%s284 + $0x400] sm:$0xff] %v426
          %619 = vst [vmem:[%s284 + $0x408] sm:$0xff] %v427
          %620 = vst [vmem:[%s284 + $0x410] sm:$0xff] %v428
          %621 = vst [vmem:[%s284 + $0x418] sm:$0xff] %v429
          %622 = vst [vmem:[%s284 + $0x420] sm:$0xff] %v430
          %623 = vst [vmem:[%s284 + $0x428] sm:$0xff] %v431
          %624 = vst [vmem:[%s284 + $0x430] sm:$0xff] %v432
          %625 = vst [vmem:[%s284 + $0x438] sm:$0xff] %v433
          %626 = vst [vmem:[%s284 + $0x440] sm:$0xff] %v434
          %627 = vst [vmem:[%s284 + $0x448] sm:$0xff] %v435
          %628 = vst [vmem:[%s284 + $0x450] sm:$0xff] %v436
          %629 = vst [vmem:[%s284 + $0x458] sm:$0xff] %v437
          %630 = vst [vmem:[%s284 + $0x460] sm:$0xff] %v438
          %631 = vst [vmem:[%s284 + $0x468] sm:$0xff] %v439
          %632 = vst [vmem:[%s284 + $0x470] sm:$0xff] %v440
          %633 = vst [vmem:[%s284 + $0x478] sm:$0xff] %v441
          %634 = vst [vmem:[%s284 + $0x480] sm:$0xff] %v442
          %635 = vst [vmem:[%s284 + $0x488] sm:$0xff] %v443
          %636 = vst [vmem:[%s284 + $0x490] sm:$0xff] %v444
          %637 = vst [vmem:[%s284 + $0x498] sm:$0xff] %v445
          %638 = vst [vmem:[%s284 + $0x4a0] sm:$0xff] %v446
          %639 = vst [vmem:[%s284 + $0x4a8] sm:$0xff] %v447
          %640 = vst [vmem:[%s284 + $0x4b0] sm:$0xff] %v448
          %641 = vst [vmem:[%s284 + $0x4b8] sm:$0xff] %v449
          %642 = vst [vmem:[%s284 + $0x4c0] sm:$0xff] %v450
          %643 = vst [vmem:[%s284 + $0x4c8] sm:$0xff] %v451
          %644 = vst [vmem:[%s284 + $0x4d0] sm:$0xff] %v452
          %645 = vst [vmem:[%s284 + $0x4d8] sm:$0xff] %v453
          %646 = vst [vmem:[%s284 + $0x4e0] sm:$0xff] %v454
          %647 = vst [vmem:[%s284 + $0x4e8] sm:$0xff] %v455
          %648 = vst [vmem:[%s284 + $0x4f0] sm:$0xff] %v456
          %649 = vst [vmem:[%s284 + $0x4f8] sm:$0xff] %v457
          %650 = vst [vmem:[%s284 + $0x500] sm:$0xff] %v458
          %651 = vst [vmem:[%s284 + $0x508] sm:$0xff] %v459
          %652 = vst [vmem:[%s284 + $0x510] sm:$0xff] %v460
          %653 = vst [vmem:[%s284 + $0x518] sm:$0xff] %v461
          %654 = vst [vmem:[%s284 + $0x520] sm:$0xff] %v462
          %655 = vst [vmem:[%s284 + $0x528] sm:$0xff] %v463
          %656 = vst [vmem:[%s284 + $0x530] sm:$0xff] %v464
          %657 = vst [vmem:[%s284 + $0x538] sm:$0xff] %v465
          %658 = vst [vmem:[%s284 + $0x540] sm:$0xff] %v466
          %659 = vst [vmem:[%s284 + $0x548] sm:$0xff] %v467
          %660 = vst [vmem:[%s284 + $0x550] sm:$0xff] %v468
          %661 = vst [vmem:[%s284 + $0x558] sm:$0xff] %v469
          %662 = vst [vmem:[%s284 + $0x560] sm:$0xff] %v470
          %663 = vst [vmem:[%s284 + $0x568] sm:$0xff] %v471
          %664 = vst [vmem:[%s284 + $0x570] sm:$0xff] %v472
          %665 = vst [vmem:[%s284 + $0x578] sm:$0xff] %v473
          %666 = vst [vmem:[%s284 + $0x580] sm:$0xff] %v474
          %667 = vst [vmem:[%s284 + $0x588] sm:$0xff] %v475
          %668 = vst [vmem:[%s284 + $0x590] sm:$0xff] %v476
          %669 = vst [vmem:[%s284 + $0x598] sm:$0xff] %v477
          %670 = vst [vmem:[%s284 + $0x5a0] sm:$0xff] %v478
          %671 = vst [vmem:[%s284 + $0x5a8] sm:$0xff] %v479
          %672 = vst [vmem:[%s284 + $0x5b0] sm:$0xff] %v480
          %673 = vst [vmem:[%s284 + $0x5b8] sm:$0xff] %v481
          %674 = vst [vmem:[%s284 + $0x5c0] sm:$0xff] %v482
          %675 = vst [vmem:[%s284 + $0x5c8] sm:$0xff] %v483
          %676 = vst [vmem:[%s284 + $0x5d0] sm:$0xff] %v484
          %677 = vst [vmem:[%s284 + $0x5d8] sm:$0xff] %v485
          %678 = vst [vmem:[%s284 + $0x5e0] sm:$0xff] %v486
          %679 = vst [vmem:[%s284 + $0x5e8] sm:$0xff] %v487
          %680 = vst [vmem:[%s284 + $0x5f0] sm:$0xff] %v488
          %681 = vst [vmem:[%s284 + $0x5f8] sm:$0xff] %v489
        $region48: #{tpu_custom_call.1} parent=31 // pred_fallthru
          _
        %v682 = vld [vmem:[%s284] sm:$0xff]
        %v683 = vld [vmem:[%s284 + $0x8] sm:$0xff]
        %v684 = vld [vmem:[%s284 + $0x10] sm:$0xff]
        %v685 = vld [vmem:[%s284 + $0x18] sm:$0xff]
        %v686 = vld [vmem:[%s284 + $0x20] sm:$0xff]
        %v687 = vld [vmem:[%s284 + $0x28] sm:$0xff]
        %v688 = vld [vmem:[%s284 + $0x30] sm:$0xff]
        %v689 = vld [vmem:[%s284 + $0x38] sm:$0xff]
        %v690 = vld [vmem:[%s284 + $0x40] sm:$0xff]
        %v691 = vld [vmem:[%s284 + $0x48] sm:$0xff]
        %v692 = vld [vmem:[%s284 + $0x50] sm:$0xff]
        %v693 = vld [vmem:[%s284 + $0x58] sm:$0xff]
        %v694 = vld [vmem:[%s284 + $0x60] sm:$0xff]
        %v695 = vld [vmem:[%s284 + $0x68] sm:$0xff]
        %v696 = vld [vmem:[%s284 + $0x70] sm:$0xff]
        %v697 = vld [vmem:[%s284 + $0x78] sm:$0xff]
        %v698 = vld [vmem:[%s284 + $0x80] sm:$0xff]
        %v699 = vld [vmem:[%s284 + $0x88] sm:$0xff]
        %v700 = vld [vmem:[%s284 + $0x90] sm:$0xff]
        %v701 = vld [vmem:[%s284 + $0x98] sm:$0xff]
        %v702 = vld [vmem:[%s284 + $0xa0] sm:$0xff]
        %v703 = vld [vmem:[%s284 + $0xa8] sm:$0xff]
        %v704 = vld [vmem:[%s284 + $0xb0] sm:$0xff]
        %v705 = vld [vmem:[%s284 + $0xb8] sm:$0xff]
        %v706 = vld [vmem:[%s284 + $0xc0] sm:$0xff]
        %v707 = vld [vmem:[%s284 + $0xc8] sm:$0xff]
        %v708 = vld [vmem:[%s284 + $0xd0] sm:$0xff]
        %v709 = vld [vmem:[%s284 + $0xd8] sm:$0xff]
        %v710 = vld [vmem:[%s284 + $0xe0] sm:$0xff]
        %v711 = vld [vmem:[%s284 + $0xe8] sm:$0xff]
        %v712 = vld [vmem:[%s284 + $0xf0] sm:$0xff]
        %v713 = vld [vmem:[%s284 + $0xf8] sm:$0xff]
        %v714 = vld [vmem:[%s284 + $0x100] sm:$0xff]
        %v715 = vld [vmem:[%s284 + $0x108] sm:$0xff]
        %v716 = vld [vmem:[%s284 + $0x110] sm:$0xff]
        %v717 = vld [vmem:[%s284 + $0x118] sm:$0xff]
        %v718 = vld [vmem:[%s284 + $0x120] sm:$0xff]
        %v719 = vld [vmem:[%s284 + $0x128] sm:$0xff]
        %v720 = vld [vmem:[%s284 + $0x130] sm:$0xff]
        %v721 = vld [vmem:[%s284 + $0x138] sm:$0xff]
        %v722 = vld [vmem:[%s284 + $0x140] sm:$0xff]
        %v723 = vld [vmem:[%s284 + $0x148] sm:$0xff]
        %v724 = vld [vmem:[%s284 + $0x150] sm:$0xff]
        %v725 = vld [vmem:[%s284 + $0x158] sm:$0xff]
        %v726 = vld [vmem:[%s284 + $0x160] sm:$0xff]
        %v727 = vld [vmem:[%s284 + $0x168] sm:$0xff]
        %v728 = vld [vmem:[%s284 + $0x170] sm:$0xff]
        %v729 = vld [vmem:[%s284 + $0x178] sm:$0xff]
        %v730 = vld [vmem:[%s284 + $0x180] sm:$0xff]
        %v731 = vld [vmem:[%s284 + $0x188] sm:$0xff]
        %v732 = vld [vmem:[%s284 + $0x190] sm:$0xff]
        %v733 = vld [vmem:[%s284 + $0x198] sm:$0xff]
        %v734 = vld [vmem:[%s284 + $0x1a0] sm:$0xff]
        %v735 = vld [vmem:[%s284 + $0x1a8] sm:$0xff]
        %v736 = vld [vmem:[%s284 + $0x1b0] sm:$0xff]
        %v737 = vld [vmem:[%s284 + $0x1b8] sm:$0xff]
        %v738 = vld [vmem:[%s284 + $0x1c0] sm:$0xff]
        %v739 = vld [vmem:[%s284 + $0x1c8] sm:$0xff]
        %v740 = vld [vmem:[%s284 + $0x1d0] sm:$0xff]
        %v741 = vld [vmem:[%s284 + $0x1d8] sm:$0xff]
        %v742 = vld [vmem:[%s284 + $0x1e0] sm:$0xff]
        %v743 = vld [vmem:[%s284 + $0x1e8] sm:$0xff]
        %v744 = vld [vmem:[%s284 + $0x1f0] sm:$0xff]
        %v745 = vld [vmem:[%s284 + $0x1f8] sm:$0xff]
        %v746 = vld [vmem:[%s284 + $0x200] sm:$0xff]
        %v747 = vld [vmem:[%s284 + $0x208] sm:$0xff]
        %v748 = vld [vmem:[%s284 + $0x210] sm:$0xff]
        %v749 = vld [vmem:[%s284 + $0x218] sm:$0xff]
        %v750 = vld [vmem:[%s284 + $0x220] sm:$0xff]
        %v751 = vld [vmem:[%s284 + $0x228] sm:$0xff]
        %v752 = vld [vmem:[%s284 + $0x230] sm:$0xff]
        %v753 = vld [vmem:[%s284 + $0x238] sm:$0xff]
        %v754 = vld [vmem:[%s284 + $0x240] sm:$0xff]
        %v755 = vld [vmem:[%s284 + $0x248] sm:$0xff]
        %v756 = vld [vmem:[%s284 + $0x250] sm:$0xff]
        %v757 = vld [vmem:[%s284 + $0x258] sm:$0xff]
        %v758 = vld [vmem:[%s284 + $0x260] sm:$0xff]
        %v759 = vld [vmem:[%s284 + $0x268] sm:$0xff]
        %v760 = vld [vmem:[%s284 + $0x270] sm:$0xff]
        %v761 = vld [vmem:[%s284 + $0x278] sm:$0xff]
        %v762 = vld [vmem:[%s284 + $0x280] sm:$0xff]
        %v763 = vld [vmem:[%s284 + $0x288] sm:$0xff]
        %v764 = vld [vmem:[%s284 + $0x290] sm:$0xff]
        %v765 = vld [vmem:[%s284 + $0x298] sm:$0xff]
        %v766 = vld [vmem:[%s284 + $0x2a0] sm:$0xff]
        %v767 = vld [vmem:[%s284 + $0x2a8] sm:$0xff]
        %v768 = vld [vmem:[%s284 + $0x2b0] sm:$0xff]
        %v769 = vld [vmem:[%s284 + $0x2b8] sm:$0xff]
        %v770 = vld [vmem:[%s284 + $0x2c0] sm:$0xff]
        %v771 = vld [vmem:[%s284 + $0x2c8] sm:$0xff]
        %v772 = vld [vmem:[%s284 + $0x2d0] sm:$0xff]
        %v773 = vld [vmem:[%s284 + $0x2d8] sm:$0xff]
        %v774 = vld [vmem:[%s284 + $0x2e0] sm:$0xff]
        %v775 = vld [vmem:[%s284 + $0x2e8] sm:$0xff]
        %v776 = vld [vmem:[%s284 + $0x2f0] sm:$0xff]
        %v777 = vld [vmem:[%s284 + $0x2f8] sm:$0xff]
        %v778 = vld [vmem:[%s284 + $0x300] sm:$0xff]
        %v779 = vld [vmem:[%s284 + $0x308] sm:$0xff]
        %v780 = vld [vmem:[%s284 + $0x310] sm:$0xff]
        %v781 = vld [vmem:[%s284 + $0x318] sm:$0xff]
        %v782 = vld [vmem:[%s284 + $0x320] sm:$0xff]
        %v783 = vld [vmem:[%s284 + $0x328] sm:$0xff]
        %v784 = vld [vmem:[%s284 + $0x330] sm:$0xff]
        %v785 = vld [vmem:[%s284 + $0x338] sm:$0xff]
        %v786 = vld [vmem:[%s284 + $0x340] sm:$0xff]
        %v787 = vld [vmem:[%s284 + $0x348] sm:$0xff]
        %v788 = vld [vmem:[%s284 + $0x350] sm:$0xff]
        %v789 = vld [vmem:[%s284 + $0x358] sm:$0xff]
        %v790 = vld [vmem:[%s284 + $0x360] sm:$0xff]
        %v791 = vld [vmem:[%s284 + $0x368] sm:$0xff]
        %v792 = vld [vmem:[%s284 + $0x370] sm:$0xff]
        %v793 = vld [vmem:[%s284 + $0x378] sm:$0xff]
        %v794 = vld [vmem:[%s284 + $0x380] sm:$0xff]
        %v795 = vld [vmem:[%s284 + $0x388] sm:$0xff]
        %v796 = vld [vmem:[%s284 + $0x390] sm:$0xff]
        %v797 = vld [vmem:[%s284 + $0x398] sm:$0xff]
        %v798 = vld [vmem:[%s284 + $0x3a0] sm:$0xff]
        %v799 = vld [vmem:[%s284 + $0x3a8] sm:$0xff]
        %v800 = vld [vmem:[%s284 + $0x3b0] sm:$0xff]
        %v801 = vld [vmem:[%s284 + $0x3b8] sm:$0xff]
        %v802 = vld [vmem:[%s284 + $0x3c0] sm:$0xff]
        %v803 = vld [vmem:[%s284 + $0x3c8] sm:$0xff]
        %v804 = vld [vmem:[%s284 + $0x3d0] sm:$0xff]
        %v805 = vld [vmem:[%s284 + $0x3d8] sm:$0xff]
        %v806 = vld [vmem:[%s284 + $0x3e0] sm:$0xff]
        %v807 = vld [vmem:[%s284 + $0x3e8] sm:$0xff]
        %v808 = vld [vmem:[%s284 + $0x3f0] sm:$0xff]
        %v809 = vld [vmem:[%s284 + $0x3f8] sm:$0xff]
        %v810 = vld [vmem:[%s284 + $0x400] sm:$0xff]
        %v811 = vld [vmem:[%s284 + $0x408] sm:$0xff]
        %v812 = vld [vmem:[%s284 + $0x410] sm:$0xff]
        %v813 = vld [vmem:[%s284 + $0x418] sm:$0xff]
        %v814 = vld [vmem:[%s284 + $0x420] sm:$0xff]
        %v815 = vld [vmem:[%s284 + $0x428] sm:$0xff]
        %v816 = vld [vmem:[%s284 + $0x430] sm:$0xff]
        %v817 = vld [vmem:[%s284 + $0x438] sm:$0xff]
        %v818 = vld [vmem:[%s284 + $0x440] sm:$0xff]
        %v819 = vld [vmem:[%s284 + $0x448] sm:$0xff]
        %v820 = vld [vmem:[%s284 + $0x450] sm:$0xff]
        %v821 = vld [vmem:[%s284 + $0x458] sm:$0xff]
        %v822 = vld [vmem:[%s284 + $0x460] sm:$0xff]
        %v823 = vld [vmem:[%s284 + $0x468] sm:$0xff]
        %v824 = vld [vmem:[%s284 + $0x470] sm:$0xff]
        %v825 = vld [vmem:[%s284 + $0x478] sm:$0xff]
        %v826 = vld [vmem:[%s284 + $0x480] sm:$0xff]
        %v827 = vld [vmem:[%s284 + $0x488] sm:$0xff]
        %v828 = vld [vmem:[%s284 + $0x490] sm:$0xff]
        %v829 = vld [vmem:[%s284 + $0x498] sm:$0xff]
        %v830 = vld [vmem:[%s284 + $0x4a0] sm:$0xff]
        %v831 = vld [vmem:[%s284 + $0x4a8] sm:$0xff]
        %v832 = vld [vmem:[%s284 + $0x4b0] sm:$0xff]
        %v833 = vld [vmem:[%s284 + $0x4b8] sm:$0xff]
        %v834 = vld [vmem:[%s284 + $0x4c0] sm:$0xff]
        %v835 = vld [vmem:[%s284 + $0x4c8] sm:$0xff]
        %v836 = vld [vmem:[%s284 + $0x4d0] sm:$0xff]
        %v837 = vld [vmem:[%s284 + $0x4d8] sm:$0xff]
        %v838 = vld [vmem:[%s284 + $0x4e0] sm:$0xff]
        %v839 = vld [vmem:[%s284 + $0x4e8] sm:$0xff]
        %v840 = vld [vmem:[%s284 + $0x4f0] sm:$0xff]
        %v841 = vld [vmem:[%s284 + $0x4f8] sm:$0xff]
        %v842 = vld [vmem:[%s284 + $0x500] sm:$0xff]
        %v843 = vld [vmem:[%s284 + $0x508] sm:$0xff]
        %v844 = vld [vmem:[%s284 + $0x510] sm:$0xff]
        %v845 = vld [vmem:[%s284 + $0x518] sm:$0xff]
        %v846 = vld [vmem:[%s284 + $0x520] sm:$0xff]
        %v847 = vld [vmem:[%s284 + $0x528] sm:$0xff]
        %v848 = vld [vmem:[%s284 + $0x530] sm:$0xff]
        %v849 = vld [vmem:[%s284 + $0x538] sm:$0xff]
        %v850 = vld [vmem:[%s284 + $0x540] sm:$0xff]
        %v851 = vld [vmem:[%s284 + $0x548] sm:$0xff]
        %v852 = vld [vmem:[%s284 + $0x550] sm:$0xff]
        %v853 = vld [vmem:[%s284 + $0x558] sm:$0xff]
        %v854 = vld [vmem:[%s284 + $0x560] sm:$0xff]
        %v855 = vld [vmem:[%s284 + $0x568] sm:$0xff]
        %v856 = vld [vmem:[%s284 + $0x570] sm:$0xff]
        %v857 = vld [vmem:[%s284 + $0x578] sm:$0xff]
        %v858 = vld [vmem:[%s284 + $0x580] sm:$0xff]
        %v859 = vld [vmem:[%s284 + $0x588] sm:$0xff]
        %v860 = vld [vmem:[%s284 + $0x590] sm:$0xff]
        %v861 = vld [vmem:[%s284 + $0x598] sm:$0xff]
        %v862 = vld [vmem:[%s284 + $0x5a0] sm:$0xff]
        %v863 = vld [vmem:[%s284 + $0x5a8] sm:$0xff]
        %v864 = vld [vmem:[%s284 + $0x5b0] sm:$0xff]
        %v865 = vld [vmem:[%s284 + $0x5b8] sm:$0xff]
        %v866 = vld [vmem:[%s284 + $0x5c0] sm:$0xff]
        %v867 = vld [vmem:[%s284 + $0x5c8] sm:$0xff]
        %v868 = vld [vmem:[%s284 + $0x5d0] sm:$0xff]
        %v869 = vld [vmem:[%s284 + $0x5d8] sm:$0xff]
        %v870 = vld [vmem:[%s284 + $0x5e0] sm:$0xff]
        %v871 = vld [vmem:[%s284 + $0x5e8] sm:$0xff]
        %v872 = vld [vmem:[%s284 + $0x5f0] sm:$0xff]
        %v873 = vld [vmem:[%s284 + $0x5f8] sm:$0xff]
        %v874 = vld [vmem:[#allocation5] sm:$0xff]
        %v875 = vld [vmem:[#allocation5 + $0x8] sm:$0xff]
        %v876 = vld [vmem:[#allocation5 + $0x10] sm:$0xff]
        %v877 = vld [vmem:[#allocation5 + $0x18] sm:$0xff]
        %v878 = vld [vmem:[#allocation5 + $0x20] sm:$0xff]
        %v879 = vld [vmem:[#allocation5 + $0x28] sm:$0xff]
        %v880 = vld [vmem:[#allocation5 + $0x30] sm:$0xff]
        %v881 = vld [vmem:[#allocation5 + $0x38] sm:$0xff]
        %v882 = vld [vmem:[#allocation5 + $0x40] sm:$0xff]
        %v883 = vld [vmem:[#allocation5 + $0x48] sm:$0xff]
        %v884 = vld [vmem:[#allocation5 + $0x50] sm:$0xff]
        %v885 = vld [vmem:[#allocation5 + $0x58] sm:$0xff]
        %v886 = vld [vmem:[#allocation5 + $0x60] sm:$0xff]
        %v887 = vld [vmem:[#allocation5 + $0x68] sm:$0xff]
        %v888 = vld [vmem:[#allocation5 + $0x70] sm:$0xff]
        %v889 = vld [vmem:[#allocation5 + $0x78] sm:$0xff]
        %v890 = vld [vmem:[#allocation5 + $0x80] sm:$0xff]
        %v891 = vld [vmem:[#allocation5 + $0x88] sm:$0xff]
        %v892 = vld [vmem:[#allocation5 + $0x90] sm:$0xff]
        %v893 = vld [vmem:[#allocation5 + $0x98] sm:$0xff]
        %v894 = vld [vmem:[#allocation5 + $0xa0] sm:$0xff]
        %v895 = vld [vmem:[#allocation5 + $0xa8] sm:$0xff]
        %v896 = vld [vmem:[#allocation5 + $0xb0] sm:$0xff]
        %v897 = vld [vmem:[#allocation5 + $0xb8] sm:$0xff]
        %v898 = vld [vmem:[#allocation5 + $0xc0] sm:$0xff]
        %v899 = vld [vmem:[#allocation5 + $0xc8] sm:$0xff]
        %v900 = vld [vmem:[#allocation5 + $0xd0] sm:$0xff]
        %v901 = vld [vmem:[#allocation5 + $0xd8] sm:$0xff]
        %v902 = vld [vmem:[#allocation5 + $0xe0] sm:$0xff]
        %v903 = vld [vmem:[#allocation5 + $0xe8] sm:$0xff]
        %v904 = vld [vmem:[#allocation5 + $0xf0] sm:$0xff]
        %v905 = vld [vmem:[#allocation5 + $0xf8] sm:$0xff]
        %v906 = vld [vmem:[#allocation5 + $0x100] sm:$0xff]
        %v907 = vld [vmem:[#allocation5 + $0x108] sm:$0xff]
        %v908 = vld [vmem:[#allocation5 + $0x110] sm:$0xff]
        %v909 = vld [vmem:[#allocation5 + $0x118] sm:$0xff]
        %v910 = vld [vmem:[#allocation5 + $0x120] sm:$0xff]
        %v911 = vld [vmem:[#allocation5 + $0x128] sm:$0xff]
        %v912 = vld [vmem:[#allocation5 + $0x130] sm:$0xff]
        %v913 = vld [vmem:[#allocation5 + $0x138] sm:$0xff]
        %v914 = vld [vmem:[#allocation5 + $0x140] sm:$0xff]
        %v915 = vld [vmem:[#allocation5 + $0x148] sm:$0xff]
        %v916 = vld [vmem:[#allocation5 + $0x150] sm:$0xff]
        %v917 = vld [vmem:[#allocation5 + $0x158] sm:$0xff]
        %v918 = vld [vmem:[#allocation5 + $0x160] sm:$0xff]
        %v919 = vld [vmem:[#allocation5 + $0x168] sm:$0xff]
        %v920 = vld [vmem:[#allocation5 + $0x170] sm:$0xff]
        %v921 = vld [vmem:[#allocation5 + $0x178] sm:$0xff]
        %v922 = vld [vmem:[#allocation5 + $0x180] sm:$0xff]
        %v923 = vld [vmem:[#allocation5 + $0x188] sm:$0xff]
        %v924 = vld [vmem:[#allocation5 + $0x190] sm:$0xff]
        %v925 = vld [vmem:[#allocation5 + $0x198] sm:$0xff]
        %v926 = vld [vmem:[#allocation5 + $0x1a0] sm:$0xff]
        %v927 = vld [vmem:[#allocation5 + $0x1a8] sm:$0xff]
        %v928 = vld [vmem:[#allocation5 + $0x1b0] sm:$0xff]
        %v929 = vld [vmem:[#allocation5 + $0x1b8] sm:$0xff]
        %v930 = vld [vmem:[#allocation5 + $0x1c0] sm:$0xff]
        %v931 = vld [vmem:[#allocation5 + $0x1c8] sm:$0xff]
        %v932 = vld [vmem:[#allocation5 + $0x1d0] sm:$0xff]
        %v933 = vld [vmem:[#allocation5 + $0x1d8] sm:$0xff]
        %v934 = vld [vmem:[#allocation5 + $0x1e0] sm:$0xff]
        %v935 = vld [vmem:[#allocation5 + $0x1e8] sm:$0xff]
        %v936 = vld [vmem:[#allocation5 + $0x1f0] sm:$0xff]
        %v937 = vld [vmem:[#allocation5 + $0x1f8] sm:$0xff]
        %v938 = vld [vmem:[#allocation5 + $0x200] sm:$0xff]
        %v939 = vld [vmem:[#allocation5 + $0x208] sm:$0xff]
        %v940 = vld [vmem:[#allocation5 + $0x210] sm:$0xff]
        %v941 = vld [vmem:[#allocation5 + $0x218] sm:$0xff]
        %v942 = vld [vmem:[#allocation5 + $0x220] sm:$0xff]
        %v943 = vld [vmem:[#allocation5 + $0x228] sm:$0xff]
        %v944 = vld [vmem:[#allocation5 + $0x230] sm:$0xff]
        %v945 = vld [vmem:[#allocation5 + $0x238] sm:$0xff]
        %v946 = vld [vmem:[#allocation5 + $0x240] sm:$0xff]
        %v947 = vld [vmem:[#allocation5 + $0x248] sm:$0xff]
        %v948 = vld [vmem:[#allocation5 + $0x250] sm:$0xff]
        %v949 = vld [vmem:[#allocation5 + $0x258] sm:$0xff]
        %v950 = vld [vmem:[#allocation5 + $0x260] sm:$0xff]
        %v951 = vld [vmem:[#allocation5 + $0x268] sm:$0xff]
        %v952 = vld [vmem:[#allocation5 + $0x270] sm:$0xff]
        %v953 = vld [vmem:[#allocation5 + $0x278] sm:$0xff]
        %v954 = vld [vmem:[#allocation5 + $0x280] sm:$0xff]
        %v955 = vld [vmem:[#allocation5 + $0x288] sm:$0xff]
        %v956 = vld [vmem:[#allocation5 + $0x290] sm:$0xff]
        %v957 = vld [vmem:[#allocation5 + $0x298] sm:$0xff]
        %v958 = vld [vmem:[#allocation5 + $0x2a0] sm:$0xff]
        %v959 = vld [vmem:[#allocation5 + $0x2a8] sm:$0xff]
        %v960 = vld [vmem:[#allocation5 + $0x2b0] sm:$0xff]
        %v961 = vld [vmem:[#allocation5 + $0x2b8] sm:$0xff]
        %v962 = vld [vmem:[#allocation5 + $0x2c0] sm:$0xff]
        %v963 = vld [vmem:[#allocation5 + $0x2c8] sm:$0xff]
        %v964 = vld [vmem:[#allocation5 + $0x2d0] sm:$0xff]
        %v965 = vld [vmem:[#allocation5 + $0x2d8] sm:$0xff]
        %v966 = vld [vmem:[#allocation5 + $0x2e0] sm:$0xff]
        %v967 = vld [vmem:[#allocation5 + $0x2e8] sm:$0xff]
        %v968 = vld [vmem:[#allocation5 + $0x2f0] sm:$0xff]
        %v969 = vld [vmem:[#allocation5 + $0x2f8] sm:$0xff]
        %v970 = vld [vmem:[#allocation5 + $0x300] sm:$0xff]
        %v971 = vld [vmem:[#allocation5 + $0x308] sm:$0xff]
        %v972 = vld [vmem:[#allocation5 + $0x310] sm:$0xff]
        %v973 = vld [vmem:[#allocation5 + $0x318] sm:$0xff]
        %v974 = vld [vmem:[#allocation5 + $0x320] sm:$0xff]
        %v975 = vld [vmem:[#allocation5 + $0x328] sm:$0xff]
        %v976 = vld [vmem:[#allocation5 + $0x330] sm:$0xff]
        %v977 = vld [vmem:[#allocation5 + $0x338] sm:$0xff]
        %v978 = vld [vmem:[#allocation5 + $0x340] sm:$0xff]
        %v979 = vld [vmem:[#allocation5 + $0x348] sm:$0xff]
        %v980 = vld [vmem:[#allocation5 + $0x350] sm:$0xff]
        %v981 = vld [vmem:[#allocation5 + $0x358] sm:$0xff]
        %v982 = vld [vmem:[#allocation5 + $0x360] sm:$0xff]
        %v983 = vld [vmem:[#allocation5 + $0x368] sm:$0xff]
        %v984 = vld [vmem:[#allocation5 + $0x370] sm:$0xff]
        %v985 = vld [vmem:[#allocation5 + $0x378] sm:$0xff]
        %v986 = vld [vmem:[#allocation5 + $0x380] sm:$0xff]
        %v987 = vld [vmem:[#allocation5 + $0x388] sm:$0xff]
        %v988 = vld [vmem:[#allocation5 + $0x390] sm:$0xff]
        %v989 = vld [vmem:[#allocation5 + $0x398] sm:$0xff]
        %v990 = vld [vmem:[#allocation5 + $0x3a0] sm:$0xff]
        %v991 = vld [vmem:[#allocation5 + $0x3a8] sm:$0xff]
        %v992 = vld [vmem:[#allocation5 + $0x3b0] sm:$0xff]
        %v993 = vld [vmem:[#allocation5 + $0x3b8] sm:$0xff]
        %v994 = vld [vmem:[#allocation5 + $0x3c0] sm:$0xff]
        %v995 = vld [vmem:[#allocation5 + $0x3c8] sm:$0xff]
        %v996 = vld [vmem:[#allocation5 + $0x3d0] sm:$0xff]
        %v997 = vld [vmem:[#allocation5 + $0x3d8] sm:$0xff]
        %v998 = vld [vmem:[#allocation5 + $0x3e0] sm:$0xff]
        %v999 = vld [vmem:[#allocation5 + $0x3e8] sm:$0xff]
        %v1000 = vld [vmem:[#allocation5 + $0x3f0] sm:$0xff]
        %v1001 = vld [vmem:[#allocation5 + $0x3f8] sm:$0xff]
        %v1002 = vld [vmem:[#allocation5 + $0x400] sm:$0xff]
        %v1003 = vld [vmem:[#allocation5 + $0x408] sm:$0xff]
        %v1004 = vld [vmem:[#allocation5 + $0x410] sm:$0xff]
        %v1005 = vld [vmem:[#allocation5 + $0x418] sm:$0xff]
        %v1006 = vld [vmem:[#allocation5 + $0x420] sm:$0xff]
        %v1007 = vld [vmem:[#allocation5 + $0x428] sm:$0xff]
        %v1008 = vld [vmem:[#allocation5 + $0x430] sm:$0xff]
        %v1009 = vld [vmem:[#allocation5 + $0x438] sm:$0xff]
        %v1010 = vld [vmem:[#allocation5 + $0x440] sm:$0xff]
        %v1011 = vld [vmem:[#allocation5 + $0x448] sm:$0xff]
        %v1012 = vld [vmem:[#allocation5 + $0x450] sm:$0xff]
        %v1013 = vld [vmem:[#allocation5 + $0x458] sm:$0xff]
        %v1014 = vld [vmem:[#allocation5 + $0x460] sm:$0xff]
        %v1015 = vld [vmem:[#allocation5 + $0x468] sm:$0xff]
        %v1016 = vld [vmem:[#allocation5 + $0x470] sm:$0xff]
        %v1017 = vld [vmem:[#allocation5 + $0x478] sm:$0xff]
        %v1018 = vld [vmem:[#allocation5 + $0x480] sm:$0xff]
        %v1019 = vld [vmem:[#allocation5 + $0x488] sm:$0xff]
        %v1020 = vld [vmem:[#allocation5 + $0x490] sm:$0xff]
        %v1021 = vld [vmem:[#allocation5 + $0x498] sm:$0xff]
        %v1022 = vld [vmem:[#allocation5 + $0x4a0] sm:$0xff]
        %v1023 = vld [vmem:[#allocation5 + $0x4a8] sm:$0xff]
        %v1024 = vld [vmem:[#allocation5 + $0x4b0] sm:$0xff]
        %v1025 = vld [vmem:[#allocation5 + $0x4b8] sm:$0xff]
        %v1026 = vld [vmem:[#allocation5 + $0x4c0] sm:$0xff]
        %v1027 = vld [vmem:[#allocation5 + $0x4c8] sm:$0xff]
        %v1028 = vld [vmem:[#allocation5 + $0x4d0] sm:$0xff]
        %v1029 = vld [vmem:[#allocation5 + $0x4d8] sm:$0xff]
        %v1030 = vld [vmem:[#allocation5 + $0x4e0] sm:$0xff]
        %v1031 = vld [vmem:[#allocation5 + $0x4e8] sm:$0xff]
        %v1032 = vld [vmem:[#allocation5 + $0x4f0] sm:$0xff]
        %v1033 = vld [vmem:[#allocation5 + $0x4f8] sm:$0xff]
        %v1034 = vld [vmem:[#allocation5 + $0x500] sm:$0xff]
        %v1035 = vld [vmem:[#allocation5 + $0x508] sm:$0xff]
        %v1036 = vld [vmem:[#allocation5 + $0x510] sm:$0xff]
        %v1037 = vld [vmem:[#allocation5 + $0x518] sm:$0xff]
        %v1038 = vld [vmem:[#allocation5 + $0x520] sm:$0xff]
        %v1039 = vld [vmem:[#allocation5 + $0x528] sm:$0xff]
        %v1040 = vld [vmem:[#allocation5 + $0x530] sm:$0xff]
        %v1041 = vld [vmem:[#allocation5 + $0x538] sm:$0xff]
        %v1042 = vld [vmem:[#allocation5 + $0x540] sm:$0xff]
        %v1043 = vld [vmem:[#allocation5 + $0x548] sm:$0xff]
        %v1044 = vld [vmem:[#allocation5 + $0x550] sm:$0xff]
        %v1045 = vld [vmem:[#allocation5 + $0x558] sm:$0xff]
        %v1046 = vld [vmem:[#allocation5 + $0x560] sm:$0xff]
        %v1047 = vld [vmem:[#allocation5 + $0x568] sm:$0xff]
        %v1048 = vld [vmem:[#allocation5 + $0x570] sm:$0xff]
        %v1049 = vld [vmem:[#allocation5 + $0x578] sm:$0xff]
        %v1050 = vld [vmem:[#allocation5 + $0x580] sm:$0xff]
        %v1051 = vld [vmem:[#allocation5 + $0x588] sm:$0xff]
        %v1052 = vld [vmem:[#allocation5 + $0x590] sm:$0xff]
        %v1053 = vld [vmem:[#allocation5 + $0x598] sm:$0xff]
        %v1054 = vld [vmem:[#allocation5 + $0x5a0] sm:$0xff]
        %v1055 = vld [vmem:[#allocation5 + $0x5a8] sm:$0xff]
        %v1056 = vld [vmem:[#allocation5 + $0x5b0] sm:$0xff]
        %v1057 = vld [vmem:[#allocation5 + $0x5b8] sm:$0xff]
        %v1058 = vld [vmem:[#allocation5 + $0x5c0] sm:$0xff]
        %v1059 = vld [vmem:[#allocation5 + $0x5c8] sm:$0xff]
        %v1060 = vld [vmem:[#allocation5 + $0x5d0] sm:$0xff]
        %v1061 = vld [vmem:[#allocation5 + $0x5d8] sm:$0xff]
        %v1062 = vld [vmem:[#allocation5 + $0x5e0] sm:$0xff]
        %v1063 = vld [vmem:[#allocation5 + $0x5e8] sm:$0xff]
        %v1064 = vld [vmem:[#allocation5 + $0x5f0] sm:$0xff]
        %v1065 = vld [vmem:[#allocation5 + $0x5f8] sm:$0xff]
        %v1066 = vld [vmem:[#allocation5 + $0x600] sm:$0xff]
        %v1067 = vld [vmem:[#allocation5 + $0x608] sm:$0xff]
        %v1068 = vld [vmem:[#allocation5 + $0x610] sm:$0xff]
        %v1069 = vld [vmem:[#allocation5 + $0x618] sm:$0xff]
        %v1070 = vld [vmem:[#allocation5 + $0x620] sm:$0xff]
        %v1071 = vld [vmem:[#allocation5 + $0x628] sm:$0xff]
        %v1072 = vld [vmem:[#allocation5 + $0x630] sm:$0xff]
        %v1073 = vld [vmem:[#allocation5 + $0x638] sm:$0xff]
        %v1074 = vld [vmem:[#allocation5 + $0x640] sm:$0xff]
        %v1075 = vld [vmem:[#allocation5 + $0x648] sm:$0xff]
        %v1076 = vld [vmem:[#allocation5 + $0x650] sm:$0xff]
        %v1077 = vld [vmem:[#allocation5 + $0x658] sm:$0xff]
        %v1078 = vld [vmem:[#allocation5 + $0x660] sm:$0xff]
        %v1079 = vld [vmem:[#allocation5 + $0x668] sm:$0xff]
        %v1080 = vld [vmem:[#allocation5 + $0x670] sm:$0xff]
        %v1081 = vld [vmem:[#allocation5 + $0x678] sm:$0xff]
        %v1082 = vld [vmem:[#allocation5 + $0x680] sm:$0xff]
        %v1083 = vld [vmem:[#allocation5 + $0x688] sm:$0xff]
        %v1084 = vld [vmem:[#allocation5 + $0x690] sm:$0xff]
        %v1085 = vld [vmem:[#allocation5 + $0x698] sm:$0xff]
        %v1086 = vld [vmem:[#allocation5 + $0x6a0] sm:$0xff]
        %v1087 = vld [vmem:[#allocation5 + $0x6a8] sm:$0xff]
        %v1088 = vld [vmem:[#allocation5 + $0x6b0] sm:$0xff]
        %v1089 = vld [vmem:[#allocation5 + $0x6b8] sm:$0xff]
        %v1090 = vld [vmem:[#allocation5 + $0x6c0] sm:$0xff]
        %v1091 = vld [vmem:[#allocation5 + $0x6c8] sm:$0xff]
        %v1092 = vld [vmem:[#allocation5 + $0x6d0] sm:$0xff]
        %v1093 = vld [vmem:[#allocation5 + $0x6d8] sm:$0xff]
        %v1094 = vld [vmem:[#allocation5 + $0x6e0] sm:$0xff]
        %v1095 = vld [vmem:[#allocation5 + $0x6e8] sm:$0xff]
        %v1096 = vld [vmem:[#allocation5 + $0x6f0] sm:$0xff]
        %v1097 = vld [vmem:[#allocation5 + $0x6f8] sm:$0xff]
        %v1098 = vld [vmem:[#allocation5 + $0x700] sm:$0xff]
        %v1099 = vld [vmem:[#allocation5 + $0x708] sm:$0xff]
        %v1100 = vld [vmem:[#allocation5 + $0x710] sm:$0xff]
        %v1101 = vld [vmem:[#allocation5 + $0x718] sm:$0xff]
        %v1102 = vld [vmem:[#allocation5 + $0x720] sm:$0xff]
        %v1103 = vld [vmem:[#allocation5 + $0x728] sm:$0xff]
        %v1104 = vld [vmem:[#allocation5 + $0x730] sm:$0xff]
        %v1105 = vld [vmem:[#allocation5 + $0x738] sm:$0xff]
        %v1106 = vld [vmem:[#allocation5 + $0x740] sm:$0xff]
        %v1107 = vld [vmem:[#allocation5 + $0x748] sm:$0xff]
        %v1108 = vld [vmem:[#allocation5 + $0x750] sm:$0xff]
        %v1109 = vld [vmem:[#allocation5 + $0x758] sm:$0xff]
        %v1110 = vld [vmem:[#allocation5 + $0x760] sm:$0xff]
        %v1111 = vld [vmem:[#allocation5 + $0x768] sm:$0xff]
        %v1112 = vld [vmem:[#allocation5 + $0x770] sm:$0xff]
        %v1113 = vld [vmem:[#allocation5 + $0x778] sm:$0xff]
        %v1114 = vld [vmem:[#allocation5 + $0x780] sm:$0xff]
        %v1115 = vld [vmem:[#allocation5 + $0x788] sm:$0xff]
        %v1116 = vld [vmem:[#allocation5 + $0x790] sm:$0xff]
        %v1117 = vld [vmem:[#allocation5 + $0x798] sm:$0xff]
        %v1118 = vld [vmem:[#allocation5 + $0x7a0] sm:$0xff]
        %v1119 = vld [vmem:[#allocation5 + $0x7a8] sm:$0xff]
        %v1120 = vld [vmem:[#allocation5 + $0x7b0] sm:$0xff]
        %v1121 = vld [vmem:[#allocation5 + $0x7b8] sm:$0xff]
        %v1122 = vld [vmem:[#allocation5 + $0x7c0] sm:$0xff]
        %v1123 = vld [vmem:[#allocation5 + $0x7c8] sm:$0xff]
        %v1124 = vld [vmem:[#allocation5 + $0x7d0] sm:$0xff]
        %v1125 = vld [vmem:[#allocation5 + $0x7d8] sm:$0xff]
        %v1126 = vld [vmem:[#allocation5 + $0x7e0] sm:$0xff]
        %v1127 = vld [vmem:[#allocation5 + $0x7e8] sm:$0xff]
        %v1128 = vld [vmem:[#allocation5 + $0x7f0] sm:$0xff]
        %v1129 = vld [vmem:[#allocation5 + $0x7f8] sm:$0xff]
        %v1130 = vld [vmem:[#allocation5 + $0x800] sm:$0xff]
        %v1131 = vld [vmem:[#allocation5 + $0x808] sm:$0xff]
        %v1132 = vld [vmem:[#allocation5 + $0x810] sm:$0xff]
        %v1133 = vld [vmem:[#allocation5 + $0x818] sm:$0xff]
        %v1134 = vld [vmem:[#allocation5 + $0x820] sm:$0xff]
        %v1135 = vld [vmem:[#allocation5 + $0x828] sm:$0xff]
        %v1136 = vld [vmem:[#allocation5 + $0x830] sm:$0xff]
        %v1137 = vld [vmem:[#allocation5 + $0x838] sm:$0xff]
        %v1138 = vld [vmem:[#allocation5 + $0x840] sm:$0xff]
        %v1139 = vld [vmem:[#allocation5 + $0x848] sm:$0xff]
        %v1140 = vld [vmem:[#allocation5 + $0x850] sm:$0xff]
        %v1141 = vld [vmem:[#allocation5 + $0x858] sm:$0xff]
        %v1142 = vld [vmem:[#allocation5 + $0x860] sm:$0xff]
        %v1143 = vld [vmem:[#allocation5 + $0x868] sm:$0xff]
        %v1144 = vld [vmem:[#allocation5 + $0x870] sm:$0xff]
        %v1145 = vld [vmem:[#allocation5 + $0x878] sm:$0xff]
        %v1146 = vld [vmem:[#allocation5 + $0x880] sm:$0xff]
        %v1147 = vld [vmem:[#allocation5 + $0x888] sm:$0xff]
        %v1148 = vld [vmem:[#allocation5 + $0x890] sm:$0xff]
        %v1149 = vld [vmem:[#allocation5 + $0x898] sm:$0xff]
        %v1150 = vld [vmem:[#allocation5 + $0x8a0] sm:$0xff]
        %v1151 = vld [vmem:[#allocation5 + $0x8a8] sm:$0xff]
        %v1152 = vld [vmem:[#allocation5 + $0x8b0] sm:$0xff]
        %v1153 = vld [vmem:[#allocation5 + $0x8b8] sm:$0xff]
        %v1154 = vld [vmem:[#allocation5 + $0x8c0] sm:$0xff]
        %v1155 = vld [vmem:[#allocation5 + $0x8c8] sm:$0xff]
        %v1156 = vld [vmem:[#allocation5 + $0x8d0] sm:$0xff]
        %v1157 = vld [vmem:[#allocation5 + $0x8d8] sm:$0xff]
        %v1158 = vld [vmem:[#allocation5 + $0x8e0] sm:$0xff]
        %v1159 = vld [vmem:[#allocation5 + $0x8e8] sm:$0xff]
        %v1160 = vld [vmem:[#allocation5 + $0x8f0] sm:$0xff]
        %v1161 = vld [vmem:[#allocation5 + $0x8f8] sm:$0xff]
        %v1162 = vld [vmem:[#allocation5 + $0x900] sm:$0xff]
        %v1163 = vld [vmem:[#allocation5 + $0x908] sm:$0xff]
        %v1164 = vld [vmem:[#allocation5 + $0x910] sm:$0xff]
        %v1165 = vld [vmem:[#allocation5 + $0x918] sm:$0xff]
        %v1166 = vld [vmem:[#allocation5 + $0x920] sm:$0xff]
        %v1167 = vld [vmem:[#allocation5 + $0x928] sm:$0xff]
        %v1168 = vld [vmem:[#allocation5 + $0x930] sm:$0xff]
        %v1169 = vld [vmem:[#allocation5 + $0x938] sm:$0xff]
        %v1170 = vld [vmem:[#allocation5 + $0x940] sm:$0xff]
        %v1171 = vld [vmem:[#allocation5 + $0x948] sm:$0xff]
        %v1172 = vld [vmem:[#allocation5 + $0x950] sm:$0xff]
        %v1173 = vld [vmem:[#allocation5 + $0x958] sm:$0xff]
        %v1174 = vld [vmem:[#allocation5 + $0x960] sm:$0xff]
        %v1175 = vld [vmem:[#allocation5 + $0x968] sm:$0xff]
        %v1176 = vld [vmem:[#allocation5 + $0x970] sm:$0xff]
        %v1177 = vld [vmem:[#allocation5 + $0x978] sm:$0xff]
        %v1178 = vld [vmem:[#allocation5 + $0x980] sm:$0xff]
        %v1179 = vld [vmem:[#allocation5 + $0x988] sm:$0xff]
        %v1180 = vld [vmem:[#allocation5 + $0x990] sm:$0xff]
        %v1181 = vld [vmem:[#allocation5 + $0x998] sm:$0xff]
        %v1182 = vld [vmem:[#allocation5 + $0x9a0] sm:$0xff]
        %v1183 = vld [vmem:[#allocation5 + $0x9a8] sm:$0xff]
        %v1184 = vld [vmem:[#allocation5 + $0x9b0] sm:$0xff]
        %v1185 = vld [vmem:[#allocation5 + $0x9b8] sm:$0xff]
        %v1186 = vld [vmem:[#allocation5 + $0x9c0] sm:$0xff]
        %v1187 = vld [vmem:[#allocation5 + $0x9c8] sm:$0xff]
        %v1188 = vld [vmem:[#allocation5 + $0x9d0] sm:$0xff]
        %v1189 = vld [vmem:[#allocation5 + $0x9d8] sm:$0xff]
        %v1190 = vld [vmem:[#allocation5 + $0x9e0] sm:$0xff]
        %v1191 = vld [vmem:[#allocation5 + $0x9e8] sm:$0xff]
        %v1192 = vld [vmem:[#allocation5 + $0x9f0] sm:$0xff]
        %v1193 = vld [vmem:[#allocation5 + $0x9f8] sm:$0xff]
        %v1194 = vld [vmem:[#allocation5 + $0xa00] sm:$0xff]
        %v1195 = vld [vmem:[#allocation5 + $0xa08] sm:$0xff]
        %v1196 = vld [vmem:[#allocation5 + $0xa10] sm:$0xff]
        %v1197 = vld [vmem:[#allocation5 + $0xa18] sm:$0xff]
        %v1198 = vld [vmem:[#allocation5 + $0xa20] sm:$0xff]
        %v1199 = vld [vmem:[#allocation5 + $0xa28] sm:$0xff]
        %v1200 = vld [vmem:[#allocation5 + $0xa30] sm:$0xff]
        %v1201 = vld [vmem:[#allocation5 + $0xa38] sm:$0xff]
        %v1202 = vld [vmem:[#allocation5 + $0xa40] sm:$0xff]
        %v1203 = vld [vmem:[#allocation5 + $0xa48] sm:$0xff]
        %v1204 = vld [vmem:[#allocation5 + $0xa50] sm:$0xff]
        %v1205 = vld [vmem:[#allocation5 + $0xa58] sm:$0xff]
        %v1206 = vld [vmem:[#allocation5 + $0xa60] sm:$0xff]
        %v1207 = vld [vmem:[#allocation5 + $0xa68] sm:$0xff]
        %v1208 = vld [vmem:[#allocation5 + $0xa70] sm:$0xff]
        %v1209 = vld [vmem:[#allocation5 + $0xa78] sm:$0xff]
        %v1210 = vld [vmem:[#allocation5 + $0xa80] sm:$0xff]
        %v1211 = vld [vmem:[#allocation5 + $0xa88] sm:$0xff]
        %v1212 = vld [vmem:[#allocation5 + $0xa90] sm:$0xff]
        %v1213 = vld [vmem:[#allocation5 + $0xa98] sm:$0xff]
        %v1214 = vld [vmem:[#allocation5 + $0xaa0] sm:$0xff]
        %v1215 = vld [vmem:[#allocation5 + $0xaa8] sm:$0xff]
        %v1216 = vld [vmem:[#allocation5 + $0xab0] sm:$0xff]
        %v1217 = vld [vmem:[#allocation5 + $0xab8] sm:$0xff]
        %v1218 = vld [vmem:[#allocation5 + $0xac0] sm:$0xff]
        %v1219 = vld [vmem:[#allocation5 + $0xac8] sm:$0xff]
        %v1220 = vld [vmem:[#allocation5 + $0xad0] sm:$0xff]
        %v1221 = vld [vmem:[#allocation5 + $0xad8] sm:$0xff]
        %v1222 = vld [vmem:[#allocation5 + $0xae0] sm:$0xff]
        %v1223 = vld [vmem:[#allocation5 + $0xae8] sm:$0xff]
        %v1224 = vld [vmem:[#allocation5 + $0xaf0] sm:$0xff]
        %v1225 = vld [vmem:[#allocation5 + $0xaf8] sm:$0xff]
        %v1226 = vld [vmem:[#allocation5 + $0xb00] sm:$0xff]
        %v1227 = vld [vmem:[#allocation5 + $0xb08] sm:$0xff]
        %v1228 = vld [vmem:[#allocation5 + $0xb10] sm:$0xff]
        %v1229 = vld [vmem:[#allocation5 + $0xb18] sm:$0xff]
        %v1230 = vld [vmem:[#allocation5 + $0xb20] sm:$0xff]
        %v1231 = vld [vmem:[#allocation5 + $0xb28] sm:$0xff]
        %v1232 = vld [vmem:[#allocation5 + $0xb30] sm:$0xff]
        %v1233 = vld [vmem:[#allocation5 + $0xb38] sm:$0xff]
        %v1234 = vld [vmem:[#allocation5 + $0xb40] sm:$0xff]
        %v1235 = vld [vmem:[#allocation5 + $0xb48] sm:$0xff]
        %v1236 = vld [vmem:[#allocation5 + $0xb50] sm:$0xff]
        %v1237 = vld [vmem:[#allocation5 + $0xb58] sm:$0xff]
        %v1238 = vld [vmem:[#allocation5 + $0xb60] sm:$0xff]
        %v1239 = vld [vmem:[#allocation5 + $0xb68] sm:$0xff]
        %v1240 = vld [vmem:[#allocation5 + $0xb70] sm:$0xff]
        %v1241 = vld [vmem:[#allocation5 + $0xb78] sm:$0xff]
        %v1242 = vld [vmem:[#allocation5 + $0xb80] sm:$0xff]
        %v1243 = vld [vmem:[#allocation5 + $0xb88] sm:$0xff]
        %v1244 = vld [vmem:[#allocation5 + $0xb90] sm:$0xff]
        %v1245 = vld [vmem:[#allocation5 + $0xb98] sm:$0xff]
        %v1246 = vld [vmem:[#allocation5 + $0xba0] sm:$0xff]
        %v1247 = vld [vmem:[#allocation5 + $0xba8] sm:$0xff]
        %v1248 = vld [vmem:[#allocation5 + $0xbb0] sm:$0xff]
        %v1249 = vld [vmem:[#allocation5 + $0xbb8] sm:$0xff]
        %v1250 = vld [vmem:[#allocation5 + $0xbc0] sm:$0xff]
        %v1251 = vld [vmem:[#allocation5 + $0xbc8] sm:$0xff]
        %v1252 = vld [vmem:[#allocation5 + $0xbd0] sm:$0xff]
        %v1253 = vld [vmem:[#allocation5 + $0xbd8] sm:$0xff]
        %v1254 = vld [vmem:[#allocation5 + $0xbe0] sm:$0xff]
        %v1255 = vld [vmem:[#allocation5 + $0xbe8] sm:$0xff]
        %v1256 = vld [vmem:[#allocation5 + $0xbf0] sm:$0xff]
        %v1257 = vld [vmem:[#allocation5 + $0xbf8] sm:$0xff]
        %v1258 = vld [vmem:[#allocation5 + $0xc00] sm:$0xff]
        %v1259 = vld [vmem:[#allocation5 + $0xc08] sm:$0xff]
        %v1260 = vld [vmem:[#allocation5 + $0xc10] sm:$0xff]
        %v1261 = vld [vmem:[#allocation5 + $0xc18] sm:$0xff]
        %v1262 = vld [vmem:[#allocation5 + $0xc20] sm:$0xff]
        %v1263 = vld [vmem:[#allocation5 + $0xc28] sm:$0xff]
        %v1264 = vld [vmem:[#allocation5 + $0xc30] sm:$0xff]
        %v1265 = vld [vmem:[#allocation5 + $0xc38] sm:$0xff]
        %v1266 = vld [vmem:[#allocation5 + $0xc40] sm:$0xff]
        %v1267 = vld [vmem:[#allocation5 + $0xc48] sm:$0xff]
        %v1268 = vld [vmem:[#allocation5 + $0xc50] sm:$0xff]
        %v1269 = vld [vmem:[#allocation5 + $0xc58] sm:$0xff]
        %v1270 = vld [vmem:[#allocation5 + $0xc60] sm:$0xff]
        %v1271 = vld [vmem:[#allocation5 + $0xc68] sm:$0xff]
        %v1272 = vld [vmem:[#allocation5 + $0xc70] sm:$0xff]
        %v1273 = vld [vmem:[#allocation5 + $0xc78] sm:$0xff]
        %v1274 = vld [vmem:[#allocation5 + $0xc80] sm:$0xff]
        %v1275 = vld [vmem:[#allocation5 + $0xc88] sm:$0xff]
        %v1276 = vld [vmem:[#allocation5 + $0xc90] sm:$0xff]
        %v1277 = vld [vmem:[#allocation5 + $0xc98] sm:$0xff]
        %v1278 = vld [vmem:[#allocation5 + $0xca0] sm:$0xff]
        %v1279 = vld [vmem:[#allocation5 + $0xca8] sm:$0xff]
        %v1280 = vld [vmem:[#allocation5 + $0xcb0] sm:$0xff]
        %v1281 = vld [vmem:[#allocation5 + $0xcb8] sm:$0xff]
        %v1282 = vld [vmem:[#allocation5 + $0xcc0] sm:$0xff]
        %v1283 = vld [vmem:[#allocation5 + $0xcc8] sm:$0xff]
        %v1284 = vld [vmem:[#allocation5 + $0xcd0] sm:$0xff]
        %v1285 = vld [vmem:[#allocation5 + $0xcd8] sm:$0xff]
        %v1286 = vld [vmem:[#allocation5 + $0xce0] sm:$0xff]
        %v1287 = vld [vmem:[#allocation5 + $0xce8] sm:$0xff]
        %v1288 = vld [vmem:[#allocation5 + $0xcf0] sm:$0xff]
        %v1289 = vld [vmem:[#allocation5 + $0xcf8] sm:$0xff]
        %v1290 = vld [vmem:[#allocation5 + $0xd00] sm:$0xff]
        %v1291 = vld [vmem:[#allocation5 + $0xd08] sm:$0xff]
        %v1292 = vld [vmem:[#allocation5 + $0xd10] sm:$0xff]
        %v1293 = vld [vmem:[#allocation5 + $0xd18] sm:$0xff]
        %v1294 = vld [vmem:[#allocation5 + $0xd20] sm:$0xff]
        %v1295 = vld [vmem:[#allocation5 + $0xd28] sm:$0xff]
        %v1296 = vld [vmem:[#allocation5 + $0xd30] sm:$0xff]
        %v1297 = vld [vmem:[#allocation5 + $0xd38] sm:$0xff]
        %v1298 = vld [vmem:[#allocation5 + $0xd40] sm:$0xff]
        %v1299 = vld [vmem:[#allocation5 + $0xd48] sm:$0xff]
        %v1300 = vld [vmem:[#allocation5 + $0xd50] sm:$0xff]
        %v1301 = vld [vmem:[#allocation5 + $0xd58] sm:$0xff]
        %v1302 = vld [vmem:[#allocation5 + $0xd60] sm:$0xff]
        %v1303 = vld [vmem:[#allocation5 + $0xd68] sm:$0xff]
        %v1304 = vld [vmem:[#allocation5 + $0xd70] sm:$0xff]
        %v1305 = vld [vmem:[#allocation5 + $0xd78] sm:$0xff]
        %v1306 = vld [vmem:[#allocation5 + $0xd80] sm:$0xff]
        %v1307 = vld [vmem:[#allocation5 + $0xd88] sm:$0xff]
        %v1308 = vld [vmem:[#allocation5 + $0xd90] sm:$0xff]
        %v1309 = vld [vmem:[#allocation5 + $0xd98] sm:$0xff]
        %v1310 = vld [vmem:[#allocation5 + $0xda0] sm:$0xff]
        %v1311 = vld [vmem:[#allocation5 + $0xda8] sm:$0xff]
        %v1312 = vld [vmem:[#allocation5 + $0xdb0] sm:$0xff]
        %v1313 = vld [vmem:[#allocation5 + $0xdb8] sm:$0xff]
        %v1314 = vld [vmem:[#allocation5 + $0xdc0] sm:$0xff]
        %v1315 = vld [vmem:[#allocation5 + $0xdc8] sm:$0xff]
        %v1316 = vld [vmem:[#allocation5 + $0xdd0] sm:$0xff]
        %v1317 = vld [vmem:[#allocation5 + $0xdd8] sm:$0xff]
        %v1318 = vld [vmem:[#allocation5 + $0xde0] sm:$0xff]
        %v1319 = vld [vmem:[#allocation5 + $0xde8] sm:$0xff]
        %v1320 = vld [vmem:[#allocation5 + $0xdf0] sm:$0xff]
        %v1321 = vld [vmem:[#allocation5 + $0xdf8] sm:$0xff]
        %v1322 = vld [vmem:[#allocation5 + $0xe00] sm:$0xff]
        %v1323 = vld [vmem:[#allocation5 + $0xe08] sm:$0xff]
        %v1324 = vld [vmem:[#allocation5 + $0xe10] sm:$0xff]
        %v1325 = vld [vmem:[#allocation5 + $0xe18] sm:$0xff]
        %v1326 = vld [vmem:[#allocation5 + $0xe20] sm:$0xff]
        %v1327 = vld [vmem:[#allocation5 + $0xe28] sm:$0xff]
        %v1328 = vld [vmem:[#allocation5 + $0xe30] sm:$0xff]
        %v1329 = vld [vmem:[#allocation5 + $0xe38] sm:$0xff]
        %v1330 = vld [vmem:[#allocation5 + $0xe40] sm:$0xff]
        %v1331 = vld [vmem:[#allocation5 + $0xe48] sm:$0xff]
        %v1332 = vld [vmem:[#allocation5 + $0xe50] sm:$0xff]
        %v1333 = vld [vmem:[#allocation5 + $0xe58] sm:$0xff]
        %v1334 = vld [vmem:[#allocation5 + $0xe60] sm:$0xff]
        %v1335 = vld [vmem:[#allocation5 + $0xe68] sm:$0xff]
        %v1336 = vld [vmem:[#allocation5 + $0xe70] sm:$0xff]
        %v1337 = vld [vmem:[#allocation5 + $0xe78] sm:$0xff]
        %v1338 = vld [vmem:[#allocation5 + $0xe80] sm:$0xff]
        %v1339 = vld [vmem:[#allocation5 + $0xe88] sm:$0xff]
        %v1340 = vld [vmem:[#allocation5 + $0xe90] sm:$0xff]
        %v1341 = vld [vmem:[#allocation5 + $0xe98] sm:$0xff]
        %v1342 = vld [vmem:[#allocation5 + $0xea0] sm:$0xff]
        %v1343 = vld [vmem:[#allocation5 + $0xea8] sm:$0xff]
        %v1344 = vld [vmem:[#allocation5 + $0xeb0] sm:$0xff]
        %v1345 = vld [vmem:[#allocation5 + $0xeb8] sm:$0xff]
        %v1346 = vld [vmem:[#allocation5 + $0xec0] sm:$0xff]
        %v1347 = vld [vmem:[#allocation5 + $0xec8] sm:$0xff]
        %v1348 = vld [vmem:[#allocation5 + $0xed0] sm:$0xff]
        %v1349 = vld [vmem:[#allocation5 + $0xed8] sm:$0xff]
        %v1350 = vld [vmem:[#allocation5 + $0xee0] sm:$0xff]
        %v1351 = vld [vmem:[#allocation5 + $0xee8] sm:$0xff]
        %v1352 = vld [vmem:[#allocation5 + $0xef0] sm:$0xff]
        %v1353 = vld [vmem:[#allocation5 + $0xef8] sm:$0xff]
        %v1354 = vld [vmem:[#allocation5 + $0xf00] sm:$0xff]
        %v1355 = vld [vmem:[#allocation5 + $0xf08] sm:$0xff]
        %v1356 = vld [vmem:[#allocation5 + $0xf10] sm:$0xff]
        %v1357 = vld [vmem:[#allocation5 + $0xf18] sm:$0xff]
        %v1358 = vld [vmem:[#allocation5 + $0xf20] sm:$0xff]
        %v1359 = vld [vmem:[#allocation5 + $0xf28] sm:$0xff]
        %v1360 = vld [vmem:[#allocation5 + $0xf30] sm:$0xff]
        %v1361 = vld [vmem:[#allocation5 + $0xf38] sm:$0xff]
        %v1362 = vld [vmem:[#allocation5 + $0xf40] sm:$0xff]
        %v1363 = vld [vmem:[#allocation5 + $0xf48] sm:$0xff]
        %v1364 = vld [vmem:[#allocation5 + $0xf50] sm:$0xff]
        %v1365 = vld [vmem:[#allocation5 + $0xf58] sm:$0xff]
        %v1366 = vld [vmem:[#allocation5 + $0xf60] sm:$0xff]
        %v1367 = vld [vmem:[#allocation5 + $0xf68] sm:$0xff]
        %v1368 = vld [vmem:[#allocation5 + $0xf70] sm:$0xff]
        %v1369 = vld [vmem:[#allocation5 + $0xf78] sm:$0xff]
        %v1370 = vld [vmem:[#allocation5 + $0xf80] sm:$0xff]
        %v1371 = vld [vmem:[#allocation5 + $0xf88] sm:$0xff]
        %v1372 = vld [vmem:[#allocation5 + $0xf90] sm:$0xff]
        %v1373 = vld [vmem:[#allocation5 + $0xf98] sm:$0xff]
        %v1374 = vld [vmem:[#allocation5 + $0xfa0] sm:$0xff]
        %v1375 = vld [vmem:[#allocation5 + $0xfa8] sm:$0xff]
        %v1376 = vld [vmem:[#allocation5 + $0xfb0] sm:$0xff]
        %v1377 = vld [vmem:[#allocation5 + $0xfb8] sm:$0xff]
        %v1378 = vld [vmem:[#allocation5 + $0xfc0] sm:$0xff]
        %v1379 = vld [vmem:[#allocation5 + $0xfc8] sm:$0xff]
        %v1380 = vld [vmem:[#allocation5 + $0xfd0] sm:$0xff]
        %v1381 = vld [vmem:[#allocation5 + $0xfd8] sm:$0xff]
        %v1382 = vld [vmem:[#allocation5 + $0xfe0] sm:$0xff]
        %v1383 = vld [vmem:[#allocation5 + $0xfe8] sm:$0xff]
        %v1384 = vld [vmem:[#allocation5 + $0xff0] sm:$0xff]
        %v1385 = vld [vmem:[#allocation5 + $0xff8] sm:$0xff]
        %v1386 = vpack.c.bf16 %v882, %v874
        %v1387 = vpack.c.bf16 %v883, %v875
        %v1388 = vpack.c.bf16 %v884, %v876
        %v1389 = vpack.c.bf16 %v885, %v877
        %v1390 = vpack.c.bf16 %v886, %v878
        %v1391 = vpack.c.bf16 %v887, %v879
        %v1392 = vpack.c.bf16 %v888, %v880
        %v1393 = vpack.c.bf16 %v889, %v881
        %v1394 = vpack.c.bf16 %v898, %v890
        %v1395 = vpack.c.bf16 %v899, %v891
        %v1396 = vpack.c.bf16 %v900, %v892
        %v1397 = vpack.c.bf16 %v901, %v893
        %v1398 = vpack.c.bf16 %v902, %v894
        %v1399 = vpack.c.bf16 %v903, %v895
        %v1400 = vpack.c.bf16 %v904, %v896
        %v1401 = vpack.c.bf16 %v905, %v897
        %v1402 = vpack.c.bf16 %v914, %v906
        %v1403 = vpack.c.bf16 %v915, %v907
        %v1404 = vpack.c.bf16 %v916, %v908
        %v1405 = vpack.c.bf16 %v917, %v909
        %v1406 = vpack.c.bf16 %v918, %v910
        %v1407 = vpack.c.bf16 %v919, %v911
        %v1408 = vpack.c.bf16 %v920, %v912
        %v1409 = vpack.c.bf16 %v921, %v913
        %v1410 = vpack.c.bf16 %v930, %v922
        %v1411 = vpack.c.bf16 %v931, %v923
        %v1412 = vpack.c.bf16 %v932, %v924
        %v1413 = vpack.c.bf16 %v933, %v925
        %v1414 = vpack.c.bf16 %v934, %v926
        %v1415 = vpack.c.bf16 %v935, %v927
        %v1416 = vpack.c.bf16 %v936, %v928
        %v1417 = vpack.c.bf16 %v937, %v929
        %v1418 = vpack.c.bf16 %v946, %v938
        %v1419 = vpack.c.bf16 %v947, %v939
        %v1420 = vpack.c.bf16 %v948, %v940
        %v1421 = vpack.c.bf16 %v949, %v941
        %v1422 = vpack.c.bf16 %v950, %v942
        %v1423 = vpack.c.bf16 %v951, %v943
        %v1424 = vpack.c.bf16 %v952, %v944
        %v1425 = vpack.c.bf16 %v953, %v945
        %v1426 = vpack.c.bf16 %v962, %v954
        %v1427 = vpack.c.bf16 %v963, %v955
        %v1428 = vpack.c.bf16 %v964, %v956
        %v1429 = vpack.c.bf16 %v965, %v957
        %v1430 = vpack.c.bf16 %v966, %v958
        %v1431 = vpack.c.bf16 %v967, %v959
        %v1432 = vpack.c.bf16 %v968, %v960
        %v1433 = vpack.c.bf16 %v969, %v961
        %v1434 = vpack.c.bf16 %v978, %v970
        %v1435 = vpack.c.bf16 %v979, %v971
        %v1436 = vpack.c.bf16 %v980, %v972
        %v1437 = vpack.c.bf16 %v981, %v973
        %v1438 = vpack.c.bf16 %v982, %v974
        %v1439 = vpack.c.bf16 %v983, %v975
        %v1440 = vpack.c.bf16 %v984, %v976
        %v1441 = vpack.c.bf16 %v985, %v977
        %v1442 = vpack.c.bf16 %v994, %v986
        %v1443 = vpack.c.bf16 %v995, %v987
        %v1444 = vpack.c.bf16 %v996, %v988
        %v1445 = vpack.c.bf16 %v997, %v989
        %v1446 = vpack.c.bf16 %v998, %v990
        %v1447 = vpack.c.bf16 %v999, %v991
        %v1448 = vpack.c.bf16 %v1000, %v992
        %v1449 = vpack.c.bf16 %v1001, %v993
        %v1450 = vpack.c.bf16 %v1010, %v1002
        %v1451 = vpack.c.bf16 %v1011, %v1003
        %v1452 = vpack.c.bf16 %v1012, %v1004
        %v1453 = vpack.c.bf16 %v1013, %v1005
        %v1454 = vpack.c.bf16 %v1014, %v1006
        %v1455 = vpack.c.bf16 %v1015, %v1007
        %v1456 = vpack.c.bf16 %v1016, %v1008
        %v1457 = vpack.c.bf16 %v1017, %v1009
        %v1458 = vpack.c.bf16 %v1026, %v1018
        %v1459 = vpack.c.bf16 %v1027, %v1019
        %v1460 = vpack.c.bf16 %v1028, %v1020
        %v1461 = vpack.c.bf16 %v1029, %v1021
        %v1462 = vpack.c.bf16 %v1030, %v1022
        %v1463 = vpack.c.bf16 %v1031, %v1023
        %v1464 = vpack.c.bf16 %v1032, %v1024
        %v1465 = vpack.c.bf16 %v1033, %v1025
        %v1466 = vpack.c.bf16 %v1042, %v1034
        %v1467 = vpack.c.bf16 %v1043, %v1035
        %v1468 = vpack.c.bf16 %v1044, %v1036
        %v1469 = vpack.c.bf16 %v1045, %v1037
        %v1470 = vpack.c.bf16 %v1046, %v1038
        %v1471 = vpack.c.bf16 %v1047, %v1039
        %v1472 = vpack.c.bf16 %v1048, %v1040
        %v1473 = vpack.c.bf16 %v1049, %v1041
        %v1474 = vpack.c.bf16 %v1058, %v1050
        %v1475 = vpack.c.bf16 %v1059, %v1051
        %v1476 = vpack.c.bf16 %v1060, %v1052
        %v1477 = vpack.c.bf16 %v1061, %v1053
        %v1478 = vpack.c.bf16 %v1062, %v1054
        %v1479 = vpack.c.bf16 %v1063, %v1055
        %v1480 = vpack.c.bf16 %v1064, %v1056
        %v1481 = vpack.c.bf16 %v1065, %v1057
        %v1482 = vpack.c.bf16 %v1074, %v1066
        %v1483 = vpack.c.bf16 %v1075, %v1067
        %v1484 = vpack.c.bf16 %v1076, %v1068
        %v1485 = vpack.c.bf16 %v1077, %v1069
        %v1486 = vpack.c.bf16 %v1078, %v1070
        %v1487 = vpack.c.bf16 %v1079, %v1071
        %v1488 = vpack.c.bf16 %v1080, %v1072
        %v1489 = vpack.c.bf16 %v1081, %v1073
        %v1490 = vpack.c.bf16 %v1090, %v1082
        %v1491 = vpack.c.bf16 %v1091, %v1083
        %v1492 = vpack.c.bf16 %v1092, %v1084
        %v1493 = vpack.c.bf16 %v1093, %v1085
        %v1494 = vpack.c.bf16 %v1094, %v1086
        %v1495 = vpack.c.bf16 %v1095, %v1087
        %v1496 = vpack.c.bf16 %v1096, %v1088
        %v1497 = vpack.c.bf16 %v1097, %v1089
        %v1498 = vpack.c.bf16 %v1106, %v1098
        %v1499 = vpack.c.bf16 %v1107, %v1099
        %v1500 = vpack.c.bf16 %v1108, %v1100
        %v1501 = vpack.c.bf16 %v1109, %v1101
        %v1502 = vpack.c.bf16 %v1110, %v1102
        %v1503 = vpack.c.bf16 %v1111, %v1103
        %v1504 = vpack.c.bf16 %v1112, %v1104
        %v1505 = vpack.c.bf16 %v1113, %v1105
        %v1506 = vpack.c.bf16 %v1122, %v1114
        %v1507 = vpack.c.bf16 %v1123, %v1115
        %v1508 = vpack.c.bf16 %v1124, %v1116
        %v1509 = vpack.c.bf16 %v1125, %v1117
        %v1510 = vpack.c.bf16 %v1126, %v1118
        %v1511 = vpack.c.bf16 %v1127, %v1119
        %v1512 = vpack.c.bf16 %v1128, %v1120
        %v1513 = vpack.c.bf16 %v1129, %v1121
        %v1514 = vpack.c.bf16 %v1138, %v1130
        %v1515 = vpack.c.bf16 %v1139, %v1131
        %v1516 = vpack.c.bf16 %v1140, %v1132
        %v1517 = vpack.c.bf16 %v1141, %v1133
        %v1518 = vpack.c.bf16 %v1142, %v1134
        %v1519 = vpack.c.bf16 %v1143, %v1135
        %v1520 = vpack.c.bf16 %v1144, %v1136
        %v1521 = vpack.c.bf16 %v1145, %v1137
        %v1522 = vpack.c.bf16 %v1154, %v1146
        %v1523 = vpack.c.bf16 %v1155, %v1147
        %v1524 = vpack.c.bf16 %v1156, %v1148
        %v1525 = vpack.c.bf16 %v1157, %v1149
        %v1526 = vpack.c.bf16 %v1158, %v1150
        %v1527 = vpack.c.bf16 %v1159, %v1151
        %v1528 = vpack.c.bf16 %v1160, %v1152
        %v1529 = vpack.c.bf16 %v1161, %v1153
        %v1530 = vpack.c.bf16 %v1170, %v1162
        %v1531 = vpack.c.bf16 %v1171, %v1163
        %v1532 = vpack.c.bf16 %v1172, %v1164
        %v1533 = vpack.c.bf16 %v1173, %v1165
        %v1534 = vpack.c.bf16 %v1174, %v1166
        %v1535 = vpack.c.bf16 %v1175, %v1167
        %v1536 = vpack.c.bf16 %v1176, %v1168
        %v1537 = vpack.c.bf16 %v1177, %v1169
        %v1538 = vpack.c.bf16 %v1186, %v1178
        %v1539 = vpack.c.bf16 %v1187, %v1179
        %v1540 = vpack.c.bf16 %v1188, %v1180
        %v1541 = vpack.c.bf16 %v1189, %v1181
        %v1542 = vpack.c.bf16 %v1190, %v1182
        %v1543 = vpack.c.bf16 %v1191, %v1183
        %v1544 = vpack.c.bf16 %v1192, %v1184
        %v1545 = vpack.c.bf16 %v1193, %v1185
        %v1546 = vpack.c.bf16 %v1202, %v1194
        %v1547 = vpack.c.bf16 %v1203, %v1195
        %v1548 = vpack.c.bf16 %v1204, %v1196
        %v1549 = vpack.c.bf16 %v1205, %v1197
        %v1550 = vpack.c.bf16 %v1206, %v1198
        %v1551 = vpack.c.bf16 %v1207, %v1199
        %v1552 = vpack.c.bf16 %v1208, %v1200
        %v1553 = vpack.c.bf16 %v1209, %v1201
        %v1554 = vpack.c.bf16 %v1218, %v1210
        %v1555 = vpack.c.bf16 %v1219, %v1211
        %v1556 = vpack.c.bf16 %v1220, %v1212
        %v1557 = vpack.c.bf16 %v1221, %v1213
        %v1558 = vpack.c.bf16 %v1222, %v1214
        %v1559 = vpack.c.bf16 %v1223, %v1215
        %v1560 = vpack.c.bf16 %v1224, %v1216
        %v1561 = vpack.c.bf16 %v1225, %v1217
        %v1562 = vpack.c.bf16 %v1234, %v1226
        %v1563 = vpack.c.bf16 %v1235, %v1227
        %v1564 = vpack.c.bf16 %v1236, %v1228
        %v1565 = vpack.c.bf16 %v1237, %v1229
        %v1566 = vpack.c.bf16 %v1238, %v1230
        %v1567 = vpack.c.bf16 %v1239, %v1231
        %v1568 = vpack.c.bf16 %v1240, %v1232
        %v1569 = vpack.c.bf16 %v1241, %v1233
        %v1570 = vpack.c.bf16 %v1250, %v1242
        %v1571 = vpack.c.bf16 %v1251, %v1243
        %v1572 = vpack.c.bf16 %v1252, %v1244
        %v1573 = vpack.c.bf16 %v1253, %v1245
        %v1574 = vpack.c.bf16 %v1254, %v1246
        %v1575 = vpack.c.bf16 %v1255, %v1247
        %v1576 = vpack.c.bf16 %v1256, %v1248
        %v1577 = vpack.c.bf16 %v1257, %v1249
        %v1578 = vpack.c.bf16 %v1266, %v1258
        %v1579 = vpack.c.bf16 %v1267, %v1259
        %v1580 = vpack.c.bf16 %v1268, %v1260
        %v1581 = vpack.c.bf16 %v1269, %v1261
        %v1582 = vpack.c.bf16 %v1270, %v1262
        %v1583 = vpack.c.bf16 %v1271, %v1263
        %v1584 = vpack.c.bf16 %v1272, %v1264
        %v1585 = vpack.c.bf16 %v1273, %v1265
        %v1586 = vpack.c.bf16 %v1282, %v1274
        %v1587 = vpack.c.bf16 %v1283, %v1275
        %v1588 = vpack.c.bf16 %v1284, %v1276
        %v1589 = vpack.c.bf16 %v1285, %v1277
        %v1590 = vpack.c.bf16 %v1286, %v1278
        %v1591 = vpack.c.bf16 %v1287, %v1279
        %v1592 = vpack.c.bf16 %v1288, %v1280
        %v1593 = vpack.c.bf16 %v1289, %v1281
        %v1594 = vpack.c.bf16 %v1298, %v1290
        %v1595 = vpack.c.bf16 %v1299, %v1291
        %v1596 = vpack.c.bf16 %v1300, %v1292
        %v1597 = vpack.c.bf16 %v1301, %v1293
        %v1598 = vpack.c.bf16 %v1302, %v1294
        %v1599 = vpack.c.bf16 %v1303, %v1295
        %v1600 = vpack.c.bf16 %v1304, %v1296
        %v1601 = vpack.c.bf16 %v1305, %v1297
        %v1602 = vpack.c.bf16 %v1314, %v1306
        %v1603 = vpack.c.bf16 %v1315, %v1307
        %v1604 = vpack.c.bf16 %v1316, %v1308
        %v1605 = vpack.c.bf16 %v1317, %v1309
        %v1606 = vpack.c.bf16 %v1318, %v1310
        %v1607 = vpack.c.bf16 %v1319, %v1311
        %v1608 = vpack.c.bf16 %v1320, %v1312
        %v1609 = vpack.c.bf16 %v1321, %v1313
        %v1610 = vpack.c.bf16 %v1330, %v1322
        %v1611 = vpack.c.bf16 %v1331, %v1323
        %v1612 = vpack.c.bf16 %v1332, %v1324
        %v1613 = vpack.c.bf16 %v1333, %v1325
        %v1614 = vpack.c.bf16 %v1334, %v1326
        %v1615 = vpack.c.bf16 %v1335, %v1327
        %v1616 = vpack.c.bf16 %v1336, %v1328
        %v1617 = vpack.c.bf16 %v1337, %v1329
        %v1618 = vpack.c.bf16 %v1346, %v1338
        %v1619 = vpack.c.bf16 %v1347, %v1339
        %v1620 = vpack.c.bf16 %v1348, %v1340
        %v1621 = vpack.c.bf16 %v1349, %v1341
        %v1622 = vpack.c.bf16 %v1350, %v1342
        %v1623 = vpack.c.bf16 %v1351, %v1343
        %v1624 = vpack.c.bf16 %v1352, %v1344
        %v1625 = vpack.c.bf16 %v1353, %v1345
        %v1626 = vpack.c.bf16 %v1362, %v1354
        %v1627 = vpack.c.bf16 %v1363, %v1355
        %v1628 = vpack.c.bf16 %v1364, %v1356
        %v1629 = vpack.c.bf16 %v1365, %v1357
        %v1630 = vpack.c.bf16 %v1366, %v1358
        %v1631 = vpack.c.bf16 %v1367, %v1359
        %v1632 = vpack.c.bf16 %v1368, %v1360
        %v1633 = vpack.c.bf16 %v1369, %v1361
        %v1634 = vpack.c.bf16 %v1378, %v1370
        %v1635 = vpack.c.bf16 %v1379, %v1371
        %v1636 = vpack.c.bf16 %v1380, %v1372
        %v1637 = vpack.c.bf16 %v1381, %v1373
        %v1638 = vpack.c.bf16 %v1382, %v1374
        %v1639 = vpack.c.bf16 %v1383, %v1375
        %v1640 = vpack.c.bf16 %v1384, %v1376
        %v1641 = vpack.c.bf16 %v1385, %v1377
        %v1642 = vld [vmem:[%s257] sm:$0xff]
        %v1643 = vld [vmem:[%s257 + $0x8] sm:$0xff]
        %v1644 = vld [vmem:[%s257 + $0x10] sm:$0xff]
        %v1645 = vld [vmem:[%s257 + $0x18] sm:$0xff]
        %v1646 = vld [vmem:[%s257 + $0x20] sm:$0xff]
        %v1647 = vld [vmem:[%s257 + $0x28] sm:$0xff]
        %v1648 = vld [vmem:[%s257 + $0x30] sm:$0xff]
        %v1649 = vld [vmem:[%s257 + $0x38] sm:$0xff]
        %v1650 = vld [vmem:[%s257 + $0x40] sm:$0xff]
        %v1651 = vld [vmem:[%s257 + $0x48] sm:$0xff]
        %v1652 = vld [vmem:[%s257 + $0x50] sm:$0xff]
        %v1653 = vld [vmem:[%s257 + $0x58] sm:$0xff]
        %v1654 = vld [vmem:[%s257 + $0x60] sm:$0xff]
        %v1655 = vld [vmem:[%s257 + $0x68] sm:$0xff]
        %v1656 = vld [vmem:[%s257 + $0x70] sm:$0xff]
        %v1657 = vld [vmem:[%s257 + $0x78] sm:$0xff]
        %v1658 = vld [vmem:[%s257 + $0x80] sm:$0xff]
        %v1659 = vld [vmem:[%s257 + $0x88] sm:$0xff]
        %v1660 = vld [vmem:[%s257 + $0x90] sm:$0xff]
        %v1661 = vld [vmem:[%s257 + $0x98] sm:$0xff]
        %v1662 = vld [vmem:[%s257 + $0xa0] sm:$0xff]
        %v1663 = vld [vmem:[%s257 + $0xa8] sm:$0xff]
        %v1664 = vld [vmem:[%s257 + $0xb0] sm:$0xff]
        %v1665 = vld [vmem:[%s257 + $0xb8] sm:$0xff]
        %v1666 = vld [vmem:[%s257 + $0xc0] sm:$0xff]
        %v1667 = vld [vmem:[%s257 + $0xc8] sm:$0xff]
        %v1668 = vld [vmem:[%s257 + $0xd0] sm:$0xff]
        %v1669 = vld [vmem:[%s257 + $0xd8] sm:$0xff]
        %v1670 = vld [vmem:[%s257 + $0xe0] sm:$0xff]
        %v1671 = vld [vmem:[%s257 + $0xe8] sm:$0xff]
        %v1672 = vld [vmem:[%s257 + $0xf0] sm:$0xff]
        %v1673 = vld [vmem:[%s257 + $0xf8] sm:$0xff]
        %v1674 = vld [vmem:[%s257 + $0x100] sm:$0xff]
        %v1675 = vld [vmem:[%s257 + $0x108] sm:$0xff]
        %v1676 = vld [vmem:[%s257 + $0x110] sm:$0xff]
        %v1677 = vld [vmem:[%s257 + $0x118] sm:$0xff]
        %v1678 = vld [vmem:[%s257 + $0x120] sm:$0xff]
        %v1679 = vld [vmem:[%s257 + $0x128] sm:$0xff]
        %v1680 = vld [vmem:[%s257 + $0x130] sm:$0xff]
        %v1681 = vld [vmem:[%s257 + $0x138] sm:$0xff]
        %v1682 = vld [vmem:[%s257 + $0x140] sm:$0xff]
        %v1683 = vld [vmem:[%s257 + $0x148] sm:$0xff]
        %v1684 = vld [vmem:[%s257 + $0x150] sm:$0xff]
        %v1685 = vld [vmem:[%s257 + $0x158] sm:$0xff]
        %v1686 = vld [vmem:[%s257 + $0x160] sm:$0xff]
        %v1687 = vld [vmem:[%s257 + $0x168] sm:$0xff]
        %v1688 = vld [vmem:[%s257 + $0x170] sm:$0xff]
        %v1689 = vld [vmem:[%s257 + $0x178] sm:$0xff]
        %v1690 = vld [vmem:[%s257 + $0x180] sm:$0xff]
        %v1691 = vld [vmem:[%s257 + $0x188] sm:$0xff]
        %v1692 = vld [vmem:[%s257 + $0x190] sm:$0xff]
        %v1693 = vld [vmem:[%s257 + $0x198] sm:$0xff]
        %v1694 = vld [vmem:[%s257 + $0x1a0] sm:$0xff]
        %v1695 = vld [vmem:[%s257 + $0x1a8] sm:$0xff]
        %v1696 = vld [vmem:[%s257 + $0x1b0] sm:$0xff]
        %v1697 = vld [vmem:[%s257 + $0x1b8] sm:$0xff]
        %v1698 = vld [vmem:[%s257 + $0x1c0] sm:$0xff]
        %v1699 = vld [vmem:[%s257 + $0x1c8] sm:$0xff]
        %v1700 = vld [vmem:[%s257 + $0x1d0] sm:$0xff]
        %v1701 = vld [vmem:[%s257 + $0x1d8] sm:$0xff]
        %v1702 = vld [vmem:[%s257 + $0x1e0] sm:$0xff]
        %v1703 = vld [vmem:[%s257 + $0x1e8] sm:$0xff]
        %v1704 = vld [vmem:[%s257 + $0x1f0] sm:$0xff]
        %v1705 = vld [vmem:[%s257 + $0x1f8] sm:$0xff]
        %v1706 = vld [vmem:[%s257 + $0x200] sm:$0xff]
        %v1707 = vld [vmem:[%s257 + $0x208] sm:$0xff]
        %v1708 = vld [vmem:[%s257 + $0x210] sm:$0xff]
        %v1709 = vld [vmem:[%s257 + $0x218] sm:$0xff]
        %v1710 = vld [vmem:[%s257 + $0x220] sm:$0xff]
        %v1711 = vld [vmem:[%s257 + $0x228] sm:$0xff]
        %v1712 = vld [vmem:[%s257 + $0x230] sm:$0xff]
        %v1713 = vld [vmem:[%s257 + $0x238] sm:$0xff]
        %v1714 = vld [vmem:[%s257 + $0x240] sm:$0xff]
        %v1715 = vld [vmem:[%s257 + $0x248] sm:$0xff]
        %v1716 = vld [vmem:[%s257 + $0x250] sm:$0xff]
        %v1717 = vld [vmem:[%s257 + $0x258] sm:$0xff]
        %v1718 = vld [vmem:[%s257 + $0x260] sm:$0xff]
        %v1719 = vld [vmem:[%s257 + $0x268] sm:$0xff]
        %v1720 = vld [vmem:[%s257 + $0x270] sm:$0xff]
        %v1721 = vld [vmem:[%s257 + $0x278] sm:$0xff]
        %v1722 = vld [vmem:[%s257 + $0x280] sm:$0xff]
        %v1723 = vld [vmem:[%s257 + $0x288] sm:$0xff]
        %v1724 = vld [vmem:[%s257 + $0x290] sm:$0xff]
        %v1725 = vld [vmem:[%s257 + $0x298] sm:$0xff]
        %v1726 = vld [vmem:[%s257 + $0x2a0] sm:$0xff]
        %v1727 = vld [vmem:[%s257 + $0x2a8] sm:$0xff]
        %v1728 = vld [vmem:[%s257 + $0x2b0] sm:$0xff]
        %v1729 = vld [vmem:[%s257 + $0x2b8] sm:$0xff]
        %v1730 = vld [vmem:[%s257 + $0x2c0] sm:$0xff]
        %v1731 = vld [vmem:[%s257 + $0x2c8] sm:$0xff]
        %v1732 = vld [vmem:[%s257 + $0x2d0] sm:$0xff]
        %v1733 = vld [vmem:[%s257 + $0x2d8] sm:$0xff]
        %v1734 = vld [vmem:[%s257 + $0x2e0] sm:$0xff]
        %v1735 = vld [vmem:[%s257 + $0x2e8] sm:$0xff]
        %v1736 = vld [vmem:[%s257 + $0x2f0] sm:$0xff]
        %v1737 = vld [vmem:[%s257 + $0x2f8] sm:$0xff]
        %v1738 = vld [vmem:[%s257 + $0x300] sm:$0xff]
        %v1739 = vld [vmem:[%s257 + $0x308] sm:$0xff]
        %v1740 = vld [vmem:[%s257 + $0x310] sm:$0xff]
        %v1741 = vld [vmem:[%s257 + $0x318] sm:$0xff]
        %v1742 = vld [vmem:[%s257 + $0x320] sm:$0xff]
        %v1743 = vld [vmem:[%s257 + $0x328] sm:$0xff]
        %v1744 = vld [vmem:[%s257 + $0x330] sm:$0xff]
        %v1745 = vld [vmem:[%s257 + $0x338] sm:$0xff]
        %v1746 = vld [vmem:[%s257 + $0x340] sm:$0xff]
        %v1747 = vld [vmem:[%s257 + $0x348] sm:$0xff]
        %v1748 = vld [vmem:[%s257 + $0x350] sm:$0xff]
        %v1749 = vld [vmem:[%s257 + $0x358] sm:$0xff]
        %v1750 = vld [vmem:[%s257 + $0x360] sm:$0xff]
        %v1751 = vld [vmem:[%s257 + $0x368] sm:$0xff]
        %v1752 = vld [vmem:[%s257 + $0x370] sm:$0xff]
        %v1753 = vld [vmem:[%s257 + $0x378] sm:$0xff]
        %v1754 = vld [vmem:[%s257 + $0x380] sm:$0xff]
        %v1755 = vld [vmem:[%s257 + $0x388] sm:$0xff]
        %v1756 = vld [vmem:[%s257 + $0x390] sm:$0xff]
        %v1757 = vld [vmem:[%s257 + $0x398] sm:$0xff]
        %v1758 = vld [vmem:[%s257 + $0x3a0] sm:$0xff]
        %v1759 = vld [vmem:[%s257 + $0x3a8] sm:$0xff]
        %v1760 = vld [vmem:[%s257 + $0x3b0] sm:$0xff]
        %v1761 = vld [vmem:[%s257 + $0x3b8] sm:$0xff]
        %v1762 = vld [vmem:[%s257 + $0x3c0] sm:$0xff]
        %v1763 = vld [vmem:[%s257 + $0x3c8] sm:$0xff]
        %v1764 = vld [vmem:[%s257 + $0x3d0] sm:$0xff]
        %v1765 = vld [vmem:[%s257 + $0x3d8] sm:$0xff]
        %v1766 = vld [vmem:[%s257 + $0x3e0] sm:$0xff]
        %v1767 = vld [vmem:[%s257 + $0x3e8] sm:$0xff]
        %v1768 = vld [vmem:[%s257 + $0x3f0] sm:$0xff]
        %v1769 = vld [vmem:[%s257 + $0x3f8] sm:$0xff]
        %v1770 = vld [vmem:[%s257 + $0x400] sm:$0xff]
        %v1771 = vld [vmem:[%s257 + $0x408] sm:$0xff]
        %v1772 = vld [vmem:[%s257 + $0x410] sm:$0xff]
        %v1773 = vld [vmem:[%s257 + $0x418] sm:$0xff]
        %v1774 = vld [vmem:[%s257 + $0x420] sm:$0xff]
        %v1775 = vld [vmem:[%s257 + $0x428] sm:$0xff]
        %v1776 = vld [vmem:[%s257 + $0x430] sm:$0xff]
        %v1777 = vld [vmem:[%s257 + $0x438] sm:$0xff]
        %v1778 = vld [vmem:[%s257 + $0x440] sm:$0xff]
        %v1779 = vld [vmem:[%s257 + $0x448] sm:$0xff]
        %v1780 = vld [vmem:[%s257 + $0x450] sm:$0xff]
        %v1781 = vld [vmem:[%s257 + $0x458] sm:$0xff]
        %v1782 = vld [vmem:[%s257 + $0x460] sm:$0xff]
        %v1783 = vld [vmem:[%s257 + $0x468] sm:$0xff]
        %v1784 = vld [vmem:[%s257 + $0x470] sm:$0xff]
        %v1785 = vld [vmem:[%s257 + $0x478] sm:$0xff]
        %v1786 = vld [vmem:[%s257 + $0x480] sm:$0xff]
        %v1787 = vld [vmem:[%s257 + $0x488] sm:$0xff]
        %v1788 = vld [vmem:[%s257 + $0x490] sm:$0xff]
        %v1789 = vld [vmem:[%s257 + $0x498] sm:$0xff]
        %v1790 = vld [vmem:[%s257 + $0x4a0] sm:$0xff]
        %v1791 = vld [vmem:[%s257 + $0x4a8] sm:$0xff]
        %v1792 = vld [vmem:[%s257 + $0x4b0] sm:$0xff]
        %v1793 = vld [vmem:[%s257 + $0x4b8] sm:$0xff]
        %v1794 = vld [vmem:[%s257 + $0x4c0] sm:$0xff]
        %v1795 = vld [vmem:[%s257 + $0x4c8] sm:$0xff]
        %v1796 = vld [vmem:[%s257 + $0x4d0] sm:$0xff]
        %v1797 = vld [vmem:[%s257 + $0x4d8] sm:$0xff]
        %v1798 = vld [vmem:[%s257 + $0x4e0] sm:$0xff]
        %v1799 = vld [vmem:[%s257 + $0x4e8] sm:$0xff]
        %v1800 = vld [vmem:[%s257 + $0x4f0] sm:$0xff]
        %v1801 = vld [vmem:[%s257 + $0x4f8] sm:$0xff]
        %v1802 = vld [vmem:[%s257 + $0x500] sm:$0xff]
        %v1803 = vld [vmem:[%s257 + $0x508] sm:$0xff]
        %v1804 = vld [vmem:[%s257 + $0x510] sm:$0xff]
        %v1805 = vld [vmem:[%s257 + $0x518] sm:$0xff]
        %v1806 = vld [vmem:[%s257 + $0x520] sm:$0xff]
        %v1807 = vld [vmem:[%s257 + $0x528] sm:$0xff]
        %v1808 = vld [vmem:[%s257 + $0x530] sm:$0xff]
        %v1809 = vld [vmem:[%s257 + $0x538] sm:$0xff]
        %v1810 = vld [vmem:[%s257 + $0x540] sm:$0xff]
        %v1811 = vld [vmem:[%s257 + $0x548] sm:$0xff]
        %v1812 = vld [vmem:[%s257 + $0x550] sm:$0xff]
        %v1813 = vld [vmem:[%s257 + $0x558] sm:$0xff]
        %v1814 = vld [vmem:[%s257 + $0x560] sm:$0xff]
        %v1815 = vld [vmem:[%s257 + $0x568] sm:$0xff]
        %v1816 = vld [vmem:[%s257 + $0x570] sm:$0xff]
        %v1817 = vld [vmem:[%s257 + $0x578] sm:$0xff]
        %v1818 = vld [vmem:[%s257 + $0x580] sm:$0xff]
        %v1819 = vld [vmem:[%s257 + $0x588] sm:$0xff]
        %v1820 = vld [vmem:[%s257 + $0x590] sm:$0xff]
        %v1821 = vld [vmem:[%s257 + $0x598] sm:$0xff]
        %v1822 = vld [vmem:[%s257 + $0x5a0] sm:$0xff]
        %v1823 = vld [vmem:[%s257 + $0x5a8] sm:$0xff]
        %v1824 = vld [vmem:[%s257 + $0x5b0] sm:$0xff]
        %v1825 = vld [vmem:[%s257 + $0x5b8] sm:$0xff]
        %v1826 = vld [vmem:[%s257 + $0x5c0] sm:$0xff]
        %v1827 = vld [vmem:[%s257 + $0x5c8] sm:$0xff]
        %v1828 = vld [vmem:[%s257 + $0x5d0] sm:$0xff]
        %v1829 = vld [vmem:[%s257 + $0x5d8] sm:$0xff]
        %v1830 = vld [vmem:[%s257 + $0x5e0] sm:$0xff]
        %v1831 = vld [vmem:[%s257 + $0x5e8] sm:$0xff]
        %v1832 = vld [vmem:[%s257 + $0x5f0] sm:$0xff]
        %v1833 = vld [vmem:[%s257 + $0x5f8] sm:$0xff]
        %v1834 = vld [vmem:[%s257 + $0x600] sm:$0xff]
        %v1835 = vld [vmem:[%s257 + $0x608] sm:$0xff]
        %v1836 = vld [vmem:[%s257 + $0x610] sm:$0xff]
        %v1837 = vld [vmem:[%s257 + $0x618] sm:$0xff]
        %v1838 = vld [vmem:[%s257 + $0x620] sm:$0xff]
        %v1839 = vld [vmem:[%s257 + $0x628] sm:$0xff]
        %v1840 = vld [vmem:[%s257 + $0x630] sm:$0xff]
        %v1841 = vld [vmem:[%s257 + $0x638] sm:$0xff]
        %v1842 = vld [vmem:[%s257 + $0x640] sm:$0xff]
        %v1843 = vld [vmem:[%s257 + $0x648] sm:$0xff]
        %v1844 = vld [vmem:[%s257 + $0x650] sm:$0xff]
        %v1845 = vld [vmem:[%s257 + $0x658] sm:$0xff]
        %v1846 = vld [vmem:[%s257 + $0x660] sm:$0xff]
        %v1847 = vld [vmem:[%s257 + $0x668] sm:$0xff]
        %v1848 = vld [vmem:[%s257 + $0x670] sm:$0xff]
        %v1849 = vld [vmem:[%s257 + $0x678] sm:$0xff]
        %v1850 = vld [vmem:[%s257 + $0x680] sm:$0xff]
        %v1851 = vld [vmem:[%s257 + $0x688] sm:$0xff]
        %v1852 = vld [vmem:[%s257 + $0x690] sm:$0xff]
        %v1853 = vld [vmem:[%s257 + $0x698] sm:$0xff]
        %v1854 = vld [vmem:[%s257 + $0x6a0] sm:$0xff]
        %v1855 = vld [vmem:[%s257 + $0x6a8] sm:$0xff]
        %v1856 = vld [vmem:[%s257 + $0x6b0] sm:$0xff]
        %v1857 = vld [vmem:[%s257 + $0x6b8] sm:$0xff]
        %v1858 = vld [vmem:[%s257 + $0x6c0] sm:$0xff]
        %v1859 = vld [vmem:[%s257 + $0x6c8] sm:$0xff]
        %v1860 = vld [vmem:[%s257 + $0x6d0] sm:$0xff]
        %v1861 = vld [vmem:[%s257 + $0x6d8] sm:$0xff]
        %v1862 = vld [vmem:[%s257 + $0x6e0] sm:$0xff]
        %v1863 = vld [vmem:[%s257 + $0x6e8] sm:$0xff]
        %v1864 = vld [vmem:[%s257 + $0x6f0] sm:$0xff]
        %v1865 = vld [vmem:[%s257 + $0x6f8] sm:$0xff]
        %v1866 = vld [vmem:[%s257 + $0x700] sm:$0xff]
        %v1867 = vld [vmem:[%s257 + $0x708] sm:$0xff]
        %v1868 = vld [vmem:[%s257 + $0x710] sm:$0xff]
        %v1869 = vld [vmem:[%s257 + $0x718] sm:$0xff]
        %v1870 = vld [vmem:[%s257 + $0x720] sm:$0xff]
        %v1871 = vld [vmem:[%s257 + $0x728] sm:$0xff]
        %v1872 = vld [vmem:[%s257 + $0x730] sm:$0xff]
        %v1873 = vld [vmem:[%s257 + $0x738] sm:$0xff]
        %v1874 = vld [vmem:[%s257 + $0x740] sm:$0xff]
        %v1875 = vld [vmem:[%s257 + $0x748] sm:$0xff]
        %v1876 = vld [vmem:[%s257 + $0x750] sm:$0xff]
        %v1877 = vld [vmem:[%s257 + $0x758] sm:$0xff]
        %v1878 = vld [vmem:[%s257 + $0x760] sm:$0xff]
        %v1879 = vld [vmem:[%s257 + $0x768] sm:$0xff]
        %v1880 = vld [vmem:[%s257 + $0x770] sm:$0xff]
        %v1881 = vld [vmem:[%s257 + $0x778] sm:$0xff]
        %v1882 = vld [vmem:[%s257 + $0x780] sm:$0xff]
        %v1883 = vld [vmem:[%s257 + $0x788] sm:$0xff]
        %v1884 = vld [vmem:[%s257 + $0x790] sm:$0xff]
        %v1885 = vld [vmem:[%s257 + $0x798] sm:$0xff]
        %v1886 = vld [vmem:[%s257 + $0x7a0] sm:$0xff]
        %v1887 = vld [vmem:[%s257 + $0x7a8] sm:$0xff]
        %v1888 = vld [vmem:[%s257 + $0x7b0] sm:$0xff]
        %v1889 = vld [vmem:[%s257 + $0x7b8] sm:$0xff]
        %v1890 = vld [vmem:[%s257 + $0x7c0] sm:$0xff]
        %v1891 = vld [vmem:[%s257 + $0x7c8] sm:$0xff]
        %v1892 = vld [vmem:[%s257 + $0x7d0] sm:$0xff]
        %v1893 = vld [vmem:[%s257 + $0x7d8] sm:$0xff]
        %v1894 = vld [vmem:[%s257 + $0x7e0] sm:$0xff]
        %v1895 = vld [vmem:[%s257 + $0x7e8] sm:$0xff]
        %v1896 = vld [vmem:[%s257 + $0x7f0] sm:$0xff]
        %v1897 = vld [vmem:[%s257 + $0x7f8] sm:$0xff]
        %v1898 = vld [vmem:[%s257 + $0x800] sm:$0xff]
        %v1899 = vld [vmem:[%s257 + $0x808] sm:$0xff]
        %v1900 = vld [vmem:[%s257 + $0x810] sm:$0xff]
        %v1901 = vld [vmem:[%s257 + $0x818] sm:$0xff]
        %v1902 = vld [vmem:[%s257 + $0x820] sm:$0xff]
        %v1903 = vld [vmem:[%s257 + $0x828] sm:$0xff]
        %v1904 = vld [vmem:[%s257 + $0x830] sm:$0xff]
        %v1905 = vld [vmem:[%s257 + $0x838] sm:$0xff]
        %v1906 = vld [vmem:[%s257 + $0x840] sm:$0xff]
        %v1907 = vld [vmem:[%s257 + $0x848] sm:$0xff]
        %v1908 = vld [vmem:[%s257 + $0x850] sm:$0xff]
        %v1909 = vld [vmem:[%s257 + $0x858] sm:$0xff]
        %v1910 = vld [vmem:[%s257 + $0x860] sm:$0xff]
        %v1911 = vld [vmem:[%s257 + $0x868] sm:$0xff]
        %v1912 = vld [vmem:[%s257 + $0x870] sm:$0xff]
        %v1913 = vld [vmem:[%s257 + $0x878] sm:$0xff]
        %v1914 = vld [vmem:[%s257 + $0x880] sm:$0xff]
        %v1915 = vld [vmem:[%s257 + $0x888] sm:$0xff]
        %v1916 = vld [vmem:[%s257 + $0x890] sm:$0xff]
        %v1917 = vld [vmem:[%s257 + $0x898] sm:$0xff]
        %v1918 = vld [vmem:[%s257 + $0x8a0] sm:$0xff]
        %v1919 = vld [vmem:[%s257 + $0x8a8] sm:$0xff]
        %v1920 = vld [vmem:[%s257 + $0x8b0] sm:$0xff]
        %v1921 = vld [vmem:[%s257 + $0x8b8] sm:$0xff]
        %v1922 = vld [vmem:[%s257 + $0x8c0] sm:$0xff]
        %v1923 = vld [vmem:[%s257 + $0x8c8] sm:$0xff]
        %v1924 = vld [vmem:[%s257 + $0x8d0] sm:$0xff]
        %v1925 = vld [vmem:[%s257 + $0x8d8] sm:$0xff]
        %v1926 = vld [vmem:[%s257 + $0x8e0] sm:$0xff]
        %v1927 = vld [vmem:[%s257 + $0x8e8] sm:$0xff]
        %v1928 = vld [vmem:[%s257 + $0x8f0] sm:$0xff]
        %v1929 = vld [vmem:[%s257 + $0x8f8] sm:$0xff]
        %v1930 = vld [vmem:[%s257 + $0x900] sm:$0xff]
        %v1931 = vld [vmem:[%s257 + $0x908] sm:$0xff]
        %v1932 = vld [vmem:[%s257 + $0x910] sm:$0xff]
        %v1933 = vld [vmem:[%s257 + $0x918] sm:$0xff]
        %v1934 = vld [vmem:[%s257 + $0x920] sm:$0xff]
        %v1935 = vld [vmem:[%s257 + $0x928] sm:$0xff]
        %v1936 = vld [vmem:[%s257 + $0x930] sm:$0xff]
        %v1937 = vld [vmem:[%s257 + $0x938] sm:$0xff]
        %v1938 = vld [vmem:[%s257 + $0x940] sm:$0xff]
        %v1939 = vld [vmem:[%s257 + $0x948] sm:$0xff]
        %v1940 = vld [vmem:[%s257 + $0x950] sm:$0xff]
        %v1941 = vld [vmem:[%s257 + $0x958] sm:$0xff]
        %v1942 = vld [vmem:[%s257 + $0x960] sm:$0xff]
        %v1943 = vld [vmem:[%s257 + $0x968] sm:$0xff]
        %v1944 = vld [vmem:[%s257 + $0x970] sm:$0xff]
        %v1945 = vld [vmem:[%s257 + $0x978] sm:$0xff]
        %v1946 = vld [vmem:[%s257 + $0x980] sm:$0xff]
        %v1947 = vld [vmem:[%s257 + $0x988] sm:$0xff]
        %v1948 = vld [vmem:[%s257 + $0x990] sm:$0xff]
        %v1949 = vld [vmem:[%s257 + $0x998] sm:$0xff]
        %v1950 = vld [vmem:[%s257 + $0x9a0] sm:$0xff]
        %v1951 = vld [vmem:[%s257 + $0x9a8] sm:$0xff]
        %v1952 = vld [vmem:[%s257 + $0x9b0] sm:$0xff]
        %v1953 = vld [vmem:[%s257 + $0x9b8] sm:$0xff]
        %v1954 = vld [vmem:[%s257 + $0x9c0] sm:$0xff]
        %v1955 = vld [vmem:[%s257 + $0x9c8] sm:$0xff]
        %v1956 = vld [vmem:[%s257 + $0x9d0] sm:$0xff]
        %v1957 = vld [vmem:[%s257 + $0x9d8] sm:$0xff]
        %v1958 = vld [vmem:[%s257 + $0x9e0] sm:$0xff]
        %v1959 = vld [vmem:[%s257 + $0x9e8] sm:$0xff]
        %v1960 = vld [vmem:[%s257 + $0x9f0] sm:$0xff]
        %v1961 = vld [vmem:[%s257 + $0x9f8] sm:$0xff]
        %v1962 = vld [vmem:[%s257 + $0xa00] sm:$0xff]
        %v1963 = vld [vmem:[%s257 + $0xa08] sm:$0xff]
        %v1964 = vld [vmem:[%s257 + $0xa10] sm:$0xff]
        %v1965 = vld [vmem:[%s257 + $0xa18] sm:$0xff]
        %v1966 = vld [vmem:[%s257 + $0xa20] sm:$0xff]
        %v1967 = vld [vmem:[%s257 + $0xa28] sm:$0xff]
        %v1968 = vld [vmem:[%s257 + $0xa30] sm:$0xff]
        %v1969 = vld [vmem:[%s257 + $0xa38] sm:$0xff]
        %v1970 = vld [vmem:[%s257 + $0xa40] sm:$0xff]
        %v1971 = vld [vmem:[%s257 + $0xa48] sm:$0xff]
        %v1972 = vld [vmem:[%s257 + $0xa50] sm:$0xff]
        %v1973 = vld [vmem:[%s257 + $0xa58] sm:$0xff]
        %v1974 = vld [vmem:[%s257 + $0xa60] sm:$0xff]
        %v1975 = vld [vmem:[%s257 + $0xa68] sm:$0xff]
        %v1976 = vld [vmem:[%s257 + $0xa70] sm:$0xff]
        %v1977 = vld [vmem:[%s257 + $0xa78] sm:$0xff]
        %v1978 = vld [vmem:[%s257 + $0xa80] sm:$0xff]
        %v1979 = vld [vmem:[%s257 + $0xa88] sm:$0xff]
        %v1980 = vld [vmem:[%s257 + $0xa90] sm:$0xff]
        %v1981 = vld [vmem:[%s257 + $0xa98] sm:$0xff]
        %v1982 = vld [vmem:[%s257 + $0xaa0] sm:$0xff]
        %v1983 = vld [vmem:[%s257 + $0xaa8] sm:$0xff]
        %v1984 = vld [vmem:[%s257 + $0xab0] sm:$0xff]
        %v1985 = vld [vmem:[%s257 + $0xab8] sm:$0xff]
        %v1986 = vld [vmem:[%s257 + $0xac0] sm:$0xff]
        %v1987 = vld [vmem:[%s257 + $0xac8] sm:$0xff]
        %v1988 = vld [vmem:[%s257 + $0xad0] sm:$0xff]
        %v1989 = vld [vmem:[%s257 + $0xad8] sm:$0xff]
        %v1990 = vld [vmem:[%s257 + $0xae0] sm:$0xff]
        %v1991 = vld [vmem:[%s257 + $0xae8] sm:$0xff]
        %v1992 = vld [vmem:[%s257 + $0xaf0] sm:$0xff]
        %v1993 = vld [vmem:[%s257 + $0xaf8] sm:$0xff]
        %v1994 = vld [vmem:[%s257 + $0xb00] sm:$0xff]
        %v1995 = vld [vmem:[%s257 + $0xb08] sm:$0xff]
        %v1996 = vld [vmem:[%s257 + $0xb10] sm:$0xff]
        %v1997 = vld [vmem:[%s257 + $0xb18] sm:$0xff]
        %v1998 = vld [vmem:[%s257 + $0xb20] sm:$0xff]
        %v1999 = vld [vmem:[%s257 + $0xb28] sm:$0xff]
        %v2000 = vld [vmem:[%s257 + $0xb30] sm:$0xff]
        %v2001 = vld [vmem:[%s257 + $0xb38] sm:$0xff]
        %v2002 = vld [vmem:[%s257 + $0xb40] sm:$0xff]
        %v2003 = vld [vmem:[%s257 + $0xb48] sm:$0xff]
        %v2004 = vld [vmem:[%s257 + $0xb50] sm:$0xff]
        %v2005 = vld [vmem:[%s257 + $0xb58] sm:$0xff]
        %v2006 = vld [vmem:[%s257 + $0xb60] sm:$0xff]
        %v2007 = vld [vmem:[%s257 + $0xb68] sm:$0xff]
        %v2008 = vld [vmem:[%s257 + $0xb70] sm:$0xff]
        %v2009 = vld [vmem:[%s257 + $0xb78] sm:$0xff]
        %v2010 = vld [vmem:[%s257 + $0xb80] sm:$0xff]
        %v2011 = vld [vmem:[%s257 + $0xb88] sm:$0xff]
        %v2012 = vld [vmem:[%s257 + $0xb90] sm:$0xff]
        %v2013 = vld [vmem:[%s257 + $0xb98] sm:$0xff]
        %v2014 = vld [vmem:[%s257 + $0xba0] sm:$0xff]
        %v2015 = vld [vmem:[%s257 + $0xba8] sm:$0xff]
        %v2016 = vld [vmem:[%s257 + $0xbb0] sm:$0xff]
        %v2017 = vld [vmem:[%s257 + $0xbb8] sm:$0xff]
        %v2018 = vld [vmem:[%s257 + $0xbc0] sm:$0xff]
        %v2019 = vld [vmem:[%s257 + $0xbc8] sm:$0xff]
        %v2020 = vld [vmem:[%s257 + $0xbd0] sm:$0xff]
        %v2021 = vld [vmem:[%s257 + $0xbd8] sm:$0xff]
        %v2022 = vld [vmem:[%s257 + $0xbe0] sm:$0xff]
        %v2023 = vld [vmem:[%s257 + $0xbe8] sm:$0xff]
        %v2024 = vld [vmem:[%s257 + $0xbf0] sm:$0xff]
        %v2025 = vld [vmem:[%s257 + $0xbf8] sm:$0xff]
        %v2026 = vpack.c.bf16 %v1645, %v1642
        %v2027 = vpack.c.bf16 %v1646, %v1643
        %v2028 = vpack.c.bf16 %v1647, %v1644
        %v2029 = vpack.c.bf16 %v1651, %v1648
        %v2030 = vpack.c.bf16 %v1652, %v1649
        %v2031 = vpack.c.bf16 %v1653, %v1650
        %v2032 = vpack.c.bf16 %v1657, %v1654
        %v2033 = vpack.c.bf16 %v1658, %v1655
        %v2034 = vpack.c.bf16 %v1659, %v1656
        %v2035 = vpack.c.bf16 %v1663, %v1660
        %v2036 = vpack.c.bf16 %v1664, %v1661
        %v2037 = vpack.c.bf16 %v1665, %v1662
        %v2038 = vpack.c.bf16 %v1669, %v1666
        %v2039 = vpack.c.bf16 %v1670, %v1667
        %v2040 = vpack.c.bf16 %v1671, %v1668
        %v2041 = vpack.c.bf16 %v1675, %v1672
        %v2042 = vpack.c.bf16 %v1676, %v1673
        %v2043 = vpack.c.bf16 %v1677, %v1674
        %v2044 = vpack.c.bf16 %v1681, %v1678
        %v2045 = vpack.c.bf16 %v1682, %v1679
        %v2046 = vpack.c.bf16 %v1683, %v1680
        %v2047 = vpack.c.bf16 %v1687, %v1684
        %v2048 = vpack.c.bf16 %v1688, %v1685
        %v2049 = vpack.c.bf16 %v1689, %v1686
        %v2050 = vpack.c.bf16 %v1693, %v1690
        %v2051 = vpack.c.bf16 %v1694, %v1691
        %v2052 = vpack.c.bf16 %v1695, %v1692
        %v2053 = vpack.c.bf16 %v1699, %v1696
        %v2054 = vpack.c.bf16 %v1700, %v1697
        %v2055 = vpack.c.bf16 %v1701, %v1698
        %v2056 = vpack.c.bf16 %v1705, %v1702
        %v2057 = vpack.c.bf16 %v1706, %v1703
        %v2058 = vpack.c.bf16 %v1707, %v1704
        %v2059 = vpack.c.bf16 %v1711, %v1708
        %v2060 = vpack.c.bf16 %v1712, %v1709
        %v2061 = vpack.c.bf16 %v1713, %v1710
        %v2062 = vpack.c.bf16 %v1717, %v1714
        %v2063 = vpack.c.bf16 %v1718, %v1715
        %v2064 = vpack.c.bf16 %v1719, %v1716
        %v2065 = vpack.c.bf16 %v1723, %v1720
        %v2066 = vpack.c.bf16 %v1724, %v1721
        %v2067 = vpack.c.bf16 %v1725, %v1722
        %v2068 = vpack.c.bf16 %v1729, %v1726
        %v2069 = vpack.c.bf16 %v1730, %v1727
        %v2070 = vpack.c.bf16 %v1731, %v1728
        %v2071 = vpack.c.bf16 %v1735, %v1732
        %v2072 = vpack.c.bf16 %v1736, %v1733
        %v2073 = vpack.c.bf16 %v1737, %v1734
        %v2074 = vpack.c.bf16 %v1741, %v1738
        %v2075 = vpack.c.bf16 %v1742, %v1739
        %v2076 = vpack.c.bf16 %v1743, %v1740
        %v2077 = vpack.c.bf16 %v1747, %v1744
        %v2078 = vpack.c.bf16 %v1748, %v1745
        %v2079 = vpack.c.bf16 %v1749, %v1746
        %v2080 = vpack.c.bf16 %v1753, %v1750
        %v2081 = vpack.c.bf16 %v1754, %v1751
        %v2082 = vpack.c.bf16 %v1755, %v1752
        %v2083 = vpack.c.bf16 %v1759, %v1756
        %v2084 = vpack.c.bf16 %v1760, %v1757
        %v2085 = vpack.c.bf16 %v1761, %v1758
        %v2086 = vpack.c.bf16 %v1765, %v1762
        %v2087 = vpack.c.bf16 %v1766, %v1763
        %v2088 = vpack.c.bf16 %v1767, %v1764
        %v2089 = vpack.c.bf16 %v1771, %v1768
        %v2090 = vpack.c.bf16 %v1772, %v1769
        %v2091 = vpack.c.bf16 %v1773, %v1770
        %v2092 = vpack.c.bf16 %v1777, %v1774
        %v2093 = vpack.c.bf16 %v1778, %v1775
        %v2094 = vpack.c.bf16 %v1779, %v1776
        %v2095 = vpack.c.bf16 %v1783, %v1780
        %v2096 = vpack.c.bf16 %v1784, %v1781
        %v2097 = vpack.c.bf16 %v1785, %v1782
        %v2098 = vpack.c.bf16 %v1789, %v1786
        %v2099 = vpack.c.bf16 %v1790, %v1787
        %v2100 = vpack.c.bf16 %v1791, %v1788
        %v2101 = vpack.c.bf16 %v1795, %v1792
        %v2102 = vpack.c.bf16 %v1796, %v1793
        %v2103 = vpack.c.bf16 %v1797, %v1794
        %v2104 = vpack.c.bf16 %v1801, %v1798
        %v2105 = vpack.c.bf16 %v1802, %v1799
        %v2106 = vpack.c.bf16 %v1803, %v1800
        %v2107 = vpack.c.bf16 %v1807, %v1804
        %v2108 = vpack.c.bf16 %v1808, %v1805
        %v2109 = vpack.c.bf16 %v1809, %v1806
        %v2110 = vpack.c.bf16 %v1813, %v1810
        %v2111 = vpack.c.bf16 %v1814, %v1811
        %v2112 = vpack.c.bf16 %v1815, %v1812
        %v2113 = vpack.c.bf16 %v1819, %v1816
        %v2114 = vpack.c.bf16 %v1820, %v1817
        %v2115 = vpack.c.bf16 %v1821, %v1818
        %v2116 = vpack.c.bf16 %v1825, %v1822
        %v2117 = vpack.c.bf16 %v1826, %v1823
        %v2118 = vpack.c.bf16 %v1827, %v1824
        %v2119 = vpack.c.bf16 %v1831, %v1828
        %v2120 = vpack.c.bf16 %v1832, %v1829
        %v2121 = vpack.c.bf16 %v1833, %v1830
        %v2122 = vpack.c.bf16 %v1837, %v1834
        %v2123 = vpack.c.bf16 %v1838, %v1835
        %v2124 = vpack.c.bf16 %v1839, %v1836
        %v2125 = vpack.c.bf16 %v1843, %v1840
        %v2126 = vpack.c.bf16 %v1844, %v1841
        %v2127 = vpack.c.bf16 %v1845, %v1842
        %v2128 = vpack.c.bf16 %v1849, %v1846
        %v2129 = vpack.c.bf16 %v1850, %v1847
        %v2130 = vpack.c.bf16 %v1851, %v1848
        %v2131 = vpack.c.bf16 %v1855, %v1852
        %v2132 = vpack.c.bf16 %v1856, %v1853
        %v2133 = vpack.c.bf16 %v1857, %v1854
        %v2134 = vpack.c.bf16 %v1861, %v1858
        %v2135 = vpack.c.bf16 %v1862, %v1859
        %v2136 = vpack.c.bf16 %v1863, %v1860
        %v2137 = vpack.c.bf16 %v1867, %v1864
        %v2138 = vpack.c.bf16 %v1868, %v1865
        %v2139 = vpack.c.bf16 %v1869, %v1866
        %v2140 = vpack.c.bf16 %v1873, %v1870
        %v2141 = vpack.c.bf16 %v1874, %v1871
        %v2142 = vpack.c.bf16 %v1875, %v1872
        %v2143 = vpack.c.bf16 %v1879, %v1876
        %v2144 = vpack.c.bf16 %v1880, %v1877
        %v2145 = vpack.c.bf16 %v1881, %v1878
        %v2146 = vpack.c.bf16 %v1885, %v1882
        %v2147 = vpack.c.bf16 %v1886, %v1883
        %v2148 = vpack.c.bf16 %v1887, %v1884
        %v2149 = vpack.c.bf16 %v1891, %v1888
        %v2150 = vpack.c.bf16 %v1892, %v1889
        %v2151 = vpack.c.bf16 %v1893, %v1890
        %v2152 = vpack.c.bf16 %v1897, %v1894
        %v2153 = vpack.c.bf16 %v1898, %v1895
        %v2154 = vpack.c.bf16 %v1899, %v1896
        %v2155 = vpack.c.bf16 %v1903, %v1900
        %v2156 = vpack.c.bf16 %v1904, %v1901
        %v2157 = vpack.c.bf16 %v1905, %v1902
        %v2158 = vpack.c.bf16 %v1909, %v1906
        %v2159 = vpack.c.bf16 %v1910, %v1907
        %v2160 = vpack.c.bf16 %v1911, %v1908
        %v2161 = vpack.c.bf16 %v1915, %v1912
        %v2162 = vpack.c.bf16 %v1916, %v1913
        %v2163 = vpack.c.bf16 %v1917, %v1914
        %v2164 = vpack.c.bf16 %v1921, %v1918
        %v2165 = vpack.c.bf16 %v1922, %v1919
        %v2166 = vpack.c.bf16 %v1923, %v1920
        %v2167 = vpack.c.bf16 %v1927, %v1924
        %v2168 = vpack.c.bf16 %v1928, %v1925
        %v2169 = vpack.c.bf16 %v1929, %v1926
        %v2170 = vpack.c.bf16 %v1933, %v1930
        %v2171 = vpack.c.bf16 %v1934, %v1931
        %v2172 = vpack.c.bf16 %v1935, %v1932
        %v2173 = vpack.c.bf16 %v1939, %v1936
        %v2174 = vpack.c.bf16 %v1940, %v1937
        %v2175 = vpack.c.bf16 %v1941, %v1938
        %v2176 = vpack.c.bf16 %v1945, %v1942
        %v2177 = vpack.c.bf16 %v1946, %v1943
        %v2178 = vpack.c.bf16 %v1947, %v1944
        %v2179 = vpack.c.bf16 %v1951, %v1948
        %v2180 = vpack.c.bf16 %v1952, %v1949
        %v2181 = vpack.c.bf16 %v1953, %v1950
        %v2182 = vpack.c.bf16 %v1957, %v1954
        %v2183 = vpack.c.bf16 %v1958, %v1955
        %v2184 = vpack.c.bf16 %v1959, %v1956
        %v2185 = vpack.c.bf16 %v1963, %v1960
        %v2186 = vpack.c.bf16 %v1964, %v1961
        %v2187 = vpack.c.bf16 %v1965, %v1962
        %v2188 = vpack.c.bf16 %v1969, %v1966
        %v2189 = vpack.c.bf16 %v1970, %v1967
        %v2190 = vpack.c.bf16 %v1971, %v1968
        %v2191 = vpack.c.bf16 %v1975, %v1972
        %v2192 = vpack.c.bf16 %v1976, %v1973
        %v2193 = vpack.c.bf16 %v1977, %v1974
        %v2194 = vpack.c.bf16 %v1981, %v1978
        %v2195 = vpack.c.bf16 %v1982, %v1979
        %v2196 = vpack.c.bf16 %v1983, %v1980
        %v2197 = vpack.c.bf16 %v1987, %v1984
        %v2198 = vpack.c.bf16 %v1988, %v1985
        %v2199 = vpack.c.bf16 %v1989, %v1986
        %v2200 = vpack.c.bf16 %v1993, %v1990
        %v2201 = vpack.c.bf16 %v1994, %v1991
        %v2202 = vpack.c.bf16 %v1995, %v1992
        %v2203 = vpack.c.bf16 %v1999, %v1996
        %v2204 = vpack.c.bf16 %v2000, %v1997
        %v2205 = vpack.c.bf16 %v2001, %v1998
        %v2206 = vpack.c.bf16 %v2005, %v2002
        %v2207 = vpack.c.bf16 %v2006, %v2003
        %v2208 = vpack.c.bf16 %v2007, %v2004
        %v2209 = vpack.c.bf16 %v2011, %v2008
        %v2210 = vpack.c.bf16 %v2012, %v2009
        %v2211 = vpack.c.bf16 %v2013, %v2010
        %v2212 = vpack.c.bf16 %v2017, %v2014
        %v2213 = vpack.c.bf16 %v2018, %v2015
        %v2214 = vpack.c.bf16 %v2019, %v2016
        %v2215 = vpack.c.bf16 %v2023, %v2020
        %v2216 = vpack.c.bf16 %v2024, %v2021
        %v2217 = vpack.c.bf16 %v2025, %v2022
        %2218 = vmatprep.subr.bf16.mxu0 %v2048
        %2219 = vmatpush1.bf16.msra.mxu0 %v2047
        %2220 = vmatprep.subr.bf16.mxu0 %v2045
        %2221 = vmatpush1.bf16.msra.mxu0 %v2044
        %2222 = vmatprep.subr.bf16.mxu0 %v2042
        %2223 = vmatpush1.bf16.msra.mxu0 %v2041
        %2224 = vmatprep.subr.bf16.mxu0 %v2039
        %2225 = vmatpush1.bf16.msra.mxu0 %v2038
        %2226 = vmatprep.subr.bf16.mxu0 %v2036
        %2227 = vmatpush1.bf16.msra.mxu0 %v2035
        %2228 = vmatprep.subr.bf16.mxu0 %v2033
        %2229 = vmatpush1.bf16.msra.mxu0 %v2032
        %2230 = vmatprep.subr.bf16.mxu0 %v2030
        %2231 = vmatpush1.bf16.msra.mxu0 %v2029
        %2232 = vmatprep.subr.bf16.mxu0 %v2027
        %2233 = vmatpush1.bf16.msra.mxu0 %v2026
        %2234 = vmatprep.subr.bf16.mxu0 %v2072
        %2235 = vmatpush2.bf16.msra.mxu0 %v2071
        %2236 = vmatprep.subr.bf16.mxu0 %v2069
        %2237 = vmatpush2.bf16.msra.mxu0 %v2068
        %2238 = vmatprep.subr.bf16.mxu0 %v2066
        %2239 = vmatpush2.bf16.msra.mxu0 %v2065
        %2240 = vmatprep.subr.bf16.mxu0 %v2063
        %2241 = vmatpush2.bf16.msra.mxu0 %v2062
        %2242 = vmatprep.subr.bf16.mxu0 %v2060
        %2243 = vmatpush2.bf16.msra.mxu0 %v2059
        %2244 = vmatprep.subr.bf16.mxu0 %v2057
        %2245 = vmatpush2.bf16.msra.mxu0 %v2056
        %2246 = vmatprep.subr.bf16.mxu0 %v2054
        %2247 = vmatpush2.bf16.msra.mxu0 %v2053
        %2248 = vmatprep.subr.bf16.mxu0 %v2051
        %2249 = vmatpush2.bf16.msra.mxu0 %v2050
        %2250 = vmatprep.mubr.bf16.mxu0 %v1387
        %2251 = vmatmul.mubr.bf16.gmra.mxu0 %v1386
        %v2252 = vpop.f32.mrf.mxu0
        %v2253 = vadd.f32 0.0, %v2252
        %v2254 = vpop.f32.mrf.mxu0
        %v2255 = vadd.f32 0.0, %v2254
        %v2256 = vpop.f32.mrf.mxu0
        %v2257 = vadd.f32 0.0, %v2256
        %v2258 = vpop.f32.mrf.mxu0
        %v2259 = vadd.f32 0.0, %v2258
        %2260 = vmatprep.mubr.bf16.mxu0 %v1395
        %2261 = vmatmul.mubr.bf16.gmra.mxu0 %v1394
        %v2262 = vpop.f32.mrf.mxu0
        %v2263 = vadd.f32 0.0, %v2262
        %v2264 = vpop.f32.mrf.mxu0
        %v2265 = vadd.f32 0.0, %v2264
        %v2266 = vpop.f32.mrf.mxu0
        %v2267 = vadd.f32 0.0, %v2266
        %v2268 = vpop.f32.mrf.mxu0
        %v2269 = vadd.f32 0.0, %v2268
        %2270 = vmatprep.mubr.bf16.mxu0 %v1403
        %2271 = vmatmul.mubr.bf16.gmra.mxu0 %v1402
        %v2272 = vpop.f32.mrf.mxu0
        %v2273 = vadd.f32 0.0, %v2272
        %v2274 = vpop.f32.mrf.mxu0
        %v2275 = vadd.f32 0.0, %v2274
        %v2276 = vpop.f32.mrf.mxu0
        %v2277 = vadd.f32 0.0, %v2276
        %v2278 = vpop.f32.mrf.mxu0
        %v2279 = vadd.f32 0.0, %v2278
        %2280 = vmatprep.mubr.bf16.mxu0 %v1411
        %2281 = vmatmul.mubr.bf16.gmra.mxu0 %v1410
        %v2282 = vpop.f32.mrf.mxu0
        %v2283 = vadd.f32 0.0, %v2282
        %v2284 = vpop.f32.mrf.mxu0
        %v2285 = vadd.f32 0.0, %v2284
        %v2286 = vpop.f32.mrf.mxu0
        %v2287 = vadd.f32 0.0, %v2286
        %v2288 = vpop.f32.mrf.mxu0
        %v2289 = vadd.f32 0.0, %v2288
        %2290 = vmatprep.mubr.bf16.mxu0 %v1419
        %2291 = vmatmul.mubr.bf16.gmra.mxu0 %v1418
        %v2292 = vpop.f32.mrf.mxu0
        %v2293 = vadd.f32 0.0, %v2292
        %v2294 = vpop.f32.mrf.mxu0
        %v2295 = vadd.f32 0.0, %v2294
        %v2296 = vpop.f32.mrf.mxu0
        %v2297 = vadd.f32 0.0, %v2296
        %v2298 = vpop.f32.mrf.mxu0
        %v2299 = vadd.f32 0.0, %v2298
        %2300 = vmatprep.mubr.bf16.mxu0 %v1427
        %2301 = vmatmul.mubr.bf16.gmra.mxu0 %v1426
        %v2302 = vpop.f32.mrf.mxu0
        %v2303 = vadd.f32 0.0, %v2302
        %v2304 = vpop.f32.mrf.mxu0
        %v2305 = vadd.f32 0.0, %v2304
        %v2306 = vpop.f32.mrf.mxu0
        %v2307 = vadd.f32 0.0, %v2306
        %v2308 = vpop.f32.mrf.mxu0
        %v2309 = vadd.f32 0.0, %v2308
        %2310 = vmatprep.mubr.bf16.mxu0 %v1435
        %2311 = vmatmul.mubr.bf16.gmra.mxu0 %v1434
        %v2312 = vpop.f32.mrf.mxu0
        %v2313 = vadd.f32 0.0, %v2312
        %v2314 = vpop.f32.mrf.mxu0
        %v2315 = vadd.f32 0.0, %v2314
        %v2316 = vpop.f32.mrf.mxu0
        %v2317 = vadd.f32 0.0, %v2316
        %v2318 = vpop.f32.mrf.mxu0
        %v2319 = vadd.f32 0.0, %v2318
        %2320 = vmatprep.mubr.bf16.mxu0 %v1443
        %2321 = vmatmul.mubr.bf16.gmra.mxu0 %v1442
        %v2322 = vpop.f32.mrf.mxu0
        %v2323 = vadd.f32 0.0, %v2322
        %v2324 = vpop.f32.mrf.mxu0
        %v2325 = vadd.f32 0.0, %v2324
        %v2326 = vpop.f32.mrf.mxu0
        %v2327 = vadd.f32 0.0, %v2326
        %v2328 = vpop.f32.mrf.mxu0
        %v2329 = vadd.f32 0.0, %v2328
        %2330 = vmatprep.mubr.bf16.mxu0 %v1451
        %2331 = vmatmul.mubr.bf16.gmra.mxu0 %v1450
        %v2332 = vpop.f32.mrf.mxu0
        %v2333 = vadd.f32 0.0, %v2332
        %v2334 = vpop.f32.mrf.mxu0
        %v2335 = vadd.f32 0.0, %v2334
        %v2336 = vpop.f32.mrf.mxu0
        %v2337 = vadd.f32 0.0, %v2336
        %v2338 = vpop.f32.mrf.mxu0
        %v2339 = vadd.f32 0.0, %v2338
        %2340 = vmatprep.mubr.bf16.mxu0 %v1459
        %2341 = vmatmul.mubr.bf16.gmra.mxu0 %v1458
        %v2342 = vpop.f32.mrf.mxu0
        %v2343 = vadd.f32 0.0, %v2342
        %v2344 = vpop.f32.mrf.mxu0
        %v2345 = vadd.f32 0.0, %v2344
        %v2346 = vpop.f32.mrf.mxu0
        %v2347 = vadd.f32 0.0, %v2346
        %v2348 = vpop.f32.mrf.mxu0
        %v2349 = vadd.f32 0.0, %v2348
        %2350 = vmatprep.mubr.bf16.mxu0 %v1467
        %2351 = vmatmul.mubr.bf16.gmra.mxu0 %v1466
        %v2352 = vpop.f32.mrf.mxu0
        %v2353 = vadd.f32 0.0, %v2352
        %v2354 = vpop.f32.mrf.mxu0
        %v2355 = vadd.f32 0.0, %v2354
        %v2356 = vpop.f32.mrf.mxu0
        %v2357 = vadd.f32 0.0, %v2356
        %v2358 = vpop.f32.mrf.mxu0
        %v2359 = vadd.f32 0.0, %v2358
        %2360 = vmatprep.mubr.bf16.mxu0 %v1475
        %2361 = vmatmul.mubr.bf16.gmra.mxu0 %v1474
        %v2362 = vpop.f32.mrf.mxu0
        %v2363 = vadd.f32 0.0, %v2362
        %v2364 = vpop.f32.mrf.mxu0
        %v2365 = vadd.f32 0.0, %v2364
        %v2366 = vpop.f32.mrf.mxu0
        %v2367 = vadd.f32 0.0, %v2366
        %v2368 = vpop.f32.mrf.mxu0
        %v2369 = vadd.f32 0.0, %v2368
        %2370 = vmatprep.mubr.bf16.mxu0 %v1483
        %2371 = vmatmul.mubr.bf16.gmra.mxu0 %v1482
        %v2372 = vpop.f32.mrf.mxu0
        %v2373 = vadd.f32 0.0, %v2372
        %v2374 = vpop.f32.mrf.mxu0
        %v2375 = vadd.f32 0.0, %v2374
        %v2376 = vpop.f32.mrf.mxu0
        %v2377 = vadd.f32 0.0, %v2376
        %v2378 = vpop.f32.mrf.mxu0
        %v2379 = vadd.f32 0.0, %v2378
        %2380 = vmatprep.mubr.bf16.mxu0 %v1491
        %2381 = vmatmul.mubr.bf16.gmra.mxu0 %v1490
        %v2382 = vpop.f32.mrf.mxu0
        %v2383 = vadd.f32 0.0, %v2382
        %v2384 = vpop.f32.mrf.mxu0
        %v2385 = vadd.f32 0.0, %v2384
        %v2386 = vpop.f32.mrf.mxu0
        %v2387 = vadd.f32 0.0, %v2386
        %v2388 = vpop.f32.mrf.mxu0
        %v2389 = vadd.f32 0.0, %v2388
        %2390 = vmatprep.mubr.bf16.mxu0 %v1499
        %2391 = vmatmul.mubr.bf16.gmra.mxu0 %v1498
        %v2392 = vpop.f32.mrf.mxu0
        %v2393 = vadd.f32 0.0, %v2392
        %v2394 = vpop.f32.mrf.mxu0
        %v2395 = vadd.f32 0.0, %v2394
        %v2396 = vpop.f32.mrf.mxu0
        %v2397 = vadd.f32 0.0, %v2396
        %v2398 = vpop.f32.mrf.mxu0
        %v2399 = vadd.f32 0.0, %v2398
        %2400 = vmatprep.mubr.bf16.mxu0 %v1507
        %2401 = vmatmul.mubr.bf16.gmra.mxu0 %v1506
        %v2402 = vpop.f32.mrf.mxu0
        %v2403 = vadd.f32 0.0, %v2402
        %v2404 = vpop.f32.mrf.mxu0
        %v2405 = vadd.f32 0.0, %v2404
        %v2406 = vpop.f32.mrf.mxu0
        %v2407 = vadd.f32 0.0, %v2406
        %v2408 = vpop.f32.mrf.mxu0
        %v2409 = vadd.f32 0.0, %v2408
        %2410 = vmatprep.mubr.bf16.mxu0 %v1515
        %2411 = vmatmul.mubr.bf16.gmra.mxu0 %v1514
        %v2412 = vpop.f32.mrf.mxu0
        %v2413 = vadd.f32 0.0, %v2412
        %v2414 = vpop.f32.mrf.mxu0
        %v2415 = vadd.f32 0.0, %v2414
        %v2416 = vpop.f32.mrf.mxu0
        %v2417 = vadd.f32 0.0, %v2416
        %v2418 = vpop.f32.mrf.mxu0
        %v2419 = vadd.f32 0.0, %v2418
        %2420 = vmatprep.mubr.bf16.mxu0 %v1523
        %2421 = vmatmul.mubr.bf16.gmra.mxu0 %v1522
        %v2422 = vpop.f32.mrf.mxu0
        %v2423 = vadd.f32 0.0, %v2422
        %v2424 = vpop.f32.mrf.mxu0
        %v2425 = vadd.f32 0.0, %v2424
        %v2426 = vpop.f32.mrf.mxu0
        %v2427 = vadd.f32 0.0, %v2426
        %v2428 = vpop.f32.mrf.mxu0
        %v2429 = vadd.f32 0.0, %v2428
        %2430 = vmatprep.mubr.bf16.mxu0 %v1531
        %2431 = vmatmul.mubr.bf16.gmra.mxu0 %v1530
        %v2432 = vpop.f32.mrf.mxu0
        %v2433 = vadd.f32 0.0, %v2432
        %v2434 = vpop.f32.mrf.mxu0
        %v2435 = vadd.f32 0.0, %v2434
        %v2436 = vpop.f32.mrf.mxu0
        %v2437 = vadd.f32 0.0, %v2436
        %v2438 = vpop.f32.mrf.mxu0
        %v2439 = vadd.f32 0.0, %v2438
        %2440 = vmatprep.mubr.bf16.mxu0 %v1539
        %2441 = vmatmul.mubr.bf16.gmra.mxu0 %v1538
        %v2442 = vpop.f32.mrf.mxu0
        %v2443 = vadd.f32 0.0, %v2442
        %v2444 = vpop.f32.mrf.mxu0
        %v2445 = vadd.f32 0.0, %v2444
        %v2446 = vpop.f32.mrf.mxu0
        %v2447 = vadd.f32 0.0, %v2446
        %v2448 = vpop.f32.mrf.mxu0
        %v2449 = vadd.f32 0.0, %v2448
        %2450 = vmatprep.mubr.bf16.mxu0 %v1547
        %2451 = vmatmul.mubr.bf16.gmra.mxu0 %v1546
        %v2452 = vpop.f32.mrf.mxu0
        %v2453 = vadd.f32 0.0, %v2452
        %v2454 = vpop.f32.mrf.mxu0
        %v2455 = vadd.f32 0.0, %v2454
        %v2456 = vpop.f32.mrf.mxu0
        %v2457 = vadd.f32 0.0, %v2456
        %v2458 = vpop.f32.mrf.mxu0
        %v2459 = vadd.f32 0.0, %v2458
        %2460 = vmatprep.mubr.bf16.mxu0 %v1555
        %2461 = vmatmul.mubr.bf16.gmra.mxu0 %v1554
        %v2462 = vpop.f32.mrf.mxu0
        %v2463 = vadd.f32 0.0, %v2462
        %v2464 = vpop.f32.mrf.mxu0
        %v2465 = vadd.f32 0.0, %v2464
        %v2466 = vpop.f32.mrf.mxu0
        %v2467 = vadd.f32 0.0, %v2466
        %v2468 = vpop.f32.mrf.mxu0
        %v2469 = vadd.f32 0.0, %v2468
        %2470 = vmatprep.mubr.bf16.mxu0 %v1563
        %2471 = vmatmul.mubr.bf16.gmra.mxu0 %v1562
        %v2472 = vpop.f32.mrf.mxu0
        %v2473 = vadd.f32 0.0, %v2472
        %v2474 = vpop.f32.mrf.mxu0
        %v2475 = vadd.f32 0.0, %v2474
        %v2476 = vpop.f32.mrf.mxu0
        %v2477 = vadd.f32 0.0, %v2476
        %v2478 = vpop.f32.mrf.mxu0
        %v2479 = vadd.f32 0.0, %v2478
        %2480 = vmatprep.mubr.bf16.mxu0 %v1571
        %2481 = vmatmul.mubr.bf16.gmra.mxu0 %v1570
        %v2482 = vpop.f32.mrf.mxu0
        %v2483 = vadd.f32 0.0, %v2482
        %v2484 = vpop.f32.mrf.mxu0
        %v2485 = vadd.f32 0.0, %v2484
        %v2486 = vpop.f32.mrf.mxu0
        %v2487 = vadd.f32 0.0, %v2486
        %v2488 = vpop.f32.mrf.mxu0
        %v2489 = vadd.f32 0.0, %v2488
        %2490 = vmatprep.mubr.bf16.mxu0 %v1579
        %2491 = vmatmul.mubr.bf16.gmra.mxu0 %v1578
        %v2492 = vpop.f32.mrf.mxu0
        %v2493 = vadd.f32 0.0, %v2492
        %v2494 = vpop.f32.mrf.mxu0
        %v2495 = vadd.f32 0.0, %v2494
        %v2496 = vpop.f32.mrf.mxu0
        %v2497 = vadd.f32 0.0, %v2496
        %v2498 = vpop.f32.mrf.mxu0
        %v2499 = vadd.f32 0.0, %v2498
        %2500 = vmatprep.mubr.bf16.mxu0 %v1587
        %2501 = vmatmul.mubr.bf16.gmra.mxu0 %v1586
        %v2502 = vpop.f32.mrf.mxu0
        %v2503 = vadd.f32 0.0, %v2502
        %v2504 = vpop.f32.mrf.mxu0
        %v2505 = vadd.f32 0.0, %v2504
        %v2506 = vpop.f32.mrf.mxu0
        %v2507 = vadd.f32 0.0, %v2506
        %v2508 = vpop.f32.mrf.mxu0
        %v2509 = vadd.f32 0.0, %v2508
        %2510 = vmatprep.mubr.bf16.mxu0 %v1595
        %2511 = vmatmul.mubr.bf16.gmra.mxu0 %v1594
        %v2512 = vpop.f32.mrf.mxu0
        %v2513 = vadd.f32 0.0, %v2512
        %v2514 = vpop.f32.mrf.mxu0
        %v2515 = vadd.f32 0.0, %v2514
        %v2516 = vpop.f32.mrf.mxu0
        %v2517 = vadd.f32 0.0, %v2516
        %v2518 = vpop.f32.mrf.mxu0
        %v2519 = vadd.f32 0.0, %v2518
        %2520 = vmatprep.mubr.bf16.mxu0 %v1603
        %2521 = vmatmul.mubr.bf16.gmra.mxu0 %v1602
        %v2522 = vpop.f32.mrf.mxu0
        %v2523 = vadd.f32 0.0, %v2522
        %v2524 = vpop.f32.mrf.mxu0
        %v2525 = vadd.f32 0.0, %v2524
        %v2526 = vpop.f32.mrf.mxu0
        %v2527 = vadd.f32 0.0, %v2526
        %v2528 = vpop.f32.mrf.mxu0
        %v2529 = vadd.f32 0.0, %v2528
        %2530 = vmatprep.mubr.bf16.mxu0 %v1611
        %2531 = vmatmul.mubr.bf16.gmra.mxu0 %v1610
        %v2532 = vpop.f32.mrf.mxu0
        %v2533 = vadd.f32 0.0, %v2532
        %v2534 = vpop.f32.mrf.mxu0
        %v2535 = vadd.f32 0.0, %v2534
        %v2536 = vpop.f32.mrf.mxu0
        %v2537 = vadd.f32 0.0, %v2536
        %v2538 = vpop.f32.mrf.mxu0
        %v2539 = vadd.f32 0.0, %v2538
        %2540 = vmatprep.mubr.bf16.mxu0 %v1619
        %2541 = vmatmul.mubr.bf16.gmra.mxu0 %v1618
        %v2542 = vpop.f32.mrf.mxu0
        %v2543 = vadd.f32 0.0, %v2542
        %v2544 = vpop.f32.mrf.mxu0
        %v2545 = vadd.f32 0.0, %v2544
        %v2546 = vpop.f32.mrf.mxu0
        %v2547 = vadd.f32 0.0, %v2546
        %v2548 = vpop.f32.mrf.mxu0
        %v2549 = vadd.f32 0.0, %v2548
        %2550 = vmatprep.mubr.bf16.mxu0 %v1627
        %2551 = vmatmul.mubr.bf16.gmra.mxu0 %v1626
        %v2552 = vpop.f32.mrf.mxu0
        %v2553 = vadd.f32 0.0, %v2552
        %v2554 = vpop.f32.mrf.mxu0
        %v2555 = vadd.f32 0.0, %v2554
        %v2556 = vpop.f32.mrf.mxu0
        %v2557 = vadd.f32 0.0, %v2556
        %v2558 = vpop.f32.mrf.mxu0
        %v2559 = vadd.f32 0.0, %v2558
        %2560 = vmatprep.mubr.bf16.mxu0 %v1635
        %2561 = vmatmul.mubr.bf16.gmra.mxu0 %v1634
        %v2562 = vpop.f32.mrf.mxu0
        %v2563 = vadd.f32 0.0, %v2562
        %v2564 = vpop.f32.mrf.mxu0
        %v2565 = vadd.f32 0.0, %v2564
        %v2566 = vpop.f32.mrf.mxu0
        %v2567 = vadd.f32 0.0, %v2566
        %v2568 = vpop.f32.mrf.mxu0
        %v2569 = vadd.f32 0.0, %v2568
        %2570 = vdwg.mxu0
        %2571 = vmatprep.subr.bf16.mxu0 %v2096
        %2572 = vmatpush1.bf16.msra.mxu0 %v2095
        %2573 = vmatprep.subr.bf16.mxu0 %v2093
        %2574 = vmatpush1.bf16.msra.mxu0 %v2092
        %2575 = vmatprep.subr.bf16.mxu0 %v2090
        %2576 = vmatpush1.bf16.msra.mxu0 %v2089
        %2577 = vmatprep.subr.bf16.mxu0 %v2087
        %2578 = vmatpush1.bf16.msra.mxu0 %v2086
        %2579 = vmatprep.subr.bf16.mxu0 %v2084
        %2580 = vmatpush1.bf16.msra.mxu0 %v2083
        %2581 = vmatprep.subr.bf16.mxu0 %v2081
        %2582 = vmatpush1.bf16.msra.mxu0 %v2080
        %2583 = vmatprep.subr.bf16.mxu0 %v2078
        %2584 = vmatpush1.bf16.msra.mxu0 %v2077
        %2585 = vmatprep.subr.bf16.mxu0 %v2075
        %2586 = vmatpush1.bf16.msra.mxu0 %v2074
        %2587 = vmatprep.subr.bf16.mxu0 %v2120
        %2588 = vmatpush2.bf16.msra.mxu0 %v2119
        %2589 = vmatprep.subr.bf16.mxu0 %v2117
        %2590 = vmatpush2.bf16.msra.mxu0 %v2116
        %2591 = vmatprep.subr.bf16.mxu0 %v2114
        %2592 = vmatpush2.bf16.msra.mxu0 %v2113
        %2593 = vmatprep.subr.bf16.mxu0 %v2111
        %2594 = vmatpush2.bf16.msra.mxu0 %v2110
        %2595 = vmatprep.subr.bf16.mxu0 %v2108
        %2596 = vmatpush2.bf16.msra.mxu0 %v2107
        %2597 = vmatprep.subr.bf16.mxu0 %v2105
        %2598 = vmatpush2.bf16.msra.mxu0 %v2104
        %2599 = vmatprep.subr.bf16.mxu0 %v2102
        %2600 = vmatpush2.bf16.msra.mxu0 %v2101
        %2601 = vmatprep.subr.bf16.mxu0 %v2099
        %2602 = vmatpush2.bf16.msra.mxu0 %v2098
        %2603 = vmatprep.mubr.bf16.mxu0 %v1389
        %2604 = vmatmul.mubr.bf16.gmra.mxu0 %v1388
        %v2605 = vpop.f32.mrf.mxu0
        %v2606 = vadd.f32 %v2253, %v2605
        %v2607 = vpop.f32.mrf.mxu0
        %v2608 = vadd.f32 %v2255, %v2607
        %v2609 = vpop.f32.mrf.mxu0
        %v2610 = vadd.f32 %v2257, %v2609
        %v2611 = vpop.f32.mrf.mxu0
        %v2612 = vadd.f32 %v2259, %v2611
        %2613 = vmatprep.mubr.bf16.mxu0 %v1397
        %2614 = vmatmul.mubr.bf16.gmra.mxu0 %v1396
        %v2615 = vpop.f32.mrf.mxu0
        %v2616 = vadd.f32 %v2263, %v2615
        %v2617 = vpop.f32.mrf.mxu0
        %v2618 = vadd.f32 %v2265, %v2617
        %v2619 = vpop.f32.mrf.mxu0
        %v2620 = vadd.f32 %v2267, %v2619
        %v2621 = vpop.f32.mrf.mxu0
        %v2622 = vadd.f32 %v2269, %v2621
        %2623 = vmatprep.mubr.bf16.mxu0 %v1405
        %2624 = vmatmul.mubr.bf16.gmra.mxu0 %v1404
        %v2625 = vpop.f32.mrf.mxu0
        %v2626 = vadd.f32 %v2273, %v2625
        %v2627 = vpop.f32.mrf.mxu0
        %v2628 = vadd.f32 %v2275, %v2627
        %v2629 = vpop.f32.mrf.mxu0
        %v2630 = vadd.f32 %v2277, %v2629
        %v2631 = vpop.f32.mrf.mxu0
        %v2632 = vadd.f32 %v2279, %v2631
        %2633 = vmatprep.mubr.bf16.mxu0 %v1413
        %2634 = vmatmul.mubr.bf16.gmra.mxu0 %v1412
        %v2635 = vpop.f32.mrf.mxu0
        %v2636 = vadd.f32 %v2283, %v2635
        %v2637 = vpop.f32.mrf.mxu0
        %v2638 = vadd.f32 %v2285, %v2637
        %v2639 = vpop.f32.mrf.mxu0
        %v2640 = vadd.f32 %v2287, %v2639
        %v2641 = vpop.f32.mrf.mxu0
        %v2642 = vadd.f32 %v2289, %v2641
        %2643 = vmatprep.mubr.bf16.mxu0 %v1421
        %2644 = vmatmul.mubr.bf16.gmra.mxu0 %v1420
        %v2645 = vpop.f32.mrf.mxu0
        %v2646 = vadd.f32 %v2293, %v2645
        %v2647 = vpop.f32.mrf.mxu0
        %v2648 = vadd.f32 %v2295, %v2647
        %v2649 = vpop.f32.mrf.mxu0
        %v2650 = vadd.f32 %v2297, %v2649
        %v2651 = vpop.f32.mrf.mxu0
        %v2652 = vadd.f32 %v2299, %v2651
        %2653 = vmatprep.mubr.bf16.mxu0 %v1429
        %2654 = vmatmul.mubr.bf16.gmra.mxu0 %v1428
        %v2655 = vpop.f32.mrf.mxu0
        %v2656 = vadd.f32 %v2303, %v2655
        %v2657 = vpop.f32.mrf.mxu0
        %v2658 = vadd.f32 %v2305, %v2657
        %v2659 = vpop.f32.mrf.mxu0
        %v2660 = vadd.f32 %v2307, %v2659
        %v2661 = vpop.f32.mrf.mxu0
        %v2662 = vadd.f32 %v2309, %v2661
        %2663 = vmatprep.mubr.bf16.mxu0 %v1437
        %2664 = vmatmul.mubr.bf16.gmra.mxu0 %v1436
        %v2665 = vpop.f32.mrf.mxu0
        %v2666 = vadd.f32 %v2313, %v2665
        %v2667 = vpop.f32.mrf.mxu0
        %v2668 = vadd.f32 %v2315, %v2667
        %v2669 = vpop.f32.mrf.mxu0
        %v2670 = vadd.f32 %v2317, %v2669
        %v2671 = vpop.f32.mrf.mxu0
        %v2672 = vadd.f32 %v2319, %v2671
        %2673 = vmatprep.mubr.bf16.mxu0 %v1445
        %2674 = vmatmul.mubr.bf16.gmra.mxu0 %v1444
        %v2675 = vpop.f32.mrf.mxu0
        %v2676 = vadd.f32 %v2323, %v2675
        %v2677 = vpop.f32.mrf.mxu0
        %v2678 = vadd.f32 %v2325, %v2677
        %v2679 = vpop.f32.mrf.mxu0
        %v2680 = vadd.f32 %v2327, %v2679
        %v2681 = vpop.f32.mrf.mxu0
        %v2682 = vadd.f32 %v2329, %v2681
        %2683 = vmatprep.mubr.bf16.mxu0 %v1453
        %2684 = vmatmul.mubr.bf16.gmra.mxu0 %v1452
        %v2685 = vpop.f32.mrf.mxu0
        %v2686 = vadd.f32 %v2333, %v2685
        %v2687 = vpop.f32.mrf.mxu0
        %v2688 = vadd.f32 %v2335, %v2687
        %v2689 = vpop.f32.mrf.mxu0
        %v2690 = vadd.f32 %v2337, %v2689
        %v2691 = vpop.f32.mrf.mxu0
        %v2692 = vadd.f32 %v2339, %v2691
        %2693 = vmatprep.mubr.bf16.mxu0 %v1461
        %2694 = vmatmul.mubr.bf16.gmra.mxu0 %v1460
        %v2695 = vpop.f32.mrf.mxu0
        %v2696 = vadd.f32 %v2343, %v2695
        %v2697 = vpop.f32.mrf.mxu0
        %v2698 = vadd.f32 %v2345, %v2697
        %v2699 = vpop.f32.mrf.mxu0
        %v2700 = vadd.f32 %v2347, %v2699
        %v2701 = vpop.f32.mrf.mxu0
        %v2702 = vadd.f32 %v2349, %v2701
        %2703 = vmatprep.mubr.bf16.mxu0 %v1469
        %2704 = vmatmul.mubr.bf16.gmra.mxu0 %v1468
        %v2705 = vpop.f32.mrf.mxu0
        %v2706 = vadd.f32 %v2353, %v2705
        %v2707 = vpop.f32.mrf.mxu0
        %v2708 = vadd.f32 %v2355, %v2707
        %v2709 = vpop.f32.mrf.mxu0
        %v2710 = vadd.f32 %v2357, %v2709
        %v2711 = vpop.f32.mrf.mxu0
        %v2712 = vadd.f32 %v2359, %v2711
        %2713 = vmatprep.mubr.bf16.mxu0 %v1477
        %2714 = vmatmul.mubr.bf16.gmra.mxu0 %v1476
        %v2715 = vpop.f32.mrf.mxu0
        %v2716 = vadd.f32 %v2363, %v2715
        %v2717 = vpop.f32.mrf.mxu0
        %v2718 = vadd.f32 %v2365, %v2717
        %v2719 = vpop.f32.mrf.mxu0
        %v2720 = vadd.f32 %v2367, %v2719
        %v2721 = vpop.f32.mrf.mxu0
        %v2722 = vadd.f32 %v2369, %v2721
        %2723 = vmatprep.mubr.bf16.mxu0 %v1485
        %2724 = vmatmul.mubr.bf16.gmra.mxu0 %v1484
        %v2725 = vpop.f32.mrf.mxu0
        %v2726 = vadd.f32 %v2373, %v2725
        %v2727 = vpop.f32.mrf.mxu0
        %v2728 = vadd.f32 %v2375, %v2727
        %v2729 = vpop.f32.mrf.mxu0
        %v2730 = vadd.f32 %v2377, %v2729
        %v2731 = vpop.f32.mrf.mxu0
        %v2732 = vadd.f32 %v2379, %v2731
        %2733 = vmatprep.mubr.bf16.mxu0 %v1493
        %2734 = vmatmul.mubr.bf16.gmra.mxu0 %v1492
        %v2735 = vpop.f32.mrf.mxu0
        %v2736 = vadd.f32 %v2383, %v2735
        %v2737 = vpop.f32.mrf.mxu0
        %v2738 = vadd.f32 %v2385, %v2737
        %v2739 = vpop.f32.mrf.mxu0
        %v2740 = vadd.f32 %v2387, %v2739
        %v2741 = vpop.f32.mrf.mxu0
        %v2742 = vadd.f32 %v2389, %v2741
        %2743 = vmatprep.mubr.bf16.mxu0 %v1501
        %2744 = vmatmul.mubr.bf16.gmra.mxu0 %v1500
        %v2745 = vpop.f32.mrf.mxu0
        %v2746 = vadd.f32 %v2393, %v2745
        %v2747 = vpop.f32.mrf.mxu0
        %v2748 = vadd.f32 %v2395, %v2747
        %v2749 = vpop.f32.mrf.mxu0
        %v2750 = vadd.f32 %v2397, %v2749
        %v2751 = vpop.f32.mrf.mxu0
        %v2752 = vadd.f32 %v2399, %v2751
        %2753 = vmatprep.mubr.bf16.mxu0 %v1509
        %2754 = vmatmul.mubr.bf16.gmra.mxu0 %v1508
        %v2755 = vpop.f32.mrf.mxu0
        %v2756 = vadd.f32 %v2403, %v2755
        %v2757 = vpop.f32.mrf.mxu0
        %v2758 = vadd.f32 %v2405, %v2757
        %v2759 = vpop.f32.mrf.mxu0
        %v2760 = vadd.f32 %v2407, %v2759
        %v2761 = vpop.f32.mrf.mxu0
        %v2762 = vadd.f32 %v2409, %v2761
        %2763 = vmatprep.mubr.bf16.mxu0 %v1517
        %2764 = vmatmul.mubr.bf16.gmra.mxu0 %v1516
        %v2765 = vpop.f32.mrf.mxu0
        %v2766 = vadd.f32 %v2413, %v2765
        %v2767 = vpop.f32.mrf.mxu0
        %v2768 = vadd.f32 %v2415, %v2767
        %v2769 = vpop.f32.mrf.mxu0
        %v2770 = vadd.f32 %v2417, %v2769
        %v2771 = vpop.f32.mrf.mxu0
        %v2772 = vadd.f32 %v2419, %v2771
        %2773 = vmatprep.mubr.bf16.mxu0 %v1525
        %2774 = vmatmul.mubr.bf16.gmra.mxu0 %v1524
        %v2775 = vpop.f32.mrf.mxu0
        %v2776 = vadd.f32 %v2423, %v2775
        %v2777 = vpop.f32.mrf.mxu0
        %v2778 = vadd.f32 %v2425, %v2777
        %v2779 = vpop.f32.mrf.mxu0
        %v2780 = vadd.f32 %v2427, %v2779
        %v2781 = vpop.f32.mrf.mxu0
        %v2782 = vadd.f32 %v2429, %v2781
        %2783 = vmatprep.mubr.bf16.mxu0 %v1533
        %2784 = vmatmul.mubr.bf16.gmra.mxu0 %v1532
        %v2785 = vpop.f32.mrf.mxu0
        %v2786 = vadd.f32 %v2433, %v2785
        %v2787 = vpop.f32.mrf.mxu0
        %v2788 = vadd.f32 %v2435, %v2787
        %v2789 = vpop.f32.mrf.mxu0
        %v2790 = vadd.f32 %v2437, %v2789
        %v2791 = vpop.f32.mrf.mxu0
        %v2792 = vadd.f32 %v2439, %v2791
        %2793 = vmatprep.mubr.bf16.mxu0 %v1541
        %2794 = vmatmul.mubr.bf16.gmra.mxu0 %v1540
        %v2795 = vpop.f32.mrf.mxu0
        %v2796 = vadd.f32 %v2443, %v2795
        %v2797 = vpop.f32.mrf.mxu0
        %v2798 = vadd.f32 %v2445, %v2797
        %v2799 = vpop.f32.mrf.mxu0
        %v2800 = vadd.f32 %v2447, %v2799
        %v2801 = vpop.f32.mrf.mxu0
        %v2802 = vadd.f32 %v2449, %v2801
        %2803 = vmatprep.mubr.bf16.mxu0 %v1549
        %2804 = vmatmul.mubr.bf16.gmra.mxu0 %v1548
        %v2805 = vpop.f32.mrf.mxu0
        %v2806 = vadd.f32 %v2453, %v2805
        %v2807 = vpop.f32.mrf.mxu0
        %v2808 = vadd.f32 %v2455, %v2807
        %v2809 = vpop.f32.mrf.mxu0
        %v2810 = vadd.f32 %v2457, %v2809
        %v2811 = vpop.f32.mrf.mxu0
        %v2812 = vadd.f32 %v2459, %v2811
        %2813 = vmatprep.mubr.bf16.mxu0 %v1557
        %2814 = vmatmul.mubr.bf16.gmra.mxu0 %v1556
        %v2815 = vpop.f32.mrf.mxu0
        %v2816 = vadd.f32 %v2463, %v2815
        %v2817 = vpop.f32.mrf.mxu0
        %v2818 = vadd.f32 %v2465, %v2817
        %v2819 = vpop.f32.mrf.mxu0
        %v2820 = vadd.f32 %v2467, %v2819
        %v2821 = vpop.f32.mrf.mxu0
        %v2822 = vadd.f32 %v2469, %v2821
        %2823 = vmatprep.mubr.bf16.mxu0 %v1565
        %2824 = vmatmul.mubr.bf16.gmra.mxu0 %v1564
        %v2825 = vpop.f32.mrf.mxu0
        %v2826 = vadd.f32 %v2473, %v2825
        %v2827 = vpop.f32.mrf.mxu0
        %v2828 = vadd.f32 %v2475, %v2827
        %v2829 = vpop.f32.mrf.mxu0
        %v2830 = vadd.f32 %v2477, %v2829
        %v2831 = vpop.f32.mrf.mxu0
        %v2832 = vadd.f32 %v2479, %v2831
        %2833 = vmatprep.mubr.bf16.mxu0 %v1573
        %2834 = vmatmul.mubr.bf16.gmra.mxu0 %v1572
        %v2835 = vpop.f32.mrf.mxu0
        %v2836 = vadd.f32 %v2483, %v2835
        %v2837 = vpop.f32.mrf.mxu0
        %v2838 = vadd.f32 %v2485, %v2837
        %v2839 = vpop.f32.mrf.mxu0
        %v2840 = vadd.f32 %v2487, %v2839
        %v2841 = vpop.f32.mrf.mxu0
        %v2842 = vadd.f32 %v2489, %v2841
        %2843 = vmatprep.mubr.bf16.mxu0 %v1581
        %2844 = vmatmul.mubr.bf16.gmra.mxu0 %v1580
        %v2845 = vpop.f32.mrf.mxu0
        %v2846 = vadd.f32 %v2493, %v2845
        %v2847 = vpop.f32.mrf.mxu0
        %v2848 = vadd.f32 %v2495, %v2847
        %v2849 = vpop.f32.mrf.mxu0
        %v2850 = vadd.f32 %v2497, %v2849
        %v2851 = vpop.f32.mrf.mxu0
        %v2852 = vadd.f32 %v2499, %v2851
        %2853 = vmatprep.mubr.bf16.mxu0 %v1589
        %2854 = vmatmul.mubr.bf16.gmra.mxu0 %v1588
        %v2855 = vpop.f32.mrf.mxu0
        %v2856 = vadd.f32 %v2503, %v2855
        %v2857 = vpop.f32.mrf.mxu0
        %v2858 = vadd.f32 %v2505, %v2857
        %v2859 = vpop.f32.mrf.mxu0
        %v2860 = vadd.f32 %v2507, %v2859
        %v2861 = vpop.f32.mrf.mxu0
        %v2862 = vadd.f32 %v2509, %v2861
        %2863 = vmatprep.mubr.bf16.mxu0 %v1597
        %2864 = vmatmul.mubr.bf16.gmra.mxu0 %v1596
        %v2865 = vpop.f32.mrf.mxu0
        %v2866 = vadd.f32 %v2513, %v2865
        %v2867 = vpop.f32.mrf.mxu0
        %v2868 = vadd.f32 %v2515, %v2867
        %v2869 = vpop.f32.mrf.mxu0
        %v2870 = vadd.f32 %v2517, %v2869
        %v2871 = vpop.f32.mrf.mxu0
        %v2872 = vadd.f32 %v2519, %v2871
        %2873 = vmatprep.mubr.bf16.mxu0 %v1605
        %2874 = vmatmul.mubr.bf16.gmra.mxu0 %v1604
        %v2875 = vpop.f32.mrf.mxu0
        %v2876 = vadd.f32 %v2523, %v2875
        %v2877 = vpop.f32.mrf.mxu0
        %v2878 = vadd.f32 %v2525, %v2877
        %v2879 = vpop.f32.mrf.mxu0
        %v2880 = vadd.f32 %v2527, %v2879
        %v2881 = vpop.f32.mrf.mxu0
        %v2882 = vadd.f32 %v2529, %v2881
        %2883 = vmatprep.mubr.bf16.mxu0 %v1613
        %2884 = vmatmul.mubr.bf16.gmra.mxu0 %v1612
        %v2885 = vpop.f32.mrf.mxu0
        %v2886 = vadd.f32 %v2533, %v2885
        %v2887 = vpop.f32.mrf.mxu0
        %v2888 = vadd.f32 %v2535, %v2887
        %v2889 = vpop.f32.mrf.mxu0
        %v2890 = vadd.f32 %v2537, %v2889
        %v2891 = vpop.f32.mrf.mxu0
        %v2892 = vadd.f32 %v2539, %v2891
        %2893 = vmatprep.mubr.bf16.mxu0 %v1621
        %2894 = vmatmul.mubr.bf16.gmra.mxu0 %v1620
        %v2895 = vpop.f32.mrf.mxu0
        %v2896 = vadd.f32 %v2543, %v2895
        %v2897 = vpop.f32.mrf.mxu0
        %v2898 = vadd.f32 %v2545, %v2897
        %v2899 = vpop.f32.mrf.mxu0
        %v2900 = vadd.f32 %v2547, %v2899
        %v2901 = vpop.f32.mrf.mxu0
        %v2902 = vadd.f32 %v2549, %v2901
        %2903 = vmatprep.mubr.bf16.mxu0 %v1629
        %2904 = vmatmul.mubr.bf16.gmra.mxu0 %v1628
        %v2905 = vpop.f32.mrf.mxu0
        %v2906 = vadd.f32 %v2553, %v2905
        %v2907 = vpop.f32.mrf.mxu0
        %v2908 = vadd.f32 %v2555, %v2907
        %v2909 = vpop.f32.mrf.mxu0
        %v2910 = vadd.f32 %v2557, %v2909
        %v2911 = vpop.f32.mrf.mxu0
        %v2912 = vadd.f32 %v2559, %v2911
        %2913 = vmatprep.mubr.bf16.mxu0 %v1637
        %2914 = vmatmul.mubr.bf16.gmra.mxu0 %v1636
        %v2915 = vpop.f32.mrf.mxu0
        %v2916 = vadd.f32 %v2563, %v2915
        %v2917 = vpop.f32.mrf.mxu0
        %v2918 = vadd.f32 %v2565, %v2917
        %v2919 = vpop.f32.mrf.mxu0
        %v2920 = vadd.f32 %v2567, %v2919
        %v2921 = vpop.f32.mrf.mxu0
        %v2922 = vadd.f32 %v2569, %v2921
        %2923 = vdwg.mxu0
        %2924 = vmatprep.subr.bf16.mxu0 %v2144
        %2925 = vmatpush1.bf16.msra.mxu0 %v2143
        %2926 = vmatprep.subr.bf16.mxu0 %v2141
        %2927 = vmatpush1.bf16.msra.mxu0 %v2140
        %2928 = vmatprep.subr.bf16.mxu0 %v2138
        %2929 = vmatpush1.bf16.msra.mxu0 %v2137
        %2930 = vmatprep.subr.bf16.mxu0 %v2135
        %2931 = vmatpush1.bf16.msra.mxu0 %v2134
        %2932 = vmatprep.subr.bf16.mxu0 %v2132
        %2933 = vmatpush1.bf16.msra.mxu0 %v2131
        %2934 = vmatprep.subr.bf16.mxu0 %v2129
        %2935 = vmatpush1.bf16.msra.mxu0 %v2128
        %2936 = vmatprep.subr.bf16.mxu0 %v2126
        %2937 = vmatpush1.bf16.msra.mxu0 %v2125
        %2938 = vmatprep.subr.bf16.mxu0 %v2123
        %2939 = vmatpush1.bf16.msra.mxu0 %v2122
        %2940 = vmatprep.subr.bf16.mxu0 %v2168
        %2941 = vmatpush2.bf16.msra.mxu0 %v2167
        %2942 = vmatprep.subr.bf16.mxu0 %v2165
        %2943 = vmatpush2.bf16.msra.mxu0 %v2164
        %2944 = vmatprep.subr.bf16.mxu0 %v2162
        %2945 = vmatpush2.bf16.msra.mxu0 %v2161
        %2946 = vmatprep.subr.bf16.mxu0 %v2159
        %2947 = vmatpush2.bf16.msra.mxu0 %v2158
        %2948 = vmatprep.subr.bf16.mxu0 %v2156
        %2949 = vmatpush2.bf16.msra.mxu0 %v2155
        %2950 = vmatprep.subr.bf16.mxu0 %v2153
        %2951 = vmatpush2.bf16.msra.mxu0 %v2152
        %2952 = vmatprep.subr.bf16.mxu0 %v2150
        %2953 = vmatpush2.bf16.msra.mxu0 %v2149
        %2954 = vmatprep.subr.bf16.mxu0 %v2147
        %2955 = vmatpush2.bf16.msra.mxu0 %v2146
        %2956 = vmatprep.mubr.bf16.mxu0 %v1391
        %2957 = vmatmul.mubr.bf16.gmra.mxu0 %v1390
        %v2958 = vpop.f32.mrf.mxu0
        %v2959 = vadd.f32 %v2606, %v2958
        %v2960 = vpop.f32.mrf.mxu0
        %v2961 = vadd.f32 %v2608, %v2960
        %v2962 = vpop.f32.mrf.mxu0
        %v2963 = vadd.f32 %v2610, %v2962
        %v2964 = vpop.f32.mrf.mxu0
        %v2965 = vadd.f32 %v2612, %v2964
        %2966 = vmatprep.mubr.bf16.mxu0 %v1399
        %2967 = vmatmul.mubr.bf16.gmra.mxu0 %v1398
        %v2968 = vpop.f32.mrf.mxu0
        %v2969 = vadd.f32 %v2616, %v2968
        %v2970 = vpop.f32.mrf.mxu0
        %v2971 = vadd.f32 %v2618, %v2970
        %v2972 = vpop.f32.mrf.mxu0
        %v2973 = vadd.f32 %v2620, %v2972
        %v2974 = vpop.f32.mrf.mxu0
        %v2975 = vadd.f32 %v2622, %v2974
        %2976 = vmatprep.mubr.bf16.mxu0 %v1407
        %2977 = vmatmul.mubr.bf16.gmra.mxu0 %v1406
        %v2978 = vpop.f32.mrf.mxu0
        %v2979 = vadd.f32 %v2626, %v2978
        %v2980 = vpop.f32.mrf.mxu0
        %v2981 = vadd.f32 %v2628, %v2980
        %v2982 = vpop.f32.mrf.mxu0
        %v2983 = vadd.f32 %v2630, %v2982
        %v2984 = vpop.f32.mrf.mxu0
        %v2985 = vadd.f32 %v2632, %v2984
        %2986 = vmatprep.mubr.bf16.mxu0 %v1415
        %2987 = vmatmul.mubr.bf16.gmra.mxu0 %v1414
        %v2988 = vpop.f32.mrf.mxu0
        %v2989 = vadd.f32 %v2636, %v2988
        %v2990 = vpop.f32.mrf.mxu0
        %v2991 = vadd.f32 %v2638, %v2990
        %v2992 = vpop.f32.mrf.mxu0
        %v2993 = vadd.f32 %v2640, %v2992
        %v2994 = vpop.f32.mrf.mxu0
        %v2995 = vadd.f32 %v2642, %v2994
        %2996 = vmatprep.mubr.bf16.mxu0 %v1423
        %2997 = vmatmul.mubr.bf16.gmra.mxu0 %v1422
        %v2998 = vpop.f32.mrf.mxu0
        %v2999 = vadd.f32 %v2646, %v2998
        %v3000 = vpop.f32.mrf.mxu0
        %v3001 = vadd.f32 %v2648, %v3000
        %v3002 = vpop.f32.mrf.mxu0
        %v3003 = vadd.f32 %v2650, %v3002
        %v3004 = vpop.f32.mrf.mxu0
        %v3005 = vadd.f32 %v2652, %v3004
        %3006 = vmatprep.mubr.bf16.mxu0 %v1431
        %3007 = vmatmul.mubr.bf16.gmra.mxu0 %v1430
        %v3008 = vpop.f32.mrf.mxu0
        %v3009 = vadd.f32 %v2656, %v3008
        %v3010 = vpop.f32.mrf.mxu0
        %v3011 = vadd.f32 %v2658, %v3010
        %v3012 = vpop.f32.mrf.mxu0
        %v3013 = vadd.f32 %v2660, %v3012
        %v3014 = vpop.f32.mrf.mxu0
        %v3015 = vadd.f32 %v2662, %v3014
        %3016 = vmatprep.mubr.bf16.mxu0 %v1439
        %3017 = vmatmul.mubr.bf16.gmra.mxu0 %v1438
        %v3018 = vpop.f32.mrf.mxu0
        %v3019 = vadd.f32 %v2666, %v3018
        %v3020 = vpop.f32.mrf.mxu0
        %v3021 = vadd.f32 %v2668, %v3020
        %v3022 = vpop.f32.mrf.mxu0
        %v3023 = vadd.f32 %v2670, %v3022
        %v3024 = vpop.f32.mrf.mxu0
        %v3025 = vadd.f32 %v2672, %v3024
        %3026 = vmatprep.mubr.bf16.mxu0 %v1447
        %3027 = vmatmul.mubr.bf16.gmra.mxu0 %v1446
        %v3028 = vpop.f32.mrf.mxu0
        %v3029 = vadd.f32 %v2676, %v3028
        %v3030 = vpop.f32.mrf.mxu0
        %v3031 = vadd.f32 %v2678, %v3030
        %v3032 = vpop.f32.mrf.mxu0
        %v3033 = vadd.f32 %v2680, %v3032
        %v3034 = vpop.f32.mrf.mxu0
        %v3035 = vadd.f32 %v2682, %v3034
        %3036 = vmatprep.mubr.bf16.mxu0 %v1455
        %3037 = vmatmul.mubr.bf16.gmra.mxu0 %v1454
        %v3038 = vpop.f32.mrf.mxu0
        %v3039 = vadd.f32 %v2686, %v3038
        %v3040 = vpop.f32.mrf.mxu0
        %v3041 = vadd.f32 %v2688, %v3040
        %v3042 = vpop.f32.mrf.mxu0
        %v3043 = vadd.f32 %v2690, %v3042
        %v3044 = vpop.f32.mrf.mxu0
        %v3045 = vadd.f32 %v2692, %v3044
        %3046 = vmatprep.mubr.bf16.mxu0 %v1463
        %3047 = vmatmul.mubr.bf16.gmra.mxu0 %v1462
        %v3048 = vpop.f32.mrf.mxu0
        %v3049 = vadd.f32 %v2696, %v3048
        %v3050 = vpop.f32.mrf.mxu0
        %v3051 = vadd.f32 %v2698, %v3050
        %v3052 = vpop.f32.mrf.mxu0
        %v3053 = vadd.f32 %v2700, %v3052
        %v3054 = vpop.f32.mrf.mxu0
        %v3055 = vadd.f32 %v2702, %v3054
        %3056 = vmatprep.mubr.bf16.mxu0 %v1471
        %3057 = vmatmul.mubr.bf16.gmra.mxu0 %v1470
        %v3058 = vpop.f32.mrf.mxu0
        %v3059 = vadd.f32 %v2706, %v3058
        %v3060 = vpop.f32.mrf.mxu0
        %v3061 = vadd.f32 %v2708, %v3060
        %v3062 = vpop.f32.mrf.mxu0
        %v3063 = vadd.f32 %v2710, %v3062
        %v3064 = vpop.f32.mrf.mxu0
        %v3065 = vadd.f32 %v2712, %v3064
        %3066 = vmatprep.mubr.bf16.mxu0 %v1479
        %3067 = vmatmul.mubr.bf16.gmra.mxu0 %v1478
        %v3068 = vpop.f32.mrf.mxu0
        %v3069 = vadd.f32 %v2716, %v3068
        %v3070 = vpop.f32.mrf.mxu0
        %v3071 = vadd.f32 %v2718, %v3070
        %v3072 = vpop.f32.mrf.mxu0
        %v3073 = vadd.f32 %v2720, %v3072
        %v3074 = vpop.f32.mrf.mxu0
        %v3075 = vadd.f32 %v2722, %v3074
        %3076 = vmatprep.mubr.bf16.mxu0 %v1487
        %3077 = vmatmul.mubr.bf16.gmra.mxu0 %v1486
        %v3078 = vpop.f32.mrf.mxu0
        %v3079 = vadd.f32 %v2726, %v3078
        %v3080 = vpop.f32.mrf.mxu0
        %v3081 = vadd.f32 %v2728, %v3080
        %v3082 = vpop.f32.mrf.mxu0
        %v3083 = vadd.f32 %v2730, %v3082
        %v3084 = vpop.f32.mrf.mxu0
        %v3085 = vadd.f32 %v2732, %v3084
        %3086 = vmatprep.mubr.bf16.mxu0 %v1495
        %3087 = vmatmul.mubr.bf16.gmra.mxu0 %v1494
        %v3088 = vpop.f32.mrf.mxu0
        %v3089 = vadd.f32 %v2736, %v3088
        %v3090 = vpop.f32.mrf.mxu0
        %v3091 = vadd.f32 %v2738, %v3090
        %v3092 = vpop.f32.mrf.mxu0
        %v3093 = vadd.f32 %v2740, %v3092
        %v3094 = vpop.f32.mrf.mxu0
        %v3095 = vadd.f32 %v2742, %v3094
        %3096 = vmatprep.mubr.bf16.mxu0 %v1503
        %3097 = vmatmul.mubr.bf16.gmra.mxu0 %v1502
        %v3098 = vpop.f32.mrf.mxu0
        %v3099 = vadd.f32 %v2746, %v3098
        %v3100 = vpop.f32.mrf.mxu0
        %v3101 = vadd.f32 %v2748, %v3100
        %v3102 = vpop.f32.mrf.mxu0
        %v3103 = vadd.f32 %v2750, %v3102
        %v3104 = vpop.f32.mrf.mxu0
        %v3105 = vadd.f32 %v2752, %v3104
        %3106 = vmatprep.mubr.bf16.mxu0 %v1511
        %3107 = vmatmul.mubr.bf16.gmra.mxu0 %v1510
        %v3108 = vpop.f32.mrf.mxu0
        %v3109 = vadd.f32 %v2756, %v3108
        %v3110 = vpop.f32.mrf.mxu0
        %v3111 = vadd.f32 %v2758, %v3110
        %v3112 = vpop.f32.mrf.mxu0
        %v3113 = vadd.f32 %v2760, %v3112
        %v3114 = vpop.f32.mrf.mxu0
        %v3115 = vadd.f32 %v2762, %v3114
        %3116 = vmatprep.mubr.bf16.mxu0 %v1519
        %3117 = vmatmul.mubr.bf16.gmra.mxu0 %v1518
        %v3118 = vpop.f32.mrf.mxu0
        %v3119 = vadd.f32 %v2766, %v3118
        %v3120 = vpop.f32.mrf.mxu0
        %v3121 = vadd.f32 %v2768, %v3120
        %v3122 = vpop.f32.mrf.mxu0
        %v3123 = vadd.f32 %v2770, %v3122
        %v3124 = vpop.f32.mrf.mxu0
        %v3125 = vadd.f32 %v2772, %v3124
        %3126 = vmatprep.mubr.bf16.mxu0 %v1527
        %3127 = vmatmul.mubr.bf16.gmra.mxu0 %v1526
        %v3128 = vpop.f32.mrf.mxu0
        %v3129 = vadd.f32 %v2776, %v3128
        %v3130 = vpop.f32.mrf.mxu0
        %v3131 = vadd.f32 %v2778, %v3130
        %v3132 = vpop.f32.mrf.mxu0
        %v3133 = vadd.f32 %v2780, %v3132
        %v3134 = vpop.f32.mrf.mxu0
        %v3135 = vadd.f32 %v2782, %v3134
        %3136 = vmatprep.mubr.bf16.mxu0 %v1535
        %3137 = vmatmul.mubr.bf16.gmra.mxu0 %v1534
        %v3138 = vpop.f32.mrf.mxu0
        %v3139 = vadd.f32 %v2786, %v3138
        %v3140 = vpop.f32.mrf.mxu0
        %v3141 = vadd.f32 %v2788, %v3140
        %v3142 = vpop.f32.mrf.mxu0
        %v3143 = vadd.f32 %v2790, %v3142
        %v3144 = vpop.f32.mrf.mxu0
        %v3145 = vadd.f32 %v2792, %v3144
        %3146 = vmatprep.mubr.bf16.mxu0 %v1543
        %3147 = vmatmul.mubr.bf16.gmra.mxu0 %v1542
        %v3148 = vpop.f32.mrf.mxu0
        %v3149 = vadd.f32 %v2796, %v3148
        %v3150 = vpop.f32.mrf.mxu0
        %v3151 = vadd.f32 %v2798, %v3150
        %v3152 = vpop.f32.mrf.mxu0
        %v3153 = vadd.f32 %v2800, %v3152
        %v3154 = vpop.f32.mrf.mxu0
        %v3155 = vadd.f32 %v2802, %v3154
        %3156 = vmatprep.mubr.bf16.mxu0 %v1551
        %3157 = vmatmul.mubr.bf16.gmra.mxu0 %v1550
        %v3158 = vpop.f32.mrf.mxu0
        %v3159 = vadd.f32 %v2806, %v3158
        %v3160 = vpop.f32.mrf.mxu0
        %v3161 = vadd.f32 %v2808, %v3160
        %v3162 = vpop.f32.mrf.mxu0
        %v3163 = vadd.f32 %v2810, %v3162
        %v3164 = vpop.f32.mrf.mxu0
        %v3165 = vadd.f32 %v2812, %v3164
        %3166 = vmatprep.mubr.bf16.mxu0 %v1559
        %3167 = vmatmul.mubr.bf16.gmra.mxu0 %v1558
        %v3168 = vpop.f32.mrf.mxu0
        %v3169 = vadd.f32 %v2816, %v3168
        %v3170 = vpop.f32.mrf.mxu0
        %v3171 = vadd.f32 %v2818, %v3170
        %v3172 = vpop.f32.mrf.mxu0
        %v3173 = vadd.f32 %v2820, %v3172
        %v3174 = vpop.f32.mrf.mxu0
        %v3175 = vadd.f32 %v2822, %v3174
        %3176 = vmatprep.mubr.bf16.mxu0 %v1567
        %3177 = vmatmul.mubr.bf16.gmra.mxu0 %v1566
        %v3178 = vpop.f32.mrf.mxu0
        %v3179 = vadd.f32 %v2826, %v3178
        %v3180 = vpop.f32.mrf.mxu0
        %v3181 = vadd.f32 %v2828, %v3180
        %v3182 = vpop.f32.mrf.mxu0
        %v3183 = vadd.f32 %v2830, %v3182
        %v3184 = vpop.f32.mrf.mxu0
        %v3185 = vadd.f32 %v2832, %v3184
        %3186 = vmatprep.mubr.bf16.mxu0 %v1575
        %3187 = vmatmul.mubr.bf16.gmra.mxu0 %v1574
        %v3188 = vpop.f32.mrf.mxu0
        %v3189 = vadd.f32 %v2836, %v3188
        %v3190 = vpop.f32.mrf.mxu0
        %v3191 = vadd.f32 %v2838, %v3190
        %v3192 = vpop.f32.mrf.mxu0
        %v3193 = vadd.f32 %v2840, %v3192
        %v3194 = vpop.f32.mrf.mxu0
        %v3195 = vadd.f32 %v2842, %v3194
        %3196 = vmatprep.mubr.bf16.mxu0 %v1583
        %3197 = vmatmul.mubr.bf16.gmra.mxu0 %v1582
        %v3198 = vpop.f32.mrf.mxu0
        %v3199 = vadd.f32 %v2846, %v3198
        %v3200 = vpop.f32.mrf.mxu0
        %v3201 = vadd.f32 %v2848, %v3200
        %v3202 = vpop.f32.mrf.mxu0
        %v3203 = vadd.f32 %v2850, %v3202
        %v3204 = vpop.f32.mrf.mxu0
        %v3205 = vadd.f32 %v2852, %v3204
        %3206 = vmatprep.mubr.bf16.mxu0 %v1591
        %3207 = vmatmul.mubr.bf16.gmra.mxu0 %v1590
        %v3208 = vpop.f32.mrf.mxu0
        %v3209 = vadd.f32 %v2856, %v3208
        %v3210 = vpop.f32.mrf.mxu0
        %v3211 = vadd.f32 %v2858, %v3210
        %v3212 = vpop.f32.mrf.mxu0
        %v3213 = vadd.f32 %v2860, %v3212
        %v3214 = vpop.f32.mrf.mxu0
        %v3215 = vadd.f32 %v2862, %v3214
        %3216 = vmatprep.mubr.bf16.mxu0 %v1599
        %3217 = vmatmul.mubr.bf16.gmra.mxu0 %v1598
        %v3218 = vpop.f32.mrf.mxu0
        %v3219 = vadd.f32 %v2866, %v3218
        %v3220 = vpop.f32.mrf.mxu0
        %v3221 = vadd.f32 %v2868, %v3220
        %v3222 = vpop.f32.mrf.mxu0
        %v3223 = vadd.f32 %v2870, %v3222
        %v3224 = vpop.f32.mrf.mxu0
        %v3225 = vadd.f32 %v2872, %v3224
        %3226 = vmatprep.mubr.bf16.mxu0 %v1607
        %3227 = vmatmul.mubr.bf16.gmra.mxu0 %v1606
        %v3228 = vpop.f32.mrf.mxu0
        %v3229 = vadd.f32 %v2876, %v3228
        %v3230 = vpop.f32.mrf.mxu0
        %v3231 = vadd.f32 %v2878, %v3230
        %v3232 = vpop.f32.mrf.mxu0
        %v3233 = vadd.f32 %v2880, %v3232
        %v3234 = vpop.f32.mrf.mxu0
        %v3235 = vadd.f32 %v2882, %v3234
        %3236 = vmatprep.mubr.bf16.mxu0 %v1615
        %3237 = vmatmul.mubr.bf16.gmra.mxu0 %v1614
        %v3238 = vpop.f32.mrf.mxu0
        %v3239 = vadd.f32 %v2886, %v3238
        %v3240 = vpop.f32.mrf.mxu0
        %v3241 = vadd.f32 %v2888, %v3240
        %v3242 = vpop.f32.mrf.mxu0
        %v3243 = vadd.f32 %v2890, %v3242
        %v3244 = vpop.f32.mrf.mxu0
        %v3245 = vadd.f32 %v2892, %v3244
        %3246 = vmatprep.mubr.bf16.mxu0 %v1623
        %3247 = vmatmul.mubr.bf16.gmra.mxu0 %v1622
        %v3248 = vpop.f32.mrf.mxu0
        %v3249 = vadd.f32 %v2896, %v3248
        %v3250 = vpop.f32.mrf.mxu0
        %v3251 = vadd.f32 %v2898, %v3250
        %v3252 = vpop.f32.mrf.mxu0
        %v3253 = vadd.f32 %v2900, %v3252
        %v3254 = vpop.f32.mrf.mxu0
        %v3255 = vadd.f32 %v2902, %v3254
        %3256 = vmatprep.mubr.bf16.mxu0 %v1631
        %3257 = vmatmul.mubr.bf16.gmra.mxu0 %v1630
        %v3258 = vpop.f32.mrf.mxu0
        %v3259 = vadd.f32 %v2906, %v3258
        %v3260 = vpop.f32.mrf.mxu0
        %v3261 = vadd.f32 %v2908, %v3260
        %v3262 = vpop.f32.mrf.mxu0
        %v3263 = vadd.f32 %v2910, %v3262
        %v3264 = vpop.f32.mrf.mxu0
        %v3265 = vadd.f32 %v2912, %v3264
        %3266 = vmatprep.mubr.bf16.mxu0 %v1639
        %3267 = vmatmul.mubr.bf16.gmra.mxu0 %v1638
        %v3268 = vpop.f32.mrf.mxu0
        %v3269 = vadd.f32 %v2916, %v3268
        %v3270 = vpop.f32.mrf.mxu0
        %v3271 = vadd.f32 %v2918, %v3270
        %v3272 = vpop.f32.mrf.mxu0
        %v3273 = vadd.f32 %v2920, %v3272
        %v3274 = vpop.f32.mrf.mxu0
        %v3275 = vadd.f32 %v2922, %v3274
        %3276 = vdwg.mxu0
        %3277 = vmatprep.subr.bf16.mxu0 %v2192
        %3278 = vmatpush1.bf16.msra.mxu0 %v2191
        %3279 = vmatprep.subr.bf16.mxu0 %v2189
        %3280 = vmatpush1.bf16.msra.mxu0 %v2188
        %3281 = vmatprep.subr.bf16.mxu0 %v2186
        %3282 = vmatpush1.bf16.msra.mxu0 %v2185
        %3283 = vmatprep.subr.bf16.mxu0 %v2183
        %3284 = vmatpush1.bf16.msra.mxu0 %v2182
        %3285 = vmatprep.subr.bf16.mxu0 %v2180
        %3286 = vmatpush1.bf16.msra.mxu0 %v2179
        %3287 = vmatprep.subr.bf16.mxu0 %v2177
        %3288 = vmatpush1.bf16.msra.mxu0 %v2176
        %3289 = vmatprep.subr.bf16.mxu0 %v2174
        %3290 = vmatpush1.bf16.msra.mxu0 %v2173
        %3291 = vmatprep.subr.bf16.mxu0 %v2171
        %3292 = vmatpush1.bf16.msra.mxu0 %v2170
        %3293 = vmatprep.subr.bf16.mxu0 %v2216
        %3294 = vmatpush2.bf16.msra.mxu0 %v2215
        %3295 = vmatprep.subr.bf16.mxu0 %v2213
        %3296 = vmatpush2.bf16.msra.mxu0 %v2212
        %3297 = vmatprep.subr.bf16.mxu0 %v2210
        %3298 = vmatpush2.bf16.msra.mxu0 %v2209
        %3299 = vmatprep.subr.bf16.mxu0 %v2207
        %3300 = vmatpush2.bf16.msra.mxu0 %v2206
        %3301 = vmatprep.subr.bf16.mxu0 %v2204
        %3302 = vmatpush2.bf16.msra.mxu0 %v2203
        %3303 = vmatprep.subr.bf16.mxu0 %v2201
        %3304 = vmatpush2.bf16.msra.mxu0 %v2200
        %3305 = vmatprep.subr.bf16.mxu0 %v2198
        %3306 = vmatpush2.bf16.msra.mxu0 %v2197
        %3307 = vmatprep.subr.bf16.mxu0 %v2195
        %3308 = vmatpush2.bf16.msra.mxu0 %v2194
        %3309 = vmatprep.mubr.bf16.mxu0 %v1393
        %3310 = vmatmul.mubr.bf16.gmra.mxu0 %v1392
        %v3311 = vpop.f32.mrf.mxu0
        %v3312 = vadd.f32 %v2959, %v3311
        %v3313 = vpop.f32.mrf.mxu0
        %v3314 = vadd.f32 %v2961, %v3313
        %v3315 = vpop.f32.mrf.mxu0
        %v3316 = vadd.f32 %v2963, %v3315
        %v3317 = vpop.f32.mrf.mxu0
        %v3318 = vadd.f32 %v2965, %v3317
        %3319 = vmatprep.mubr.bf16.mxu0 %v1401
        %3320 = vmatmul.mubr.bf16.gmra.mxu0 %v1400
        %v3321 = vpop.f32.mrf.mxu0
        %v3322 = vadd.f32 %v2969, %v3321
        %v3323 = vpop.f32.mrf.mxu0
        %v3324 = vadd.f32 %v2971, %v3323
        %v3325 = vpop.f32.mrf.mxu0
        %v3326 = vadd.f32 %v2973, %v3325
        %v3327 = vpop.f32.mrf.mxu0
        %v3328 = vadd.f32 %v2975, %v3327
        %3329 = vmatprep.mubr.bf16.mxu0 %v1409
        %3330 = vmatmul.mubr.bf16.gmra.mxu0 %v1408
        %v3331 = vpop.f32.mrf.mxu0
        %v3332 = vadd.f32 %v2979, %v3331
        %v3333 = vpop.f32.mrf.mxu0
        %v3334 = vadd.f32 %v2981, %v3333
        %v3335 = vpop.f32.mrf.mxu0
        %v3336 = vadd.f32 %v2983, %v3335
        %v3337 = vpop.f32.mrf.mxu0
        %v3338 = vadd.f32 %v2985, %v3337
        %3339 = vmatprep.mubr.bf16.mxu0 %v1417
        %3340 = vmatmul.mubr.bf16.gmra.mxu0 %v1416
        %v3341 = vpop.f32.mrf.mxu0
        %v3342 = vadd.f32 %v2989, %v3341
        %v3343 = vpop.f32.mrf.mxu0
        %v3344 = vadd.f32 %v2991, %v3343
        %v3345 = vpop.f32.mrf.mxu0
        %v3346 = vadd.f32 %v2993, %v3345
        %v3347 = vpop.f32.mrf.mxu0
        %v3348 = vadd.f32 %v2995, %v3347
        %3349 = vmatprep.mubr.bf16.mxu0 %v1425
        %3350 = vmatmul.mubr.bf16.gmra.mxu0 %v1424
        %v3351 = vpop.f32.mrf.mxu0
        %v3352 = vadd.f32 %v2999, %v3351
        %v3353 = vpop.f32.mrf.mxu0
        %v3354 = vadd.f32 %v3001, %v3353
        %v3355 = vpop.f32.mrf.mxu0
        %v3356 = vadd.f32 %v3003, %v3355
        %v3357 = vpop.f32.mrf.mxu0
        %v3358 = vadd.f32 %v3005, %v3357
        %3359 = vmatprep.mubr.bf16.mxu0 %v1433
        %3360 = vmatmul.mubr.bf16.gmra.mxu0 %v1432
        %v3361 = vpop.f32.mrf.mxu0
        %v3362 = vadd.f32 %v3009, %v3361
        %v3363 = vpop.f32.mrf.mxu0
        %v3364 = vadd.f32 %v3011, %v3363
        %v3365 = vpop.f32.mrf.mxu0
        %v3366 = vadd.f32 %v3013, %v3365
        %v3367 = vpop.f32.mrf.mxu0
        %v3368 = vadd.f32 %v3015, %v3367
        %3369 = vmatprep.mubr.bf16.mxu0 %v1441
        %3370 = vmatmul.mubr.bf16.gmra.mxu0 %v1440
        %v3371 = vpop.f32.mrf.mxu0
        %v3372 = vadd.f32 %v3019, %v3371
        %v3373 = vpop.f32.mrf.mxu0
        %v3374 = vadd.f32 %v3021, %v3373
        %v3375 = vpop.f32.mrf.mxu0
        %v3376 = vadd.f32 %v3023, %v3375
        %v3377 = vpop.f32.mrf.mxu0
        %v3378 = vadd.f32 %v3025, %v3377
        %3379 = vmatprep.mubr.bf16.mxu0 %v1449
        %3380 = vmatmul.mubr.bf16.gmra.mxu0 %v1448
        %v3381 = vpop.f32.mrf.mxu0
        %v3382 = vadd.f32 %v3029, %v3381
        %v3383 = vpop.f32.mrf.mxu0
        %v3384 = vadd.f32 %v3031, %v3383
        %v3385 = vpop.f32.mrf.mxu0
        %v3386 = vadd.f32 %v3033, %v3385
        %v3387 = vpop.f32.mrf.mxu0
        %v3388 = vadd.f32 %v3035, %v3387
        %3389 = vmatprep.mubr.bf16.mxu0 %v1457
        %3390 = vmatmul.mubr.bf16.gmra.mxu0 %v1456
        %v3391 = vpop.f32.mrf.mxu0
        %v3392 = vadd.f32 %v3039, %v3391
        %v3393 = vpop.f32.mrf.mxu0
        %v3394 = vadd.f32 %v3041, %v3393
        %v3395 = vpop.f32.mrf.mxu0
        %v3396 = vadd.f32 %v3043, %v3395
        %v3397 = vpop.f32.mrf.mxu0
        %v3398 = vadd.f32 %v3045, %v3397
        %3399 = vmatprep.mubr.bf16.mxu0 %v1465
        %3400 = vmatmul.mubr.bf16.gmra.mxu0 %v1464
        %v3401 = vpop.f32.mrf.mxu0
        %v3402 = vadd.f32 %v3049, %v3401
        %v3403 = vpop.f32.mrf.mxu0
        %v3404 = vadd.f32 %v3051, %v3403
        %v3405 = vpop.f32.mrf.mxu0
        %v3406 = vadd.f32 %v3053, %v3405
        %v3407 = vpop.f32.mrf.mxu0
        %v3408 = vadd.f32 %v3055, %v3407
        %3409 = vmatprep.mubr.bf16.mxu0 %v1473
        %3410 = vmatmul.mubr.bf16.gmra.mxu0 %v1472
        %v3411 = vpop.f32.mrf.mxu0
        %v3412 = vadd.f32 %v3059, %v3411
        %v3413 = vpop.f32.mrf.mxu0
        %v3414 = vadd.f32 %v3061, %v3413
        %v3415 = vpop.f32.mrf.mxu0
        %v3416 = vadd.f32 %v3063, %v3415
        %v3417 = vpop.f32.mrf.mxu0
        %v3418 = vadd.f32 %v3065, %v3417
        %3419 = vmatprep.mubr.bf16.mxu0 %v1481
        %3420 = vmatmul.mubr.bf16.gmra.mxu0 %v1480
        %v3421 = vpop.f32.mrf.mxu0
        %v3422 = vadd.f32 %v3069, %v3421
        %v3423 = vpop.f32.mrf.mxu0
        %v3424 = vadd.f32 %v3071, %v3423
        %v3425 = vpop.f32.mrf.mxu0
        %v3426 = vadd.f32 %v3073, %v3425
        %v3427 = vpop.f32.mrf.mxu0
        %v3428 = vadd.f32 %v3075, %v3427
        %3429 = vmatprep.mubr.bf16.mxu0 %v1489
        %3430 = vmatmul.mubr.bf16.gmra.mxu0 %v1488
        %v3431 = vpop.f32.mrf.mxu0
        %v3432 = vadd.f32 %v3079, %v3431
        %v3433 = vpop.f32.mrf.mxu0
        %v3434 = vadd.f32 %v3081, %v3433
        %v3435 = vpop.f32.mrf.mxu0
        %v3436 = vadd.f32 %v3083, %v3435
        %v3437 = vpop.f32.mrf.mxu0
        %v3438 = vadd.f32 %v3085, %v3437
        %3439 = vmatprep.mubr.bf16.mxu0 %v1497
        %3440 = vmatmul.mubr.bf16.gmra.mxu0 %v1496
        %v3441 = vpop.f32.mrf.mxu0
        %v3442 = vadd.f32 %v3089, %v3441
        %v3443 = vpop.f32.mrf.mxu0
        %v3444 = vadd.f32 %v3091, %v3443
        %v3445 = vpop.f32.mrf.mxu0
        %v3446 = vadd.f32 %v3093, %v3445
        %v3447 = vpop.f32.mrf.mxu0
        %v3448 = vadd.f32 %v3095, %v3447
        %3449 = vmatprep.mubr.bf16.mxu0 %v1505
        %3450 = vmatmul.mubr.bf16.gmra.mxu0 %v1504
        %v3451 = vpop.f32.mrf.mxu0
        %v3452 = vadd.f32 %v3099, %v3451
        %v3453 = vpop.f32.mrf.mxu0
        %v3454 = vadd.f32 %v3101, %v3453
        %v3455 = vpop.f32.mrf.mxu0
        %v3456 = vadd.f32 %v3103, %v3455
        %v3457 = vpop.f32.mrf.mxu0
        %v3458 = vadd.f32 %v3105, %v3457
        %3459 = vmatprep.mubr.bf16.mxu0 %v1513
        %3460 = vmatmul.mubr.bf16.gmra.mxu0 %v1512
        %v3461 = vpop.f32.mrf.mxu0
        %v3462 = vadd.f32 %v3109, %v3461
        %v3463 = vpop.f32.mrf.mxu0
        %v3464 = vadd.f32 %v3111, %v3463
        %v3465 = vpop.f32.mrf.mxu0
        %v3466 = vadd.f32 %v3113, %v3465
        %v3467 = vpop.f32.mrf.mxu0
        %v3468 = vadd.f32 %v3115, %v3467
        %3469 = vmatprep.mubr.bf16.mxu0 %v1521
        %3470 = vmatmul.mubr.bf16.gmra.mxu0 %v1520
        %v3471 = vpop.f32.mrf.mxu0
        %v3472 = vadd.f32 %v3119, %v3471
        %v3473 = vpop.f32.mrf.mxu0
        %v3474 = vadd.f32 %v3121, %v3473
        %v3475 = vpop.f32.mrf.mxu0
        %v3476 = vadd.f32 %v3123, %v3475
        %v3477 = vpop.f32.mrf.mxu0
        %v3478 = vadd.f32 %v3125, %v3477
        %3479 = vmatprep.mubr.bf16.mxu0 %v1529
        %3480 = vmatmul.mubr.bf16.gmra.mxu0 %v1528
        %v3481 = vpop.f32.mrf.mxu0
        %v3482 = vadd.f32 %v3129, %v3481
        %v3483 = vpop.f32.mrf.mxu0
        %v3484 = vadd.f32 %v3131, %v3483
        %v3485 = vpop.f32.mrf.mxu0
        %v3486 = vadd.f32 %v3133, %v3485
        %v3487 = vpop.f32.mrf.mxu0
        %v3488 = vadd.f32 %v3135, %v3487
        %3489 = vmatprep.mubr.bf16.mxu0 %v1537
        %3490 = vmatmul.mubr.bf16.gmra.mxu0 %v1536
        %v3491 = vpop.f32.mrf.mxu0
        %v3492 = vadd.f32 %v3139, %v3491
        %v3493 = vpop.f32.mrf.mxu0
        %v3494 = vadd.f32 %v3141, %v3493
        %v3495 = vpop.f32.mrf.mxu0
        %v3496 = vadd.f32 %v3143, %v3495
        %v3497 = vpop.f32.mrf.mxu0
        %v3498 = vadd.f32 %v3145, %v3497
        %3499 = vmatprep.mubr.bf16.mxu0 %v1545
        %3500 = vmatmul.mubr.bf16.gmra.mxu0 %v1544
        %v3501 = vpop.f32.mrf.mxu0
        %v3502 = vadd.f32 %v3149, %v3501
        %v3503 = vpop.f32.mrf.mxu0
        %v3504 = vadd.f32 %v3151, %v3503
        %v3505 = vpop.f32.mrf.mxu0
        %v3506 = vadd.f32 %v3153, %v3505
        %v3507 = vpop.f32.mrf.mxu0
        %v3508 = vadd.f32 %v3155, %v3507
        %3509 = vmatprep.mubr.bf16.mxu0 %v1553
        %3510 = vmatmul.mubr.bf16.gmra.mxu0 %v1552
        %v3511 = vpop.f32.mrf.mxu0
        %v3512 = vadd.f32 %v3159, %v3511
        %v3513 = vpop.f32.mrf.mxu0
        %v3514 = vadd.f32 %v3161, %v3513
        %v3515 = vpop.f32.mrf.mxu0
        %v3516 = vadd.f32 %v3163, %v3515
        %v3517 = vpop.f32.mrf.mxu0
        %v3518 = vadd.f32 %v3165, %v3517
        %3519 = vmatprep.mubr.bf16.mxu0 %v1561
        %3520 = vmatmul.mubr.bf16.gmra.mxu0 %v1560
        %v3521 = vpop.f32.mrf.mxu0
        %v3522 = vadd.f32 %v3169, %v3521
        %v3523 = vpop.f32.mrf.mxu0
        %v3524 = vadd.f32 %v3171, %v3523
        %v3525 = vpop.f32.mrf.mxu0
        %v3526 = vadd.f32 %v3173, %v3525
        %v3527 = vpop.f32.mrf.mxu0
        %v3528 = vadd.f32 %v3175, %v3527
        %3529 = vmatprep.mubr.bf16.mxu0 %v1569
        %3530 = vmatmul.mubr.bf16.gmra.mxu0 %v1568
        %v3531 = vpop.f32.mrf.mxu0
        %v3532 = vadd.f32 %v3179, %v3531
        %v3533 = vpop.f32.mrf.mxu0
        %v3534 = vadd.f32 %v3181, %v3533
        %v3535 = vpop.f32.mrf.mxu0
        %v3536 = vadd.f32 %v3183, %v3535
        %v3537 = vpop.f32.mrf.mxu0
        %v3538 = vadd.f32 %v3185, %v3537
        %3539 = vmatprep.mubr.bf16.mxu0 %v1577
        %3540 = vmatmul.mubr.bf16.gmra.mxu0 %v1576
        %v3541 = vpop.f32.mrf.mxu0
        %v3542 = vadd.f32 %v3189, %v3541
        %v3543 = vpop.f32.mrf.mxu0
        %v3544 = vadd.f32 %v3191, %v3543
        %v3545 = vpop.f32.mrf.mxu0
        %v3546 = vadd.f32 %v3193, %v3545
        %v3547 = vpop.f32.mrf.mxu0
        %v3548 = vadd.f32 %v3195, %v3547
        %3549 = vmatprep.mubr.bf16.mxu0 %v1585
        %3550 = vmatmul.mubr.bf16.gmra.mxu0 %v1584
        %v3551 = vpop.f32.mrf.mxu0
        %v3552 = vadd.f32 %v3199, %v3551
        %v3553 = vpop.f32.mrf.mxu0
        %v3554 = vadd.f32 %v3201, %v3553
        %v3555 = vpop.f32.mrf.mxu0
        %v3556 = vadd.f32 %v3203, %v3555
        %v3557 = vpop.f32.mrf.mxu0
        %v3558 = vadd.f32 %v3205, %v3557
        %3559 = vmatprep.mubr.bf16.mxu0 %v1593
        %3560 = vmatmul.mubr.bf16.gmra.mxu0 %v1592
        %v3561 = vpop.f32.mrf.mxu0
        %v3562 = vadd.f32 %v3209, %v3561
        %v3563 = vpop.f32.mrf.mxu0
        %v3564 = vadd.f32 %v3211, %v3563
        %v3565 = vpop.f32.mrf.mxu0
        %v3566 = vadd.f32 %v3213, %v3565
        %v3567 = vpop.f32.mrf.mxu0
        %v3568 = vadd.f32 %v3215, %v3567
        %3569 = vmatprep.mubr.bf16.mxu0 %v1601
        %3570 = vmatmul.mubr.bf16.gmra.mxu0 %v1600
        %v3571 = vpop.f32.mrf.mxu0
        %v3572 = vadd.f32 %v3219, %v3571
        %v3573 = vpop.f32.mrf.mxu0
        %v3574 = vadd.f32 %v3221, %v3573
        %v3575 = vpop.f32.mrf.mxu0
        %v3576 = vadd.f32 %v3223, %v3575
        %v3577 = vpop.f32.mrf.mxu0
        %v3578 = vadd.f32 %v3225, %v3577
        %3579 = vmatprep.mubr.bf16.mxu0 %v1609
        %3580 = vmatmul.mubr.bf16.gmra.mxu0 %v1608
        %v3581 = vpop.f32.mrf.mxu0
        %v3582 = vadd.f32 %v3229, %v3581
        %v3583 = vpop.f32.mrf.mxu0
        %v3584 = vadd.f32 %v3231, %v3583
        %v3585 = vpop.f32.mrf.mxu0
        %v3586 = vadd.f32 %v3233, %v3585
        %v3587 = vpop.f32.mrf.mxu0
        %v3588 = vadd.f32 %v3235, %v3587
        %3589 = vmatprep.mubr.bf16.mxu0 %v1617
        %3590 = vmatmul.mubr.bf16.gmra.mxu0 %v1616
        %v3591 = vpop.f32.mrf.mxu0
        %v3592 = vadd.f32 %v3239, %v3591
        %v3593 = vpop.f32.mrf.mxu0
        %v3594 = vadd.f32 %v3241, %v3593
        %v3595 = vpop.f32.mrf.mxu0
        %v3596 = vadd.f32 %v3243, %v3595
        %v3597 = vpop.f32.mrf.mxu0
        %v3598 = vadd.f32 %v3245, %v3597
        %3599 = vmatprep.mubr.bf16.mxu0 %v1625
        %3600 = vmatmul.mubr.bf16.gmra.mxu0 %v1624
        %v3601 = vpop.f32.mrf.mxu0
        %v3602 = vadd.f32 %v3249, %v3601
        %v3603 = vpop.f32.mrf.mxu0
        %v3604 = vadd.f32 %v3251, %v3603
        %v3605 = vpop.f32.mrf.mxu0
        %v3606 = vadd.f32 %v3253, %v3605
        %v3607 = vpop.f32.mrf.mxu0
        %v3608 = vadd.f32 %v3255, %v3607
        %3609 = vmatprep.mubr.bf16.mxu0 %v1633
        %3610 = vmatmul.mubr.bf16.gmra.mxu0 %v1632
        %v3611 = vpop.f32.mrf.mxu0
        %v3612 = vadd.f32 %v3259, %v3611
        %v3613 = vpop.f32.mrf.mxu0
        %v3614 = vadd.f32 %v3261, %v3613
        %v3615 = vpop.f32.mrf.mxu0
        %v3616 = vadd.f32 %v3263, %v3615
        %v3617 = vpop.f32.mrf.mxu0
        %v3618 = vadd.f32 %v3265, %v3617
        %3619 = vmatprep.mubr.bf16.mxu0 %v1641
        %3620 = vmatmul.mubr.bf16.gmra.mxu0 %v1640
        %v3621 = vpop.f32.mrf.mxu0
        %v3622 = vadd.f32 %v3269, %v3621
        %v3623 = vpop.f32.mrf.mxu0
        %v3624 = vadd.f32 %v3271, %v3623
        %v3625 = vpop.f32.mrf.mxu0
        %v3626 = vadd.f32 %v3273, %v3625
        %v3627 = vpop.f32.mrf.mxu0
        %v3628 = vadd.f32 %v3275, %v3627
        %3629 = vdwg.mxu0
        %3630 = vmatprep.subr.bf16.mxu0 0
        %3631 = vmatpush1.bf16.msra.mxu0 %v2049
        %3632 = vmatprep.subr.bf16.mxu0 0
        %3633 = vmatpush1.bf16.msra.mxu0 %v2046
        %3634 = vmatprep.subr.bf16.mxu0 0
        %3635 = vmatpush1.bf16.msra.mxu0 %v2043
        %3636 = vmatprep.subr.bf16.mxu0 0
        %3637 = vmatpush1.bf16.msra.mxu0 %v2040
        %3638 = vmatprep.subr.bf16.mxu0 0
        %3639 = vmatpush1.bf16.msra.mxu0 %v2037
        %3640 = vmatprep.subr.bf16.mxu0 0
        %3641 = vmatpush1.bf16.msra.mxu0 %v2034
        %3642 = vmatprep.subr.bf16.mxu0 0
        %3643 = vmatpush1.bf16.msra.mxu0 %v2031
        %3644 = vmatprep.subr.bf16.mxu0 0
        %3645 = vmatpush1.bf16.msra.mxu0 %v2028
        %3646 = vmatprep.subr.bf16.mxu0 0
        %3647 = vmatpush2.bf16.msra.mxu0 %v2073
        %3648 = vmatprep.subr.bf16.mxu0 0
        %3649 = vmatpush2.bf16.msra.mxu0 %v2070
        %3650 = vmatprep.subr.bf16.mxu0 0
        %3651 = vmatpush2.bf16.msra.mxu0 %v2067
        %3652 = vmatprep.subr.bf16.mxu0 0
        %3653 = vmatpush2.bf16.msra.mxu0 %v2064
        %3654 = vmatprep.subr.bf16.mxu0 0
        %3655 = vmatpush2.bf16.msra.mxu0 %v2061
        %3656 = vmatprep.subr.bf16.mxu0 0
        %3657 = vmatpush2.bf16.msra.mxu0 %v2058
        %3658 = vmatprep.subr.bf16.mxu0 0
        %3659 = vmatpush2.bf16.msra.mxu0 %v2055
        %3660 = vmatprep.subr.bf16.mxu0 0
        %3661 = vmatpush2.bf16.msra.mxu0 %v2052
        %3662 = vmatprep.mubr.bf16.mxu0 %v1387
        %3663 = vmatmul.mubr.bf16.gmra.mxu0 %v1386
        %v3664 = vpop.f32.mrf.mxu0
        %v3665 = vadd.f32 0.0, %v3664
        %v3666 = vpop.f32.mrf.mxu0
        %v3667 = vpop.f32.mrf.mxu0
        %v3668 = vadd.f32 0.0, %v3667
        %v3669 = vpop.f32.mrf.mxu0
        %3670 = vmatprep.mubr.bf16.mxu0 %v1395
        %3671 = vmatmul.mubr.bf16.gmra.mxu0 %v1394
        %v3672 = vpop.f32.mrf.mxu0
        %v3673 = vadd.f32 0.0, %v3672
        %v3674 = vpop.f32.mrf.mxu0
        %v3675 = vpop.f32.mrf.mxu0
        %v3676 = vadd.f32 0.0, %v3675
        %v3677 = vpop.f32.mrf.mxu0
        %3678 = vmatprep.mubr.bf16.mxu0 %v1403
        %3679 = vmatmul.mubr.bf16.gmra.mxu0 %v1402
        %v3680 = vpop.f32.mrf.mxu0
        %v3681 = vadd.f32 0.0, %v3680
        %v3682 = vpop.f32.mrf.mxu0
        %v3683 = vpop.f32.mrf.mxu0
        %v3684 = vadd.f32 0.0, %v3683
        %v3685 = vpop.f32.mrf.mxu0
        %3686 = vmatprep.mubr.bf16.mxu0 %v1411
        %3687 = vmatmul.mubr.bf16.gmra.mxu0 %v1410
        %v3688 = vpop.f32.mrf.mxu0
        %v3689 = vadd.f32 0.0, %v3688
        %v3690 = vpop.f32.mrf.mxu0
        %v3691 = vpop.f32.mrf.mxu0
        %v3692 = vadd.f32 0.0, %v3691
        %v3693 = vpop.f32.mrf.mxu0
        %3694 = vmatprep.mubr.bf16.mxu0 %v1419
        %3695 = vmatmul.mubr.bf16.gmra.mxu0 %v1418
        %v3696 = vpop.f32.mrf.mxu0
        %v3697 = vadd.f32 0.0, %v3696
        %v3698 = vpop.f32.mrf.mxu0
        %v3699 = vpop.f32.mrf.mxu0
        %v3700 = vadd.f32 0.0, %v3699
        %v3701 = vpop.f32.mrf.mxu0
        %3702 = vmatprep.mubr.bf16.mxu0 %v1427
        %3703 = vmatmul.mubr.bf16.gmra.mxu0 %v1426
        %v3704 = vpop.f32.mrf.mxu0
        %v3705 = vadd.f32 0.0, %v3704
        %v3706 = vpop.f32.mrf.mxu0
        %v3707 = vpop.f32.mrf.mxu0
        %v3708 = vadd.f32 0.0, %v3707
        %v3709 = vpop.f32.mrf.mxu0
        %3710 = vmatprep.mubr.bf16.mxu0 %v1435
        %3711 = vmatmul.mubr.bf16.gmra.mxu0 %v1434
        %v3712 = vpop.f32.mrf.mxu0
        %v3713 = vadd.f32 0.0, %v3712
        %v3714 = vpop.f32.mrf.mxu0
        %v3715 = vpop.f32.mrf.mxu0
        %v3716 = vadd.f32 0.0, %v3715
        %v3717 = vpop.f32.mrf.mxu0
        %3718 = vmatprep.mubr.bf16.mxu0 %v1443
        %3719 = vmatmul.mubr.bf16.gmra.mxu0 %v1442
        %v3720 = vpop.f32.mrf.mxu0
        %v3721 = vadd.f32 0.0, %v3720
        %v3722 = vpop.f32.mrf.mxu0
        %v3723 = vpop.f32.mrf.mxu0
        %v3724 = vadd.f32 0.0, %v3723
        %v3725 = vpop.f32.mrf.mxu0
        %3726 = vmatprep.mubr.bf16.mxu0 %v1451
        %3727 = vmatmul.mubr.bf16.gmra.mxu0 %v1450
        %v3728 = vpop.f32.mrf.mxu0
        %v3729 = vadd.f32 0.0, %v3728
        %v3730 = vpop.f32.mrf.mxu0
        %v3731 = vpop.f32.mrf.mxu0
        %v3732 = vadd.f32 0.0, %v3731
        %v3733 = vpop.f32.mrf.mxu0
        %3734 = vmatprep.mubr.bf16.mxu0 %v1459
        %3735 = vmatmul.mubr.bf16.gmra.mxu0 %v1458
        %v3736 = vpop.f32.mrf.mxu0
        %v3737 = vadd.f32 0.0, %v3736
        %v3738 = vpop.f32.mrf.mxu0
        %v3739 = vpop.f32.mrf.mxu0
        %v3740 = vadd.f32 0.0, %v3739
        %v3741 = vpop.f32.mrf.mxu0
        %3742 = vmatprep.mubr.bf16.mxu0 %v1467
        %3743 = vmatmul.mubr.bf16.gmra.mxu0 %v1466
        %v3744 = vpop.f32.mrf.mxu0
        %v3745 = vadd.f32 0.0, %v3744
        %v3746 = vpop.f32.mrf.mxu0
        %v3747 = vpop.f32.mrf.mxu0
        %v3748 = vadd.f32 0.0, %v3747
        %v3749 = vpop.f32.mrf.mxu0
        %3750 = vmatprep.mubr.bf16.mxu0 %v1475
        %3751 = vmatmul.mubr.bf16.gmra.mxu0 %v1474
        %v3752 = vpop.f32.mrf.mxu0
        %v3753 = vadd.f32 0.0, %v3752
        %v3754 = vpop.f32.mrf.mxu0
        %v3755 = vpop.f32.mrf.mxu0
        %v3756 = vadd.f32 0.0, %v3755
        %v3757 = vpop.f32.mrf.mxu0
        %3758 = vmatprep.mubr.bf16.mxu0 %v1483
        %3759 = vmatmul.mubr.bf16.gmra.mxu0 %v1482
        %v3760 = vpop.f32.mrf.mxu0
        %v3761 = vadd.f32 0.0, %v3760
        %v3762 = vpop.f32.mrf.mxu0
        %v3763 = vpop.f32.mrf.mxu0
        %v3764 = vadd.f32 0.0, %v3763
        %v3765 = vpop.f32.mrf.mxu0
        %3766 = vmatprep.mubr.bf16.mxu0 %v1491
        %3767 = vmatmul.mubr.bf16.gmra.mxu0 %v1490
        %v3768 = vpop.f32.mrf.mxu0
        %v3769 = vadd.f32 0.0, %v3768
        %v3770 = vpop.f32.mrf.mxu0
        %v3771 = vpop.f32.mrf.mxu0
        %v3772 = vadd.f32 0.0, %v3771
        %v3773 = vpop.f32.mrf.mxu0
        %3774 = vmatprep.mubr.bf16.mxu0 %v1499
        %3775 = vmatmul.mubr.bf16.gmra.mxu0 %v1498
        %v3776 = vpop.f32.mrf.mxu0
        %v3777 = vadd.f32 0.0, %v3776
        %v3778 = vpop.f32.mrf.mxu0
        %v3779 = vpop.f32.mrf.mxu0
        %v3780 = vadd.f32 0.0, %v3779
        %v3781 = vpop.f32.mrf.mxu0
        %3782 = vmatprep.mubr.bf16.mxu0 %v1507
        %3783 = vmatmul.mubr.bf16.gmra.mxu0 %v1506
        %v3784 = vpop.f32.mrf.mxu0
        %v3785 = vadd.f32 0.0, %v3784
        %v3786 = vpop.f32.mrf.mxu0
        %v3787 = vpop.f32.mrf.mxu0
        %v3788 = vadd.f32 0.0, %v3787
        %v3789 = vpop.f32.mrf.mxu0
        %3790 = vmatprep.mubr.bf16.mxu0 %v1515
        %3791 = vmatmul.mubr.bf16.gmra.mxu0 %v1514
        %v3792 = vpop.f32.mrf.mxu0
        %v3793 = vadd.f32 0.0, %v3792
        %v3794 = vpop.f32.mrf.mxu0
        %v3795 = vpop.f32.mrf.mxu0
        %v3796 = vadd.f32 0.0, %v3795
        %v3797 = vpop.f32.mrf.mxu0
        %3798 = vmatprep.mubr.bf16.mxu0 %v1523
        %3799 = vmatmul.mubr.bf16.gmra.mxu0 %v1522
        %v3800 = vpop.f32.mrf.mxu0
        %v3801 = vadd.f32 0.0, %v3800
        %v3802 = vpop.f32.mrf.mxu0
        %v3803 = vpop.f32.mrf.mxu0
        %v3804 = vadd.f32 0.0, %v3803
        %v3805 = vpop.f32.mrf.mxu0
        %3806 = vmatprep.mubr.bf16.mxu0 %v1531
        %3807 = vmatmul.mubr.bf16.gmra.mxu0 %v1530
        %v3808 = vpop.f32.mrf.mxu0
        %v3809 = vadd.f32 0.0, %v3808
        %v3810 = vpop.f32.mrf.mxu0
        %v3811 = vpop.f32.mrf.mxu0
        %v3812 = vadd.f32 0.0, %v3811
        %v3813 = vpop.f32.mrf.mxu0
        %3814 = vmatprep.mubr.bf16.mxu0 %v1539
        %3815 = vmatmul.mubr.bf16.gmra.mxu0 %v1538
        %v3816 = vpop.f32.mrf.mxu0
        %v3817 = vadd.f32 0.0, %v3816
        %v3818 = vpop.f32.mrf.mxu0
        %v3819 = vpop.f32.mrf.mxu0
        %v3820 = vadd.f32 0.0, %v3819
        %v3821 = vpop.f32.mrf.mxu0
        %3822 = vmatprep.mubr.bf16.mxu0 %v1547
        %3823 = vmatmul.mubr.bf16.gmra.mxu0 %v1546
        %v3824 = vpop.f32.mrf.mxu0
        %v3825 = vadd.f32 0.0, %v3824
        %v3826 = vpop.f32.mrf.mxu0
        %v3827 = vpop.f32.mrf.mxu0
        %v3828 = vadd.f32 0.0, %v3827
        %v3829 = vpop.f32.mrf.mxu0
        %3830 = vmatprep.mubr.bf16.mxu0 %v1555
        %3831 = vmatmul.mubr.bf16.gmra.mxu0 %v1554
        %v3832 = vpop.f32.mrf.mxu0
        %v3833 = vadd.f32 0.0, %v3832
        %v3834 = vpop.f32.mrf.mxu0
        %v3835 = vpop.f32.mrf.mxu0
        %v3836 = vadd.f32 0.0, %v3835
        %v3837 = vpop.f32.mrf.mxu0
        %3838 = vmatprep.mubr.bf16.mxu0 %v1563
        %3839 = vmatmul.mubr.bf16.gmra.mxu0 %v1562
        %v3840 = vpop.f32.mrf.mxu0
        %v3841 = vadd.f32 0.0, %v3840
        %v3842 = vpop.f32.mrf.mxu0
        %v3843 = vpop.f32.mrf.mxu0
        %v3844 = vadd.f32 0.0, %v3843
        %v3845 = vpop.f32.mrf.mxu0
        %3846 = vmatprep.mubr.bf16.mxu0 %v1571
        %3847 = vmatmul.mubr.bf16.gmra.mxu0 %v1570
        %v3848 = vpop.f32.mrf.mxu0
        %v3849 = vadd.f32 0.0, %v3848
        %v3850 = vpop.f32.mrf.mxu0
        %v3851 = vpop.f32.mrf.mxu0
        %v3852 = vadd.f32 0.0, %v3851
        %v3853 = vpop.f32.mrf.mxu0
        %3854 = vmatprep.mubr.bf16.mxu0 %v1579
        %3855 = vmatmul.mubr.bf16.gmra.mxu0 %v1578
        %v3856 = vpop.f32.mrf.mxu0
        %v3857 = vadd.f32 0.0, %v3856
        %v3858 = vpop.f32.mrf.mxu0
        %v3859 = vpop.f32.mrf.mxu0
        %v3860 = vadd.f32 0.0, %v3859
        %v3861 = vpop.f32.mrf.mxu0
        %3862 = vmatprep.mubr.bf16.mxu0 %v1587
        %3863 = vmatmul.mubr.bf16.gmra.mxu0 %v1586
        %v3864 = vpop.f32.mrf.mxu0
        %v3865 = vadd.f32 0.0, %v3864
        %v3866 = vpop.f32.mrf.mxu0
        %v3867 = vpop.f32.mrf.mxu0
        %v3868 = vadd.f32 0.0, %v3867
        %v3869 = vpop.f32.mrf.mxu0
        %3870 = vmatprep.mubr.bf16.mxu0 %v1595
        %3871 = vmatmul.mubr.bf16.gmra.mxu0 %v1594
        %v3872 = vpop.f32.mrf.mxu0
        %v3873 = vadd.f32 0.0, %v3872
        %v3874 = vpop.f32.mrf.mxu0
        %v3875 = vpop.f32.mrf.mxu0
        %v3876 = vadd.f32 0.0, %v3875
        %v3877 = vpop.f32.mrf.mxu0
        %3878 = vmatprep.mubr.bf16.mxu0 %v1603
        %3879 = vmatmul.mubr.bf16.gmra.mxu0 %v1602
        %v3880 = vpop.f32.mrf.mxu0
        %v3881 = vadd.f32 0.0, %v3880
        %v3882 = vpop.f32.mrf.mxu0
        %v3883 = vpop.f32.mrf.mxu0
        %v3884 = vadd.f32 0.0, %v3883
        %v3885 = vpop.f32.mrf.mxu0
        %3886 = vmatprep.mubr.bf16.mxu0 %v1611
        %3887 = vmatmul.mubr.bf16.gmra.mxu0 %v1610
        %v3888 = vpop.f32.mrf.mxu0
        %v3889 = vadd.f32 0.0, %v3888
        %v3890 = vpop.f32.mrf.mxu0
        %v3891 = vpop.f32.mrf.mxu0
        %v3892 = vadd.f32 0.0, %v3891
        %v3893 = vpop.f32.mrf.mxu0
        %3894 = vmatprep.mubr.bf16.mxu0 %v1619
        %3895 = vmatmul.mubr.bf16.gmra.mxu0 %v1618
        %v3896 = vpop.f32.mrf.mxu0
        %v3897 = vadd.f32 0.0, %v3896
        %v3898 = vpop.f32.mrf.mxu0
        %v3899 = vpop.f32.mrf.mxu0
        %v3900 = vadd.f32 0.0, %v3899
        %v3901 = vpop.f32.mrf.mxu0
        %3902 = vmatprep.mubr.bf16.mxu0 %v1627
        %3903 = vmatmul.mubr.bf16.gmra.mxu0 %v1626
        %v3904 = vpop.f32.mrf.mxu0
        %v3905 = vadd.f32 0.0, %v3904
        %v3906 = vpop.f32.mrf.mxu0
        %v3907 = vpop.f32.mrf.mxu0
        %v3908 = vadd.f32 0.0, %v3907
        %v3909 = vpop.f32.mrf.mxu0
        %3910 = vmatprep.mubr.bf16.mxu0 %v1635
        %3911 = vmatmul.mubr.bf16.gmra.mxu0 %v1634
        %v3912 = vpop.f32.mrf.mxu0
        %v3913 = vadd.f32 0.0, %v3912
        %v3914 = vpop.f32.mrf.mxu0
        %v3915 = vpop.f32.mrf.mxu0
        %v3916 = vadd.f32 0.0, %v3915
        %v3917 = vpop.f32.mrf.mxu0
        %3918 = vdwg.mxu0
        %3919 = vmatprep.subr.bf16.mxu0 0
        %3920 = vmatpush1.bf16.msra.mxu0 %v2097
        %3921 = vmatprep.subr.bf16.mxu0 0
        %3922 = vmatpush1.bf16.msra.mxu0 %v2094
        %3923 = vmatprep.subr.bf16.mxu0 0
        %3924 = vmatpush1.bf16.msra.mxu0 %v2091
        %3925 = vmatprep.subr.bf16.mxu0 0
        %3926 = vmatpush1.bf16.msra.mxu0 %v2088
        %3927 = vmatprep.subr.bf16.mxu0 0
        %3928 = vmatpush1.bf16.msra.mxu0 %v2085
        %3929 = vmatprep.subr.bf16.mxu0 0
        %3930 = vmatpush1.bf16.msra.mxu0 %v2082
        %3931 = vmatprep.subr.bf16.mxu0 0
        %3932 = vmatpush1.bf16.msra.mxu0 %v2079
        %3933 = vmatprep.subr.bf16.mxu0 0
        %3934 = vmatpush1.bf16.msra.mxu0 %v2076
        %3935 = vmatprep.subr.bf16.mxu0 0
        %3936 = vmatpush2.bf16.msra.mxu0 %v2121
        %3937 = vmatprep.subr.bf16.mxu0 0
        %3938 = vmatpush2.bf16.msra.mxu0 %v2118
        %3939 = vmatprep.subr.bf16.mxu0 0
        %3940 = vmatpush2.bf16.msra.mxu0 %v2115
        %3941 = vmatprep.subr.bf16.mxu0 0
        %3942 = vmatpush2.bf16.msra.mxu0 %v2112
        %3943 = vmatprep.subr.bf16.mxu0 0
        %3944 = vmatpush2.bf16.msra.mxu0 %v2109
        %3945 = vmatprep.subr.bf16.mxu0 0
        %3946 = vmatpush2.bf16.msra.mxu0 %v2106
        %3947 = vmatprep.subr.bf16.mxu0 0
        %3948 = vmatpush2.bf16.msra.mxu0 %v2103
        %3949 = vmatprep.subr.bf16.mxu0 0
        %3950 = vmatpush2.bf16.msra.mxu0 %v2100
        %3951 = vmatprep.mubr.bf16.mxu0 %v1389
        %3952 = vmatmul.mubr.bf16.gmra.mxu0 %v1388
        %v3953 = vpop.f32.mrf.mxu0
        %v3954 = vadd.f32 %v3665, %v3953
        %v3955 = vpop.f32.mrf.mxu0
        %v3956 = vpop.f32.mrf.mxu0
        %v3957 = vadd.f32 %v3668, %v3956
        %v3958 = vpop.f32.mrf.mxu0
        %3959 = vmatprep.mubr.bf16.mxu0 %v1397
        %3960 = vmatmul.mubr.bf16.gmra.mxu0 %v1396
        %v3961 = vpop.f32.mrf.mxu0
        %v3962 = vadd.f32 %v3673, %v3961
        %v3963 = vpop.f32.mrf.mxu0
        %v3964 = vpop.f32.mrf.mxu0
        %v3965 = vadd.f32 %v3676, %v3964
        %v3966 = vpop.f32.mrf.mxu0
        %3967 = vmatprep.mubr.bf16.mxu0 %v1405
        %3968 = vmatmul.mubr.bf16.gmra.mxu0 %v1404
        %v3969 = vpop.f32.mrf.mxu0
        %v3970 = vadd.f32 %v3681, %v3969
        %v3971 = vpop.f32.mrf.mxu0
        %v3972 = vpop.f32.mrf.mxu0
        %v3973 = vadd.f32 %v3684, %v3972
        %v3974 = vpop.f32.mrf.mxu0
        %3975 = vmatprep.mubr.bf16.mxu0 %v1413
        %3976 = vmatmul.mubr.bf16.gmra.mxu0 %v1412
        %v3977 = vpop.f32.mrf.mxu0
        %v3978 = vadd.f32 %v3689, %v3977
        %v3979 = vpop.f32.mrf.mxu0
        %v3980 = vpop.f32.mrf.mxu0
        %v3981 = vadd.f32 %v3692, %v3980
        %v3982 = vpop.f32.mrf.mxu0
        %3983 = vmatprep.mubr.bf16.mxu0 %v1421
        %3984 = vmatmul.mubr.bf16.gmra.mxu0 %v1420
        %v3985 = vpop.f32.mrf.mxu0
        %v3986 = vadd.f32 %v3697, %v3985
        %v3987 = vpop.f32.mrf.mxu0
        %v3988 = vpop.f32.mrf.mxu0
        %v3989 = vadd.f32 %v3700, %v3988
        %v3990 = vpop.f32.mrf.mxu0
        %3991 = vmatprep.mubr.bf16.mxu0 %v1429
        %3992 = vmatmul.mubr.bf16.gmra.mxu0 %v1428
        %v3993 = vpop.f32.mrf.mxu0
        %v3994 = vadd.f32 %v3705, %v3993
        %v3995 = vpop.f32.mrf.mxu0
        %v3996 = vpop.f32.mrf.mxu0
        %v3997 = vadd.f32 %v3708, %v3996
        %v3998 = vpop.f32.mrf.mxu0
        %3999 = vmatprep.mubr.bf16.mxu0 %v1437
        %4000 = vmatmul.mubr.bf16.gmra.mxu0 %v1436
        %v4001 = vpop.f32.mrf.mxu0
        %v4002 = vadd.f32 %v3713, %v4001
        %v4003 = vpop.f32.mrf.mxu0
        %v4004 = vpop.f32.mrf.mxu0
        %v4005 = vadd.f32 %v3716, %v4004
        %v4006 = vpop.f32.mrf.mxu0
        %4007 = vmatprep.mubr.bf16.mxu0 %v1445
        %4008 = vmatmul.mubr.bf16.gmra.mxu0 %v1444
        %v4009 = vpop.f32.mrf.mxu0
        %v4010 = vadd.f32 %v3721, %v4009
        %v4011 = vpop.f32.mrf.mxu0
        %v4012 = vpop.f32.mrf.mxu0
        %v4013 = vadd.f32 %v3724, %v4012
        %v4014 = vpop.f32.mrf.mxu0
        %4015 = vmatprep.mubr.bf16.mxu0 %v1453
        %4016 = vmatmul.mubr.bf16.gmra.mxu0 %v1452
        %v4017 = vpop.f32.mrf.mxu0
        %v4018 = vadd.f32 %v3729, %v4017
        %v4019 = vpop.f32.mrf.mxu0
        %v4020 = vpop.f32.mrf.mxu0
        %v4021 = vadd.f32 %v3732, %v4020
        %v4022 = vpop.f32.mrf.mxu0
        %4023 = vmatprep.mubr.bf16.mxu0 %v1461
        %4024 = vmatmul.mubr.bf16.gmra.mxu0 %v1460
        %v4025 = vpop.f32.mrf.mxu0
        %v4026 = vadd.f32 %v3737, %v4025
        %v4027 = vpop.f32.mrf.mxu0
        %v4028 = vpop.f32.mrf.mxu0
        %v4029 = vadd.f32 %v3740, %v4028
        %v4030 = vpop.f32.mrf.mxu0
        %4031 = vmatprep.mubr.bf16.mxu0 %v1469
        %4032 = vmatmul.mubr.bf16.gmra.mxu0 %v1468
        %v4033 = vpop.f32.mrf.mxu0
        %v4034 = vadd.f32 %v3745, %v4033
        %v4035 = vpop.f32.mrf.mxu0
        %v4036 = vpop.f32.mrf.mxu0
        %v4037 = vadd.f32 %v3748, %v4036
        %v4038 = vpop.f32.mrf.mxu0
        %4039 = vmatprep.mubr.bf16.mxu0 %v1477
        %4040 = vmatmul.mubr.bf16.gmra.mxu0 %v1476
        %v4041 = vpop.f32.mrf.mxu0
        %v4042 = vadd.f32 %v3753, %v4041
        %v4043 = vpop.f32.mrf.mxu0
        %v4044 = vpop.f32.mrf.mxu0
        %v4045 = vadd.f32 %v3756, %v4044
        %v4046 = vpop.f32.mrf.mxu0
        %4047 = vmatprep.mubr.bf16.mxu0 %v1485
        %4048 = vmatmul.mubr.bf16.gmra.mxu0 %v1484
        %v4049 = vpop.f32.mrf.mxu0
        %v4050 = vadd.f32 %v3761, %v4049
        %v4051 = vpop.f32.mrf.mxu0
        %v4052 = vpop.f32.mrf.mxu0
        %v4053 = vadd.f32 %v3764, %v4052
        %v4054 = vpop.f32.mrf.mxu0
        %4055 = vmatprep.mubr.bf16.mxu0 %v1493
        %4056 = vmatmul.mubr.bf16.gmra.mxu0 %v1492
        %v4057 = vpop.f32.mrf.mxu0
        %v4058 = vadd.f32 %v3769, %v4057
        %v4059 = vpop.f32.mrf.mxu0
        %v4060 = vpop.f32.mrf.mxu0
        %v4061 = vadd.f32 %v3772, %v4060
        %v4062 = vpop.f32.mrf.mxu0
        %4063 = vmatprep.mubr.bf16.mxu0 %v1501
        %4064 = vmatmul.mubr.bf16.gmra.mxu0 %v1500
        %v4065 = vpop.f32.mrf.mxu0
        %v4066 = vadd.f32 %v3777, %v4065
        %v4067 = vpop.f32.mrf.mxu0
        %v4068 = vpop.f32.mrf.mxu0
        %v4069 = vadd.f32 %v3780, %v4068
        %v4070 = vpop.f32.mrf.mxu0
        %4071 = vmatprep.mubr.bf16.mxu0 %v1509
        %4072 = vmatmul.mubr.bf16.gmra.mxu0 %v1508
        %v4073 = vpop.f32.mrf.mxu0
        %v4074 = vadd.f32 %v3785, %v4073
        %v4075 = vpop.f32.mrf.mxu0
        %v4076 = vpop.f32.mrf.mxu0
        %v4077 = vadd.f32 %v3788, %v4076
        %v4078 = vpop.f32.mrf.mxu0
        %4079 = vmatprep.mubr.bf16.mxu0 %v1517
        %4080 = vmatmul.mubr.bf16.gmra.mxu0 %v1516
        %v4081 = vpop.f32.mrf.mxu0
        %v4082 = vadd.f32 %v3793, %v4081
        %v4083 = vpop.f32.mrf.mxu0
        %v4084 = vpop.f32.mrf.mxu0
        %v4085 = vadd.f32 %v3796, %v4084
        %v4086 = vpop.f32.mrf.mxu0
        %4087 = vmatprep.mubr.bf16.mxu0 %v1525
        %4088 = vmatmul.mubr.bf16.gmra.mxu0 %v1524
        %v4089 = vpop.f32.mrf.mxu0
        %v4090 = vadd.f32 %v3801, %v4089
        %v4091 = vpop.f32.mrf.mxu0
        %v4092 = vpop.f32.mrf.mxu0
        %v4093 = vadd.f32 %v3804, %v4092
        %v4094 = vpop.f32.mrf.mxu0
        %4095 = vmatprep.mubr.bf16.mxu0 %v1533
        %4096 = vmatmul.mubr.bf16.gmra.mxu0 %v1532
        %v4097 = vpop.f32.mrf.mxu0
        %v4098 = vadd.f32 %v3809, %v4097
        %v4099 = vpop.f32.mrf.mxu0
        %v4100 = vpop.f32.mrf.mxu0
        %v4101 = vadd.f32 %v3812, %v4100
        %v4102 = vpop.f32.mrf.mxu0
        %4103 = vmatprep.mubr.bf16.mxu0 %v1541
        %4104 = vmatmul.mubr.bf16.gmra.mxu0 %v1540
        %v4105 = vpop.f32.mrf.mxu0
        %v4106 = vadd.f32 %v3817, %v4105
        %v4107 = vpop.f32.mrf.mxu0
        %v4108 = vpop.f32.mrf.mxu0
        %v4109 = vadd.f32 %v3820, %v4108
        %v4110 = vpop.f32.mrf.mxu0
        %4111 = vmatprep.mubr.bf16.mxu0 %v1549
        %4112 = vmatmul.mubr.bf16.gmra.mxu0 %v1548
        %v4113 = vpop.f32.mrf.mxu0
        %v4114 = vadd.f32 %v3825, %v4113
        %v4115 = vpop.f32.mrf.mxu0
        %v4116 = vpop.f32.mrf.mxu0
        %v4117 = vadd.f32 %v3828, %v4116
        %v4118 = vpop.f32.mrf.mxu0
        %4119 = vmatprep.mubr.bf16.mxu0 %v1557
        %4120 = vmatmul.mubr.bf16.gmra.mxu0 %v1556
        %v4121 = vpop.f32.mrf.mxu0
        %v4122 = vadd.f32 %v3833, %v4121
        %v4123 = vpop.f32.mrf.mxu0
        %v4124 = vpop.f32.mrf.mxu0
        %v4125 = vadd.f32 %v3836, %v4124
        %v4126 = vpop.f32.mrf.mxu0
        %4127 = vmatprep.mubr.bf16.mxu0 %v1565
        %4128 = vmatmul.mubr.bf16.gmra.mxu0 %v1564
        %v4129 = vpop.f32.mrf.mxu0
        %v4130 = vadd.f32 %v3841, %v4129
        %v4131 = vpop.f32.mrf.mxu0
        %v4132 = vpop.f32.mrf.mxu0
        %v4133 = vadd.f32 %v3844, %v4132
        %v4134 = vpop.f32.mrf.mxu0
        %4135 = vmatprep.mubr.bf16.mxu0 %v1573
        %4136 = vmatmul.mubr.bf16.gmra.mxu0 %v1572
        %v4137 = vpop.f32.mrf.mxu0
        %v4138 = vadd.f32 %v3849, %v4137
        %v4139 = vpop.f32.mrf.mxu0
        %v4140 = vpop.f32.mrf.mxu0
        %v4141 = vadd.f32 %v3852, %v4140
        %v4142 = vpop.f32.mrf.mxu0
        %4143 = vmatprep.mubr.bf16.mxu0 %v1581
        %4144 = vmatmul.mubr.bf16.gmra.mxu0 %v1580
        %v4145 = vpop.f32.mrf.mxu0
        %v4146 = vadd.f32 %v3857, %v4145
        %v4147 = vpop.f32.mrf.mxu0
        %v4148 = vpop.f32.mrf.mxu0
        %v4149 = vadd.f32 %v3860, %v4148
        %v4150 = vpop.f32.mrf.mxu0
        %4151 = vmatprep.mubr.bf16.mxu0 %v1589
        %4152 = vmatmul.mubr.bf16.gmra.mxu0 %v1588
        %v4153 = vpop.f32.mrf.mxu0
        %v4154 = vadd.f32 %v3865, %v4153
        %v4155 = vpop.f32.mrf.mxu0
        %v4156 = vpop.f32.mrf.mxu0
        %v4157 = vadd.f32 %v3868, %v4156
        %v4158 = vpop.f32.mrf.mxu0
        %4159 = vmatprep.mubr.bf16.mxu0 %v1597
        %4160 = vmatmul.mubr.bf16.gmra.mxu0 %v1596
        %v4161 = vpop.f32.mrf.mxu0
        %v4162 = vadd.f32 %v3873, %v4161
        %v4163 = vpop.f32.mrf.mxu0
        %v4164 = vpop.f32.mrf.mxu0
        %v4165 = vadd.f32 %v3876, %v4164
        %v4166 = vpop.f32.mrf.mxu0
        %4167 = vmatprep.mubr.bf16.mxu0 %v1605
        %4168 = vmatmul.mubr.bf16.gmra.mxu0 %v1604
        %v4169 = vpop.f32.mrf.mxu0
        %v4170 = vadd.f32 %v3881, %v4169
        %v4171 = vpop.f32.mrf.mxu0
        %v4172 = vpop.f32.mrf.mxu0
        %v4173 = vadd.f32 %v3884, %v4172
        %v4174 = vpop.f32.mrf.mxu0
        %4175 = vmatprep.mubr.bf16.mxu0 %v1613
        %4176 = vmatmul.mubr.bf16.gmra.mxu0 %v1612
        %v4177 = vpop.f32.mrf.mxu0
        %v4178 = vadd.f32 %v3889, %v4177
        %v4179 = vpop.f32.mrf.mxu0
        %v4180 = vpop.f32.mrf.mxu0
        %v4181 = vadd.f32 %v3892, %v4180
        %v4182 = vpop.f32.mrf.mxu0
        %4183 = vmatprep.mubr.bf16.mxu0 %v1621
        %4184 = vmatmul.mubr.bf16.gmra.mxu0 %v1620
        %v4185 = vpop.f32.mrf.mxu0
        %v4186 = vadd.f32 %v3897, %v4185
        %v4187 = vpop.f32.mrf.mxu0
        %v4188 = vpop.f32.mrf.mxu0
        %v4189 = vadd.f32 %v3900, %v4188
        %v4190 = vpop.f32.mrf.mxu0
        %4191 = vmatprep.mubr.bf16.mxu0 %v1629
        %4192 = vmatmul.mubr.bf16.gmra.mxu0 %v1628
        %v4193 = vpop.f32.mrf.mxu0
        %v4194 = vadd.f32 %v3905, %v4193
        %v4195 = vpop.f32.mrf.mxu0
        %v4196 = vpop.f32.mrf.mxu0
        %v4197 = vadd.f32 %v3908, %v4196
        %v4198 = vpop.f32.mrf.mxu0
        %4199 = vmatprep.mubr.bf16.mxu0 %v1637
        %4200 = vmatmul.mubr.bf16.gmra.mxu0 %v1636
        %v4201 = vpop.f32.mrf.mxu0
        %v4202 = vadd.f32 %v3913, %v4201
        %v4203 = vpop.f32.mrf.mxu0
        %v4204 = vpop.f32.mrf.mxu0
        %v4205 = vadd.f32 %v3916, %v4204
        %v4206 = vpop.f32.mrf.mxu0
        %4207 = vdwg.mxu0
        %4208 = vmatprep.subr.bf16.mxu0 0
        %4209 = vmatpush1.bf16.msra.mxu0 %v2145
        %4210 = vmatprep.subr.bf16.mxu0 0
        %4211 = vmatpush1.bf16.msra.mxu0 %v2142
        %4212 = vmatprep.subr.bf16.mxu0 0
        %4213 = vmatpush1.bf16.msra.mxu0 %v2139
        %4214 = vmatprep.subr.bf16.mxu0 0
        %4215 = vmatpush1.bf16.msra.mxu0 %v2136
        %4216 = vmatprep.subr.bf16.mxu0 0
        %4217 = vmatpush1.bf16.msra.mxu0 %v2133
        %4218 = vmatprep.subr.bf16.mxu0 0
        %4219 = vmatpush1.bf16.msra.mxu0 %v2130
        %4220 = vmatprep.subr.bf16.mxu0 0
        %4221 = vmatpush1.bf16.msra.mxu0 %v2127
        %4222 = vmatprep.subr.bf16.mxu0 0
        %4223 = vmatpush1.bf16.msra.mxu0 %v2124
        %4224 = vmatprep.subr.bf16.mxu0 0
        %4225 = vmatpush2.bf16.msra.mxu0 %v2169
        %4226 = vmatprep.subr.bf16.mxu0 0
        %4227 = vmatpush2.bf16.msra.mxu0 %v2166
        %4228 = vmatprep.subr.bf16.mxu0 0
        %4229 = vmatpush2.bf16.msra.mxu0 %v2163
        %4230 = vmatprep.subr.bf16.mxu0 0
        %4231 = vmatpush2.bf16.msra.mxu0 %v2160
        %4232 = vmatprep.subr.bf16.mxu0 0
        %4233 = vmatpush2.bf16.msra.mxu0 %v2157
        %4234 = vmatprep.subr.bf16.mxu0 0
        %4235 = vmatpush2.bf16.msra.mxu0 %v2154
        %4236 = vmatprep.subr.bf16.mxu0 0
        %4237 = vmatpush2.bf16.msra.mxu0 %v2151
        %4238 = vmatprep.subr.bf16.mxu0 0
        %4239 = vmatpush2.bf16.msra.mxu0 %v2148
        %4240 = vmatprep.mubr.bf16.mxu0 %v1391
        %4241 = vmatmul.mubr.bf16.gmra.mxu0 %v1390
        %v4242 = vpop.f32.mrf.mxu0
        %v4243 = vadd.f32 %v3954, %v4242
        %v4244 = vpop.f32.mrf.mxu0
        %v4245 = vpop.f32.mrf.mxu0
        %v4246 = vadd.f32 %v3957, %v4245
        %v4247 = vpop.f32.mrf.mxu0
        %4248 = vmatprep.mubr.bf16.mxu0 %v1399
        %4249 = vmatmul.mubr.bf16.gmra.mxu0 %v1398
        %v4250 = vpop.f32.mrf.mxu0
        %v4251 = vadd.f32 %v3962, %v4250
        %v4252 = vpop.f32.mrf.mxu0
        %v4253 = vpop.f32.mrf.mxu0
        %v4254 = vadd.f32 %v3965, %v4253
        %v4255 = vpop.f32.mrf.mxu0
        %4256 = vmatprep.mubr.bf16.mxu0 %v1407
        %4257 = vmatmul.mubr.bf16.gmra.mxu0 %v1406
        %v4258 = vpop.f32.mrf.mxu0
        %v4259 = vadd.f32 %v3970, %v4258
        %v4260 = vpop.f32.mrf.mxu0
        %v4261 = vpop.f32.mrf.mxu0
        %v4262 = vadd.f32 %v3973, %v4261
        %v4263 = vpop.f32.mrf.mxu0
        %4264 = vmatprep.mubr.bf16.mxu0 %v1415
        %4265 = vmatmul.mubr.bf16.gmra.mxu0 %v1414
        %v4266 = vpop.f32.mrf.mxu0
        %v4267 = vadd.f32 %v3978, %v4266
        %v4268 = vpop.f32.mrf.mxu0
        %v4269 = vpop.f32.mrf.mxu0
        %v4270 = vadd.f32 %v3981, %v4269
        %v4271 = vpop.f32.mrf.mxu0
        %4272 = vmatprep.mubr.bf16.mxu0 %v1423
        %4273 = vmatmul.mubr.bf16.gmra.mxu0 %v1422
        %v4274 = vpop.f32.mrf.mxu0
        %v4275 = vadd.f32 %v3986, %v4274
        %v4276 = vpop.f32.mrf.mxu0
        %v4277 = vpop.f32.mrf.mxu0
        %v4278 = vadd.f32 %v3989, %v4277
        %v4279 = vpop.f32.mrf.mxu0
        %4280 = vmatprep.mubr.bf16.mxu0 %v1431
        %4281 = vmatmul.mubr.bf16.gmra.mxu0 %v1430
        %v4282 = vpop.f32.mrf.mxu0
        %v4283 = vadd.f32 %v3994, %v4282
        %v4284 = vpop.f32.mrf.mxu0
        %v4285 = vpop.f32.mrf.mxu0
        %v4286 = vadd.f32 %v3997, %v4285
        %v4287 = vpop.f32.mrf.mxu0
        %4288 = vmatprep.mubr.bf16.mxu0 %v1439
        %4289 = vmatmul.mubr.bf16.gmra.mxu0 %v1438
        %v4290 = vpop.f32.mrf.mxu0
        %v4291 = vadd.f32 %v4002, %v4290
        %v4292 = vpop.f32.mrf.mxu0
        %v4293 = vpop.f32.mrf.mxu0
        %v4294 = vadd.f32 %v4005, %v4293
        %v4295 = vpop.f32.mrf.mxu0
        %4296 = vmatprep.mubr.bf16.mxu0 %v1447
        %4297 = vmatmul.mubr.bf16.gmra.mxu0 %v1446
        %v4298 = vpop.f32.mrf.mxu0
        %v4299 = vadd.f32 %v4010, %v4298
        %v4300 = vpop.f32.mrf.mxu0
        %v4301 = vpop.f32.mrf.mxu0
        %v4302 = vadd.f32 %v4013, %v4301
        %v4303 = vpop.f32.mrf.mxu0
        %4304 = vmatprep.mubr.bf16.mxu0 %v1455
        %4305 = vmatmul.mubr.bf16.gmra.mxu0 %v1454
        %v4306 = vpop.f32.mrf.mxu0
        %v4307 = vadd.f32 %v4018, %v4306
        %v4308 = vpop.f32.mrf.mxu0
        %v4309 = vpop.f32.mrf.mxu0
        %v4310 = vadd.f32 %v4021, %v4309
        %v4311 = vpop.f32.mrf.mxu0
        %4312 = vmatprep.mubr.bf16.mxu0 %v1463
        %4313 = vmatmul.mubr.bf16.gmra.mxu0 %v1462
        %v4314 = vpop.f32.mrf.mxu0
        %v4315 = vadd.f32 %v4026, %v4314
        %v4316 = vpop.f32.mrf.mxu0
        %v4317 = vpop.f32.mrf.mxu0
        %v4318 = vadd.f32 %v4029, %v4317
        %v4319 = vpop.f32.mrf.mxu0
        %4320 = vmatprep.mubr.bf16.mxu0 %v1471
        %4321 = vmatmul.mubr.bf16.gmra.mxu0 %v1470
        %v4322 = vpop.f32.mrf.mxu0
        %v4323 = vadd.f32 %v4034, %v4322
        %v4324 = vpop.f32.mrf.mxu0
        %v4325 = vpop.f32.mrf.mxu0
        %v4326 = vadd.f32 %v4037, %v4325
        %v4327 = vpop.f32.mrf.mxu0
        %4328 = vmatprep.mubr.bf16.mxu0 %v1479
        %4329 = vmatmul.mubr.bf16.gmra.mxu0 %v1478
        %v4330 = vpop.f32.mrf.mxu0
        %v4331 = vadd.f32 %v4042, %v4330
        %v4332 = vpop.f32.mrf.mxu0
        %v4333 = vpop.f32.mrf.mxu0
        %v4334 = vadd.f32 %v4045, %v4333
        %v4335 = vpop.f32.mrf.mxu0
        %4336 = vmatprep.mubr.bf16.mxu0 %v1487
        %4337 = vmatmul.mubr.bf16.gmra.mxu0 %v1486
        %v4338 = vpop.f32.mrf.mxu0
        %v4339 = vadd.f32 %v4050, %v4338
        %v4340 = vpop.f32.mrf.mxu0
        %v4341 = vpop.f32.mrf.mxu0
        %v4342 = vadd.f32 %v4053, %v4341
        %v4343 = vpop.f32.mrf.mxu0
        %4344 = vmatprep.mubr.bf16.mxu0 %v1495
        %4345 = vmatmul.mubr.bf16.gmra.mxu0 %v1494
        %v4346 = vpop.f32.mrf.mxu0
        %v4347 = vadd.f32 %v4058, %v4346
        %v4348 = vpop.f32.mrf.mxu0
        %v4349 = vpop.f32.mrf.mxu0
        %v4350 = vadd.f32 %v4061, %v4349
        %v4351 = vpop.f32.mrf.mxu0
        %4352 = vmatprep.mubr.bf16.mxu0 %v1503
        %4353 = vmatmul.mubr.bf16.gmra.mxu0 %v1502
        %v4354 = vpop.f32.mrf.mxu0
        %v4355 = vadd.f32 %v4066, %v4354
        %v4356 = vpop.f32.mrf.mxu0
        %v4357 = vpop.f32.mrf.mxu0
        %v4358 = vadd.f32 %v4069, %v4357
        %v4359 = vpop.f32.mrf.mxu0
        %4360 = vmatprep.mubr.bf16.mxu0 %v1511
        %4361 = vmatmul.mubr.bf16.gmra.mxu0 %v1510
        %v4362 = vpop.f32.mrf.mxu0
        %v4363 = vadd.f32 %v4074, %v4362
        %v4364 = vpop.f32.mrf.mxu0
        %v4365 = vpop.f32.mrf.mxu0
        %v4366 = vadd.f32 %v4077, %v4365
        %v4367 = vpop.f32.mrf.mxu0
        %4368 = vmatprep.mubr.bf16.mxu0 %v1519
        %4369 = vmatmul.mubr.bf16.gmra.mxu0 %v1518
        %v4370 = vpop.f32.mrf.mxu0
        %v4371 = vadd.f32 %v4082, %v4370
        %v4372 = vpop.f32.mrf.mxu0
        %v4373 = vpop.f32.mrf.mxu0
        %v4374 = vadd.f32 %v4085, %v4373
        %v4375 = vpop.f32.mrf.mxu0
        %4376 = vmatprep.mubr.bf16.mxu0 %v1527
        %4377 = vmatmul.mubr.bf16.gmra.mxu0 %v1526
        %v4378 = vpop.f32.mrf.mxu0
        %v4379 = vadd.f32 %v4090, %v4378
        %v4380 = vpop.f32.mrf.mxu0
        %v4381 = vpop.f32.mrf.mxu0
        %v4382 = vadd.f32 %v4093, %v4381
        %v4383 = vpop.f32.mrf.mxu0
        %4384 = vmatprep.mubr.bf16.mxu0 %v1535
        %4385 = vmatmul.mubr.bf16.gmra.mxu0 %v1534
        %v4386 = vpop.f32.mrf.mxu0
        %v4387 = vadd.f32 %v4098, %v4386
        %v4388 = vpop.f32.mrf.mxu0
        %v4389 = vpop.f32.mrf.mxu0
        %v4390 = vadd.f32 %v4101, %v4389
        %v4391 = vpop.f32.mrf.mxu0
        %4392 = vmatprep.mubr.bf16.mxu0 %v1543
        %4393 = vmatmul.mubr.bf16.gmra.mxu0 %v1542
        %v4394 = vpop.f32.mrf.mxu0
        %v4395 = vadd.f32 %v4106, %v4394
        %v4396 = vpop.f32.mrf.mxu0
        %v4397 = vpop.f32.mrf.mxu0
        %v4398 = vadd.f32 %v4109, %v4397
        %v4399 = vpop.f32.mrf.mxu0
        %4400 = vmatprep.mubr.bf16.mxu0 %v1551
        %4401 = vmatmul.mubr.bf16.gmra.mxu0 %v1550
        %v4402 = vpop.f32.mrf.mxu0
        %v4403 = vadd.f32 %v4114, %v4402
        %v4404 = vpop.f32.mrf.mxu0
        %v4405 = vpop.f32.mrf.mxu0
        %v4406 = vadd.f32 %v4117, %v4405
        %v4407 = vpop.f32.mrf.mxu0
        %4408 = vmatprep.mubr.bf16.mxu0 %v1559
        %4409 = vmatmul.mubr.bf16.gmra.mxu0 %v1558
        %v4410 = vpop.f32.mrf.mxu0
        %v4411 = vadd.f32 %v4122, %v4410
        %v4412 = vpop.f32.mrf.mxu0
        %v4413 = vpop.f32.mrf.mxu0
        %v4414 = vadd.f32 %v4125, %v4413
        %v4415 = vpop.f32.mrf.mxu0
        %4416 = vmatprep.mubr.bf16.mxu0 %v1567
        %4417 = vmatmul.mubr.bf16.gmra.mxu0 %v1566
        %v4418 = vpop.f32.mrf.mxu0
        %v4419 = vadd.f32 %v4130, %v4418
        %v4420 = vpop.f32.mrf.mxu0
        %v4421 = vpop.f32.mrf.mxu0
        %v4422 = vadd.f32 %v4133, %v4421
        %v4423 = vpop.f32.mrf.mxu0
        %4424 = vmatprep.mubr.bf16.mxu0 %v1575
        %4425 = vmatmul.mubr.bf16.gmra.mxu0 %v1574
        %v4426 = vpop.f32.mrf.mxu0
        %v4427 = vadd.f32 %v4138, %v4426
        %v4428 = vpop.f32.mrf.mxu0
        %v4429 = vpop.f32.mrf.mxu0
        %v4430 = vadd.f32 %v4141, %v4429
        %v4431 = vpop.f32.mrf.mxu0
        %4432 = vmatprep.mubr.bf16.mxu0 %v1583
        %4433 = vmatmul.mubr.bf16.gmra.mxu0 %v1582
        %v4434 = vpop.f32.mrf.mxu0
        %v4435 = vadd.f32 %v4146, %v4434
        %v4436 = vpop.f32.mrf.mxu0
        %v4437 = vpop.f32.mrf.mxu0
        %v4438 = vadd.f32 %v4149, %v4437
        %v4439 = vpop.f32.mrf.mxu0
        %4440 = vmatprep.mubr.bf16.mxu0 %v1591
        %4441 = vmatmul.mubr.bf16.gmra.mxu0 %v1590
        %v4442 = vpop.f32.mrf.mxu0
        %v4443 = vadd.f32 %v4154, %v4442
        %v4444 = vpop.f32.mrf.mxu0
        %v4445 = vpop.f32.mrf.mxu0
        %v4446 = vadd.f32 %v4157, %v4445
        %v4447 = vpop.f32.mrf.mxu0
        %4448 = vmatprep.mubr.bf16.mxu0 %v1599
        %4449 = vmatmul.mubr.bf16.gmra.mxu0 %v1598
        %v4450 = vpop.f32.mrf.mxu0
        %v4451 = vadd.f32 %v4162, %v4450
        %v4452 = vpop.f32.mrf.mxu0
        %v4453 = vpop.f32.mrf.mxu0
        %v4454 = vadd.f32 %v4165, %v4453
        %v4455 = vpop.f32.mrf.mxu0
        %4456 = vmatprep.mubr.bf16.mxu0 %v1607
        %4457 = vmatmul.mubr.bf16.gmra.mxu0 %v1606
        %v4458 = vpop.f32.mrf.mxu0
        %v4459 = vadd.f32 %v4170, %v4458
        %v4460 = vpop.f32.mrf.mxu0
        %v4461 = vpop.f32.mrf.mxu0
        %v4462 = vadd.f32 %v4173, %v4461
        %v4463 = vpop.f32.mrf.mxu0
        %4464 = vmatprep.mubr.bf16.mxu0 %v1615
        %4465 = vmatmul.mubr.bf16.gmra.mxu0 %v1614
        %v4466 = vpop.f32.mrf.mxu0
        %v4467 = vadd.f32 %v4178, %v4466
        %v4468 = vpop.f32.mrf.mxu0
        %v4469 = vpop.f32.mrf.mxu0
        %v4470 = vadd.f32 %v4181, %v4469
        %v4471 = vpop.f32.mrf.mxu0
        %4472 = vmatprep.mubr.bf16.mxu0 %v1623
        %4473 = vmatmul.mubr.bf16.gmra.mxu0 %v1622
        %v4474 = vpop.f32.mrf.mxu0
        %v4475 = vadd.f32 %v4186, %v4474
        %v4476 = vpop.f32.mrf.mxu0
        %v4477 = vpop.f32.mrf.mxu0
        %v4478 = vadd.f32 %v4189, %v4477
        %v4479 = vpop.f32.mrf.mxu0
        %4480 = vmatprep.mubr.bf16.mxu0 %v1631
        %4481 = vmatmul.mubr.bf16.gmra.mxu0 %v1630
        %v4482 = vpop.f32.mrf.mxu0
        %v4483 = vadd.f32 %v4194, %v4482
        %v4484 = vpop.f32.mrf.mxu0
        %v4485 = vpop.f32.mrf.mxu0
        %v4486 = vadd.f32 %v4197, %v4485
        %v4487 = vpop.f32.mrf.mxu0
        %4488 = vmatprep.mubr.bf16.mxu0 %v1639
        %4489 = vmatmul.mubr.bf16.gmra.mxu0 %v1638
        %v4490 = vpop.f32.mrf.mxu0
        %v4491 = vadd.f32 %v4202, %v4490
        %v4492 = vpop.f32.mrf.mxu0
        %v4493 = vpop.f32.mrf.mxu0
        %v4494 = vadd.f32 %v4205, %v4493
        %v4495 = vpop.f32.mrf.mxu0
        %4496 = vdwg.mxu0
        %4497 = vmatprep.subr.bf16.mxu0 0
        %4498 = vmatpush1.bf16.msra.mxu0 %v2193
        %4499 = vmatprep.subr.bf16.mxu0 0
        %4500 = vmatpush1.bf16.msra.mxu0 %v2190
        %4501 = vmatprep.subr.bf16.mxu0 0
        %4502 = vmatpush1.bf16.msra.mxu0 %v2187
        %4503 = vmatprep.subr.bf16.mxu0 0
        %4504 = vmatpush1.bf16.msra.mxu0 %v2184
        %4505 = vmatprep.subr.bf16.mxu0 0
        %4506 = vmatpush1.bf16.msra.mxu0 %v2181
        %4507 = vmatprep.subr.bf16.mxu0 0
        %4508 = vmatpush1.bf16.msra.mxu0 %v2178
        %4509 = vmatprep.subr.bf16.mxu0 0
        %4510 = vmatpush1.bf16.msra.mxu0 %v2175
        %4511 = vmatprep.subr.bf16.mxu0 0
        %4512 = vmatpush1.bf16.msra.mxu0 %v2172
        %4513 = vmatprep.subr.bf16.mxu0 0
        %4514 = vmatpush2.bf16.msra.mxu0 %v2217
        %4515 = vmatprep.subr.bf16.mxu0 0
        %4516 = vmatpush2.bf16.msra.mxu0 %v2214
        %4517 = vmatprep.subr.bf16.mxu0 0
        %4518 = vmatpush2.bf16.msra.mxu0 %v2211
        %4519 = vmatprep.subr.bf16.mxu0 0
        %4520 = vmatpush2.bf16.msra.mxu0 %v2208
        %4521 = vmatprep.subr.bf16.mxu0 0
        %4522 = vmatpush2.bf16.msra.mxu0 %v2205
        %4523 = vmatprep.subr.bf16.mxu0 0
        %4524 = vmatpush2.bf16.msra.mxu0 %v2202
        %4525 = vmatprep.subr.bf16.mxu0 0
        %4526 = vmatpush2.bf16.msra.mxu0 %v2199
        %4527 = vmatprep.subr.bf16.mxu0 0
        %4528 = vmatpush2.bf16.msra.mxu0 %v2196
        %4529 = vmatprep.mubr.bf16.mxu0 %v1393
        %4530 = vmatmul.mubr.bf16.gmra.mxu0 %v1392
        %v4531 = vpop.f32.mrf.mxu0
        %v4532 = vadd.f32 %v4243, %v4531
        %v4533 = vpop.f32.mrf.mxu0
        %v4534 = vpop.f32.mrf.mxu0
        %v4535 = vadd.f32 %v4246, %v4534
        %v4536 = vpop.f32.mrf.mxu0
        %4537 = vmatprep.mubr.bf16.mxu0 %v1401
        %4538 = vmatmul.mubr.bf16.gmra.mxu0 %v1400
        %v4539 = vpop.f32.mrf.mxu0
        %v4540 = vadd.f32 %v4251, %v4539
        %v4541 = vpop.f32.mrf.mxu0
        %v4542 = vpop.f32.mrf.mxu0
        %v4543 = vadd.f32 %v4254, %v4542
        %v4544 = vpop.f32.mrf.mxu0
        %4545 = vmatprep.mubr.bf16.mxu0 %v1409
        %4546 = vmatmul.mubr.bf16.gmra.mxu0 %v1408
        %v4547 = vpop.f32.mrf.mxu0
        %v4548 = vadd.f32 %v4259, %v4547
        %v4549 = vpop.f32.mrf.mxu0
        %v4550 = vpop.f32.mrf.mxu0
        %v4551 = vadd.f32 %v4262, %v4550
        %v4552 = vpop.f32.mrf.mxu0
        %4553 = vmatprep.mubr.bf16.mxu0 %v1417
        %4554 = vmatmul.mubr.bf16.gmra.mxu0 %v1416
        %v4555 = vpop.f32.mrf.mxu0
        %v4556 = vadd.f32 %v4267, %v4555
        %v4557 = vpop.f32.mrf.mxu0
        %v4558 = vpop.f32.mrf.mxu0
        %v4559 = vadd.f32 %v4270, %v4558
        %v4560 = vpop.f32.mrf.mxu0
        %4561 = vmatprep.mubr.bf16.mxu0 %v1425
        %4562 = vmatmul.mubr.bf16.gmra.mxu0 %v1424
        %v4563 = vpop.f32.mrf.mxu0
        %v4564 = vadd.f32 %v4275, %v4563
        %v4565 = vpop.f32.mrf.mxu0
        %v4566 = vpop.f32.mrf.mxu0
        %v4567 = vadd.f32 %v4278, %v4566
        %v4568 = vpop.f32.mrf.mxu0
        %4569 = vmatprep.mubr.bf16.mxu0 %v1433
        %4570 = vmatmul.mubr.bf16.gmra.mxu0 %v1432
        %v4571 = vpop.f32.mrf.mxu0
        %v4572 = vadd.f32 %v4283, %v4571
        %v4573 = vpop.f32.mrf.mxu0
        %v4574 = vpop.f32.mrf.mxu0
        %v4575 = vadd.f32 %v4286, %v4574
        %v4576 = vpop.f32.mrf.mxu0
        %4577 = vmatprep.mubr.bf16.mxu0 %v1441
        %4578 = vmatmul.mubr.bf16.gmra.mxu0 %v1440
        %v4579 = vpop.f32.mrf.mxu0
        %v4580 = vadd.f32 %v4291, %v4579
        %v4581 = vpop.f32.mrf.mxu0
        %v4582 = vpop.f32.mrf.mxu0
        %v4583 = vadd.f32 %v4294, %v4582
        %v4584 = vpop.f32.mrf.mxu0
        %4585 = vmatprep.mubr.bf16.mxu0 %v1449
        %4586 = vmatmul.mubr.bf16.gmra.mxu0 %v1448
        %v4587 = vpop.f32.mrf.mxu0
        %v4588 = vadd.f32 %v4299, %v4587
        %v4589 = vpop.f32.mrf.mxu0
        %v4590 = vpop.f32.mrf.mxu0
        %v4591 = vadd.f32 %v4302, %v4590
        %v4592 = vpop.f32.mrf.mxu0
        %4593 = vmatprep.mubr.bf16.mxu0 %v1457
        %4594 = vmatmul.mubr.bf16.gmra.mxu0 %v1456
        %v4595 = vpop.f32.mrf.mxu0
        %v4596 = vadd.f32 %v4307, %v4595
        %v4597 = vpop.f32.mrf.mxu0
        %v4598 = vpop.f32.mrf.mxu0
        %v4599 = vadd.f32 %v4310, %v4598
        %v4600 = vpop.f32.mrf.mxu0
        %4601 = vmatprep.mubr.bf16.mxu0 %v1465
        %4602 = vmatmul.mubr.bf16.gmra.mxu0 %v1464
        %v4603 = vpop.f32.mrf.mxu0
        %v4604 = vadd.f32 %v4315, %v4603
        %v4605 = vpop.f32.mrf.mxu0
        %v4606 = vpop.f32.mrf.mxu0
        %v4607 = vadd.f32 %v4318, %v4606
        %v4608 = vpop.f32.mrf.mxu0
        %4609 = vmatprep.mubr.bf16.mxu0 %v1473
        %4610 = vmatmul.mubr.bf16.gmra.mxu0 %v1472
        %v4611 = vpop.f32.mrf.mxu0
        %v4612 = vadd.f32 %v4323, %v4611
        %v4613 = vpop.f32.mrf.mxu0
        %v4614 = vpop.f32.mrf.mxu0
        %v4615 = vadd.f32 %v4326, %v4614
        %v4616 = vpop.f32.mrf.mxu0
        %4617 = vmatprep.mubr.bf16.mxu0 %v1481
        %4618 = vmatmul.mubr.bf16.gmra.mxu0 %v1480
        %v4619 = vpop.f32.mrf.mxu0
        %v4620 = vadd.f32 %v4331, %v4619
        %v4621 = vpop.f32.mrf.mxu0
        %v4622 = vpop.f32.mrf.mxu0
        %v4623 = vadd.f32 %v4334, %v4622
        %v4624 = vpop.f32.mrf.mxu0
        %4625 = vmatprep.mubr.bf16.mxu0 %v1489
        %4626 = vmatmul.mubr.bf16.gmra.mxu0 %v1488
        %v4627 = vpop.f32.mrf.mxu0
        %v4628 = vadd.f32 %v4339, %v4627
        %v4629 = vpop.f32.mrf.mxu0
        %v4630 = vpop.f32.mrf.mxu0
        %v4631 = vadd.f32 %v4342, %v4630
        %v4632 = vpop.f32.mrf.mxu0
        %4633 = vmatprep.mubr.bf16.mxu0 %v1497
        %4634 = vmatmul.mubr.bf16.gmra.mxu0 %v1496
        %v4635 = vpop.f32.mrf.mxu0
        %v4636 = vadd.f32 %v4347, %v4635
        %v4637 = vpop.f32.mrf.mxu0
        %v4638 = vpop.f32.mrf.mxu0
        %v4639 = vadd.f32 %v4350, %v4638
        %v4640 = vpop.f32.mrf.mxu0
        %4641 = vmatprep.mubr.bf16.mxu0 %v1505
        %4642 = vmatmul.mubr.bf16.gmra.mxu0 %v1504
        %v4643 = vpop.f32.mrf.mxu0
        %v4644 = vadd.f32 %v4355, %v4643
        %v4645 = vpop.f32.mrf.mxu0
        %v4646 = vpop.f32.mrf.mxu0
        %v4647 = vadd.f32 %v4358, %v4646
        %v4648 = vpop.f32.mrf.mxu0
        %4649 = vmatprep.mubr.bf16.mxu0 %v1513
        %4650 = vmatmul.mubr.bf16.gmra.mxu0 %v1512
        %v4651 = vpop.f32.mrf.mxu0
        %v4652 = vadd.f32 %v4363, %v4651
        %v4653 = vpop.f32.mrf.mxu0
        %v4654 = vpop.f32.mrf.mxu0
        %v4655 = vadd.f32 %v4366, %v4654
        %v4656 = vpop.f32.mrf.mxu0
        %4657 = vmatprep.mubr.bf16.mxu0 %v1521
        %4658 = vmatmul.mubr.bf16.gmra.mxu0 %v1520
        %v4659 = vpop.f32.mrf.mxu0
        %v4660 = vadd.f32 %v4371, %v4659
        %v4661 = vpop.f32.mrf.mxu0
        %v4662 = vpop.f32.mrf.mxu0
        %v4663 = vadd.f32 %v4374, %v4662
        %v4664 = vpop.f32.mrf.mxu0
        %4665 = vmatprep.mubr.bf16.mxu0 %v1529
        %4666 = vmatmul.mubr.bf16.gmra.mxu0 %v1528
        %v4667 = vpop.f32.mrf.mxu0
        %v4668 = vadd.f32 %v4379, %v4667
        %v4669 = vpop.f32.mrf.mxu0
        %v4670 = vpop.f32.mrf.mxu0
        %v4671 = vadd.f32 %v4382, %v4670
        %v4672 = vpop.f32.mrf.mxu0
        %4673 = vmatprep.mubr.bf16.mxu0 %v1537
        %4674 = vmatmul.mubr.bf16.gmra.mxu0 %v1536
        %v4675 = vpop.f32.mrf.mxu0
        %v4676 = vadd.f32 %v4387, %v4675
        %v4677 = vpop.f32.mrf.mxu0
        %v4678 = vpop.f32.mrf.mxu0
        %v4679 = vadd.f32 %v4390, %v4678
        %v4680 = vpop.f32.mrf.mxu0
        %4681 = vmatprep.mubr.bf16.mxu0 %v1545
        %4682 = vmatmul.mubr.bf16.gmra.mxu0 %v1544
        %v4683 = vpop.f32.mrf.mxu0
        %v4684 = vadd.f32 %v4395, %v4683
        %v4685 = vpop.f32.mrf.mxu0
        %v4686 = vpop.f32.mrf.mxu0
        %v4687 = vadd.f32 %v4398, %v4686
        %v4688 = vpop.f32.mrf.mxu0
        %4689 = vmatprep.mubr.bf16.mxu0 %v1553
        %4690 = vmatmul.mubr.bf16.gmra.mxu0 %v1552
        %v4691 = vpop.f32.mrf.mxu0
        %v4692 = vadd.f32 %v4403, %v4691
        %v4693 = vpop.f32.mrf.mxu0
        %v4694 = vpop.f32.mrf.mxu0
        %v4695 = vadd.f32 %v4406, %v4694
        %v4696 = vpop.f32.mrf.mxu0
        %4697 = vmatprep.mubr.bf16.mxu0 %v1561
        %4698 = vmatmul.mubr.bf16.gmra.mxu0 %v1560
        %v4699 = vpop.f32.mrf.mxu0
        %v4700 = vadd.f32 %v4411, %v4699
        %v4701 = vpop.f32.mrf.mxu0
        %v4702 = vpop.f32.mrf.mxu0
        %v4703 = vadd.f32 %v4414, %v4702
        %v4704 = vpop.f32.mrf.mxu0
        %4705 = vmatprep.mubr.bf16.mxu0 %v1569
        %4706 = vmatmul.mubr.bf16.gmra.mxu0 %v1568
        %v4707 = vpop.f32.mrf.mxu0
        %v4708 = vadd.f32 %v4419, %v4707
        %v4709 = vpop.f32.mrf.mxu0
        %v4710 = vpop.f32.mrf.mxu0
        %v4711 = vadd.f32 %v4422, %v4710
        %v4712 = vpop.f32.mrf.mxu0
        %4713 = vmatprep.mubr.bf16.mxu0 %v1577
        %4714 = vmatmul.mubr.bf16.gmra.mxu0 %v1576
        %v4715 = vpop.f32.mrf.mxu0
        %v4716 = vadd.f32 %v4427, %v4715
        %v4717 = vpop.f32.mrf.mxu0
        %v4718 = vpop.f32.mrf.mxu0
        %v4719 = vadd.f32 %v4430, %v4718
        %v4720 = vpop.f32.mrf.mxu0
        %4721 = vmatprep.mubr.bf16.mxu0 %v1585
        %4722 = vmatmul.mubr.bf16.gmra.mxu0 %v1584
        %v4723 = vpop.f32.mrf.mxu0
        %v4724 = vadd.f32 %v4435, %v4723
        %v4725 = vpop.f32.mrf.mxu0
        %v4726 = vpop.f32.mrf.mxu0
        %v4727 = vadd.f32 %v4438, %v4726
        %v4728 = vpop.f32.mrf.mxu0
        %4729 = vmatprep.mubr.bf16.mxu0 %v1593
        %4730 = vmatmul.mubr.bf16.gmra.mxu0 %v1592
        %v4731 = vpop.f32.mrf.mxu0
        %v4732 = vadd.f32 %v4443, %v4731
        %v4733 = vpop.f32.mrf.mxu0
        %v4734 = vpop.f32.mrf.mxu0
        %v4735 = vadd.f32 %v4446, %v4734
        %v4736 = vpop.f32.mrf.mxu0
        %4737 = vmatprep.mubr.bf16.mxu0 %v1601
        %4738 = vmatmul.mubr.bf16.gmra.mxu0 %v1600
        %v4739 = vpop.f32.mrf.mxu0
        %v4740 = vadd.f32 %v4451, %v4739
        %v4741 = vpop.f32.mrf.mxu0
        %v4742 = vpop.f32.mrf.mxu0
        %v4743 = vadd.f32 %v4454, %v4742
        %v4744 = vpop.f32.mrf.mxu0
        %4745 = vmatprep.mubr.bf16.mxu0 %v1609
        %4746 = vmatmul.mubr.bf16.gmra.mxu0 %v1608
        %v4747 = vpop.f32.mrf.mxu0
        %v4748 = vadd.f32 %v4459, %v4747
        %v4749 = vpop.f32.mrf.mxu0
        %v4750 = vpop.f32.mrf.mxu0
        %v4751 = vadd.f32 %v4462, %v4750
        %v4752 = vpop.f32.mrf.mxu0
        %4753 = vmatprep.mubr.bf16.mxu0 %v1617
        %4754 = vmatmul.mubr.bf16.gmra.mxu0 %v1616
        %v4755 = vpop.f32.mrf.mxu0
        %v4756 = vadd.f32 %v4467, %v4755
        %v4757 = vpop.f32.mrf.mxu0
        %v4758 = vpop.f32.mrf.mxu0
        %v4759 = vadd.f32 %v4470, %v4758
        %v4760 = vpop.f32.mrf.mxu0
        %4761 = vmatprep.mubr.bf16.mxu0 %v1625
        %4762 = vmatmul.mubr.bf16.gmra.mxu0 %v1624
        %v4763 = vpop.f32.mrf.mxu0
        %v4764 = vadd.f32 %v4475, %v4763
        %v4765 = vpop.f32.mrf.mxu0
        %v4766 = vpop.f32.mrf.mxu0
        %v4767 = vadd.f32 %v4478, %v4766
        %v4768 = vpop.f32.mrf.mxu0
        %4769 = vmatprep.mubr.bf16.mxu0 %v1633
        %4770 = vmatmul.mubr.bf16.gmra.mxu0 %v1632
        %v4771 = vpop.f32.mrf.mxu0
        %v4772 = vadd.f32 %v4483, %v4771
        %v4773 = vpop.f32.mrf.mxu0
        %v4774 = vpop.f32.mrf.mxu0
        %v4775 = vadd.f32 %v4486, %v4774
        %v4776 = vpop.f32.mrf.mxu0
        %4777 = vmatprep.mubr.bf16.mxu0 %v1641
        %4778 = vmatmul.mubr.bf16.gmra.mxu0 %v1640
        %v4779 = vpop.f32.mrf.mxu0
        %v4780 = vadd.f32 %v4491, %v4779
        %v4781 = vpop.f32.mrf.mxu0
        %v4782 = vpop.f32.mrf.mxu0
        %v4783 = vadd.f32 %v4494, %v4782
        %v4784 = vpop.f32.mrf.mxu0
        %4785 = vdwg.mxu0
        %v4786 = vadd.f32 %v682, %v3312
        %v4787 = vadd.f32 %v683, %v3314
        %v4788 = vadd.f32 %v684, %v4532
        %v4789 = vadd.f32 %v685, %v3316
        %v4790 = vadd.f32 %v686, %v3318
        %v4791 = vadd.f32 %v687, %v4535
        %v4792 = vadd.f32 %v688, %v3322
        %v4793 = vadd.f32 %v689, %v3324
        %v4794 = vadd.f32 %v690, %v4540
        %v4795 = vadd.f32 %v691, %v3326
        %v4796 = vadd.f32 %v692, %v3328
        %v4797 = vadd.f32 %v693, %v4543
        %v4798 = vadd.f32 %v694, %v3332
        %v4799 = vadd.f32 %v695, %v3334
        %v4800 = vadd.f32 %v696, %v4548
        %v4801 = vadd.f32 %v697, %v3336
        %v4802 = vadd.f32 %v698, %v3338
        %v4803 = vadd.f32 %v699, %v4551
        %v4804 = vadd.f32 %v700, %v3342
        %v4805 = vadd.f32 %v701, %v3344
        %v4806 = vadd.f32 %v702, %v4556
        %v4807 = vadd.f32 %v703, %v3346
        %v4808 = vadd.f32 %v704, %v3348
        %v4809 = vadd.f32 %v705, %v4559
        %v4810 = vadd.f32 %v706, %v3352
        %v4811 = vadd.f32 %v707, %v3354
        %v4812 = vadd.f32 %v708, %v4564
        %v4813 = vadd.f32 %v709, %v3356
        %v4814 = vadd.f32 %v710, %v3358
        %v4815 = vadd.f32 %v711, %v4567
        %v4816 = vadd.f32 %v712, %v3362
        %v4817 = vadd.f32 %v713, %v3364
        %v4818 = vadd.f32 %v714, %v4572
        %v4819 = vadd.f32 %v715, %v3366
        %v4820 = vadd.f32 %v716, %v3368
        %v4821 = vadd.f32 %v717, %v4575
        %v4822 = vadd.f32 %v718, %v3372
        %v4823 = vadd.f32 %v719, %v3374
        %v4824 = vadd.f32 %v720, %v4580
        %v4825 = vadd.f32 %v721, %v3376
        %v4826 = vadd.f32 %v722, %v3378
        %v4827 = vadd.f32 %v723, %v4583
        %v4828 = vadd.f32 %v724, %v3382
        %v4829 = vadd.f32 %v725, %v3384
        %v4830 = vadd.f32 %v726, %v4588
        %v4831 = vadd.f32 %v727, %v3386
        %v4832 = vadd.f32 %v728, %v3388
        %v4833 = vadd.f32 %v729, %v4591
        %v4834 = vadd.f32 %v730, %v3392
        %v4835 = vadd.f32 %v731, %v3394
        %v4836 = vadd.f32 %v732, %v4596
        %v4837 = vadd.f32 %v733, %v3396
        %v4838 = vadd.f32 %v734, %v3398
        %v4839 = vadd.f32 %v735, %v4599
        %v4840 = vadd.f32 %v736, %v3402
        %v4841 = vadd.f32 %v737, %v3404
        %v4842 = vadd.f32 %v738, %v4604
        %v4843 = vadd.f32 %v739, %v3406
        %v4844 = vadd.f32 %v740, %v3408
        %v4845 = vadd.f32 %v741, %v4607
        %v4846 = vadd.f32 %v742, %v3412
        %v4847 = vadd.f32 %v743, %v3414
        %v4848 = vadd.f32 %v744, %v4612
        %v4849 = vadd.f32 %v745, %v3416
        %v4850 = vadd.f32 %v746, %v3418
        %v4851 = vadd.f32 %v747, %v4615
        %v4852 = vadd.f32 %v748, %v3422
        %v4853 = vadd.f32 %v749, %v3424
        %v4854 = vadd.f32 %v750, %v4620
        %v4855 = vadd.f32 %v751, %v3426
        %v4856 = vadd.f32 %v752, %v3428
        %v4857 = vadd.f32 %v753, %v4623
        %v4858 = vadd.f32 %v754, %v3432
        %v4859 = vadd.f32 %v755, %v3434
        %v4860 = vadd.f32 %v756, %v4628
        %v4861 = vadd.f32 %v757, %v3436
        %v4862 = vadd.f32 %v758, %v3438
        %v4863 = vadd.f32 %v759, %v4631
        %v4864 = vadd.f32 %v760, %v3442
        %v4865 = vadd.f32 %v761, %v3444
        %v4866 = vadd.f32 %v762, %v4636
        %v4867 = vadd.f32 %v763, %v3446
        %v4868 = vadd.f32 %v764, %v3448
        %v4869 = vadd.f32 %v765, %v4639
        %v4870 = vadd.f32 %v766, %v3452
        %v4871 = vadd.f32 %v767, %v3454
        %v4872 = vadd.f32 %v768, %v4644
        %v4873 = vadd.f32 %v769, %v3456
        %v4874 = vadd.f32 %v770, %v3458
        %v4875 = vadd.f32 %v771, %v4647
        %v4876 = vadd.f32 %v772, %v3462
        %v4877 = vadd.f32 %v773, %v3464
        %v4878 = vadd.f32 %v774, %v4652
        %v4879 = vadd.f32 %v775, %v3466
        %v4880 = vadd.f32 %v776, %v3468
        %v4881 = vadd.f32 %v777, %v4655
        %v4882 = vadd.f32 %v778, %v3472
        %v4883 = vadd.f32 %v779, %v3474
        %v4884 = vadd.f32 %v780, %v4660
        %v4885 = vadd.f32 %v781, %v3476
        %v4886 = vadd.f32 %v782, %v3478
        %v4887 = vadd.f32 %v783, %v4663
        %v4888 = vadd.f32 %v784, %v3482
        %v4889 = vadd.f32 %v785, %v3484
        %v4890 = vadd.f32 %v786, %v4668
        %v4891 = vadd.f32 %v787, %v3486
        %v4892 = vadd.f32 %v788, %v3488
        %v4893 = vadd.f32 %v789, %v4671
        %v4894 = vadd.f32 %v790, %v3492
        %v4895 = vadd.f32 %v791, %v3494
        %v4896 = vadd.f32 %v792, %v4676
        %v4897 = vadd.f32 %v793, %v3496
        %v4898 = vadd.f32 %v794, %v3498
        %v4899 = vadd.f32 %v795, %v4679
        %v4900 = vadd.f32 %v796, %v3502
        %v4901 = vadd.f32 %v797, %v3504
        %v4902 = vadd.f32 %v798, %v4684
        %v4903 = vadd.f32 %v799, %v3506
        %v4904 = vadd.f32 %v800, %v3508
        %v4905 = vadd.f32 %v801, %v4687
        %v4906 = vadd.f32 %v802, %v3512
        %v4907 = vadd.f32 %v803, %v3514
        %v4908 = vadd.f32 %v804, %v4692
        %v4909 = vadd.f32 %v805, %v3516
        %v4910 = vadd.f32 %v806, %v3518
        %v4911 = vadd.f32 %v807, %v4695
        %v4912 = vadd.f32 %v808, %v3522
        %v4913 = vadd.f32 %v809, %v3524
        %v4914 = vadd.f32 %v810, %v4700
        %v4915 = vadd.f32 %v811, %v3526
        %v4916 = vadd.f32 %v812, %v3528
        %v4917 = vadd.f32 %v813, %v4703
        %v4918 = vadd.f32 %v814, %v3532
        %v4919 = vadd.f32 %v815, %v3534
        %v4920 = vadd.f32 %v816, %v4708
        %v4921 = vadd.f32 %v817, %v3536
        %v4922 = vadd.f32 %v818, %v3538
        %v4923 = vadd.f32 %v819, %v4711
        %v4924 = vadd.f32 %v820, %v3542
        %v4925 = vadd.f32 %v821, %v3544
        %v4926 = vadd.f32 %v822, %v4716
        %v4927 = vadd.f32 %v823, %v3546
        %v4928 = vadd.f32 %v824, %v3548
        %v4929 = vadd.f32 %v825, %v4719
        %v4930 = vadd.f32 %v826, %v3552
        %v4931 = vadd.f32 %v827, %v3554
        %v4932 = vadd.f32 %v828, %v4724
        %v4933 = vadd.f32 %v829, %v3556
        %v4934 = vadd.f32 %v830, %v3558
        %v4935 = vadd.f32 %v831, %v4727
        %v4936 = vadd.f32 %v832, %v3562
        %v4937 = vadd.f32 %v833, %v3564
        %v4938 = vadd.f32 %v834, %v4732
        %v4939 = vadd.f32 %v835, %v3566
        %v4940 = vadd.f32 %v836, %v3568
        %v4941 = vadd.f32 %v837, %v4735
        %v4942 = vadd.f32 %v838, %v3572
        %v4943 = vadd.f32 %v839, %v3574
        %v4944 = vadd.f32 %v840, %v4740
        %v4945 = vadd.f32 %v841, %v3576
        %v4946 = vadd.f32 %v842, %v3578
        %v4947 = vadd.f32 %v843, %v4743
        %v4948 = vadd.f32 %v844, %v3582
        %v4949 = vadd.f32 %v845, %v3584
        %v4950 = vadd.f32 %v846, %v4748
        %v4951 = vadd.f32 %v847, %v3586
        %v4952 = vadd.f32 %v848, %v3588
        %v4953 = vadd.f32 %v849, %v4751
        %v4954 = vadd.f32 %v850, %v3592
        %v4955 = vadd.f32 %v851, %v3594
        %v4956 = vadd.f32 %v852, %v4756
        %v4957 = vadd.f32 %v853, %v3596
        %v4958 = vadd.f32 %v854, %v3598
        %v4959 = vadd.f32 %v855, %v4759
        %v4960 = vadd.f32 %v856, %v3602
        %v4961 = vadd.f32 %v857, %v3604
        %v4962 = vadd.f32 %v858, %v4764
        %v4963 = vadd.f32 %v859, %v3606
        %v4964 = vadd.f32 %v860, %v3608
        %v4965 = vadd.f32 %v861, %v4767
        %v4966 = vadd.f32 %v862, %v3612
        %v4967 = vadd.f32 %v863, %v3614
        %v4968 = vadd.f32 %v864, %v4772
        %v4969 = vadd.f32 %v865, %v3616
        %v4970 = vadd.f32 %v866, %v3618
        %v4971 = vadd.f32 %v867, %v4775
        %v4972 = vadd.f32 %v868, %v3622
        %v4973 = vadd.f32 %v869, %v3624
        %v4974 = vadd.f32 %v870, %v4780
        %v4975 = vadd.f32 %v871, %v3626
        %v4976 = vadd.f32 %v872, %v3628
        %v4977 = vadd.f32 %v873, %v4783
        %4978 = vst [vmem:[%s284] sm:$0xff] %v4786
        %4979 = vst [vmem:[%s284 + $0x8] sm:$0xff] %v4787
        %4980 = vst [vmem:[%s284 + $0x10] sm:$0xff] %v4788
        %4981 = vst [vmem:[%s284 + $0x18] sm:$0xff] %v4789
        %4982 = vst [vmem:[%s284 + $0x20] sm:$0xff] %v4790
        %4983 = vst [vmem:[%s284 + $0x28] sm:$0xff] %v4791
        %4984 = vst [vmem:[%s284 + $0x30] sm:$0xff] %v4792
        %4985 = vst [vmem:[%s284 + $0x38] sm:$0xff] %v4793
        %4986 = vst [vmem:[%s284 + $0x40] sm:$0xff] %v4794
        %4987 = vst [vmem:[%s284 + $0x48] sm:$0xff] %v4795
        %4988 = vst [vmem:[%s284 + $0x50] sm:$0xff] %v4796
        %4989 = vst [vmem:[%s284 + $0x58] sm:$0xff] %v4797
        %4990 = vst [vmem:[%s284 + $0x60] sm:$0xff] %v4798
        %4991 = vst [vmem:[%s284 + $0x68] sm:$0xff] %v4799
        %4992 = vst [vmem:[%s284 + $0x70] sm:$0xff] %v4800
        %4993 = vst [vmem:[%s284 + $0x78] sm:$0xff] %v4801
        %4994 = vst [vmem:[%s284 + $0x80] sm:$0xff] %v4802
        %4995 = vst [vmem:[%s284 + $0x88] sm:$0xff] %v4803
        %4996 = vst [vmem:[%s284 + $0x90] sm:$0xff] %v4804
        %4997 = vst [vmem:[%s284 + $0x98] sm:$0xff] %v4805
        %4998 = vst [vmem:[%s284 + $0xa0] sm:$0xff] %v4806
        %4999 = vst [vmem:[%s284 + $0xa8] sm:$0xff] %v4807
        %5000 = vst [vmem:[%s284 + $0xb0] sm:$0xff] %v4808
        %5001 = vst [vmem:[%s284 + $0xb8] sm:$0xff] %v4809
        %5002 = vst [vmem:[%s284 + $0xc0] sm:$0xff] %v4810
        %5003 = vst [vmem:[%s284 + $0xc8] sm:$0xff] %v4811
        %5004 = vst [vmem:[%s284 + $0xd0] sm:$0xff] %v4812
        %5005 = vst [vmem:[%s284 + $0xd8] sm:$0xff] %v4813
        %5006 = vst [vmem:[%s284 + $0xe0] sm:$0xff] %v4814
        %5007 = vst [vmem:[%s284 + $0xe8] sm:$0xff] %v4815
        %5008 = vst [vmem:[%s284 + $0xf0] sm:$0xff] %v4816
        %5009 = vst [vmem:[%s284 + $0xf8] sm:$0xff] %v4817
        %5010 = vst [vmem:[%s284 + $0x100] sm:$0xff] %v4818
        %5011 = vst [vmem:[%s284 + $0x108] sm:$0xff] %v4819
        %5012 = vst [vmem:[%s284 + $0x110] sm:$0xff] %v4820
        %5013 = vst [vmem:[%s284 + $0x118] sm:$0xff] %v4821
        %5014 = vst [vmem:[%s284 + $0x120] sm:$0xff] %v4822
        %5015 = vst [vmem:[%s284 + $0x128] sm:$0xff] %v4823
        %5016 = vst [vmem:[%s284 + $0x130] sm:$0xff] %v4824
        %5017 = vst [vmem:[%s284 + $0x138] sm:$0xff] %v4825
        %5018 = vst [vmem:[%s284 + $0x140] sm:$0xff] %v4826
        %5019 = vst [vmem:[%s284 + $0x148] sm:$0xff] %v4827
        %5020 = vst [vmem:[%s284 + $0x150] sm:$0xff] %v4828
        %5021 = vst [vmem:[%s284 + $0x158] sm:$0xff] %v4829
        %5022 = vst [vmem:[%s284 + $0x160] sm:$0xff] %v4830
        %5023 = vst [vmem:[%s284 + $0x168] sm:$0xff] %v4831
        %5024 = vst [vmem:[%s284 + $0x170] sm:$0xff] %v4832
        %5025 = vst [vmem:[%s284 + $0x178] sm:$0xff] %v4833
        %5026 = vst [vmem:[%s284 + $0x180] sm:$0xff] %v4834
        %5027 = vst [vmem:[%s284 + $0x188] sm:$0xff] %v4835
        %5028 = vst [vmem:[%s284 + $0x190] sm:$0xff] %v4836
        %5029 = vst [vmem:[%s284 + $0x198] sm:$0xff] %v4837
        %5030 = vst [vmem:[%s284 + $0x1a0] sm:$0xff] %v4838
        %5031 = vst [vmem:[%s284 + $0x1a8] sm:$0xff] %v4839
        %5032 = vst [vmem:[%s284 + $0x1b0] sm:$0xff] %v4840
        %5033 = vst [vmem:[%s284 + $0x1b8] sm:$0xff] %v4841
        %5034 = vst [vmem:[%s284 + $0x1c0] sm:$0xff] %v4842
        %5035 = vst [vmem:[%s284 + $0x1c8] sm:$0xff] %v4843
        %5036 = vst [vmem:[%s284 + $0x1d0] sm:$0xff] %v4844
        %5037 = vst [vmem:[%s284 + $0x1d8] sm:$0xff] %v4845
        %5038 = vst [vmem:[%s284 + $0x1e0] sm:$0xff] %v4846
        %5039 = vst [vmem:[%s284 + $0x1e8] sm:$0xff] %v4847
        %5040 = vst [vmem:[%s284 + $0x1f0] sm:$0xff] %v4848
        %5041 = vst [vmem:[%s284 + $0x1f8] sm:$0xff] %v4849
        %5042 = vst [vmem:[%s284 + $0x200] sm:$0xff] %v4850
        %5043 = vst [vmem:[%s284 + $0x208] sm:$0xff] %v4851
        %5044 = vst [vmem:[%s284 + $0x210] sm:$0xff] %v4852
        %5045 = vst [vmem:[%s284 + $0x218] sm:$0xff] %v4853
        %5046 = vst [vmem:[%s284 + $0x220] sm:$0xff] %v4854
        %5047 = vst [vmem:[%s284 + $0x228] sm:$0xff] %v4855
        %5048 = vst [vmem:[%s284 + $0x230] sm:$0xff] %v4856
        %5049 = vst [vmem:[%s284 + $0x238] sm:$0xff] %v4857
        %5050 = vst [vmem:[%s284 + $0x240] sm:$0xff] %v4858
        %5051 = vst [vmem:[%s284 + $0x248] sm:$0xff] %v4859
        %5052 = vst [vmem:[%s284 + $0x250] sm:$0xff] %v4860
        %5053 = vst [vmem:[%s284 + $0x258] sm:$0xff] %v4861
        %5054 = vst [vmem:[%s284 + $0x260] sm:$0xff] %v4862
        %5055 = vst [vmem:[%s284 + $0x268] sm:$0xff] %v4863
        %5056 = vst [vmem:[%s284 + $0x270] sm:$0xff] %v4864
        %5057 = vst [vmem:[%s284 + $0x278] sm:$0xff] %v4865
        %5058 = vst [vmem:[%s284 + $0x280] sm:$0xff] %v4866
        %5059 = vst [vmem:[%s284 + $0x288] sm:$0xff] %v4867
        %5060 = vst [vmem:[%s284 + $0x290] sm:$0xff] %v4868
        %5061 = vst [vmem:[%s284 + $0x298] sm:$0xff] %v4869
        %5062 = vst [vmem:[%s284 + $0x2a0] sm:$0xff] %v4870
        %5063 = vst [vmem:[%s284 + $0x2a8] sm:$0xff] %v4871
        %5064 = vst [vmem:[%s284 + $0x2b0] sm:$0xff] %v4872
        %5065 = vst [vmem:[%s284 + $0x2b8] sm:$0xff] %v4873
        %5066 = vst [vmem:[%s284 + $0x2c0] sm:$0xff] %v4874
        %5067 = vst [vmem:[%s284 + $0x2c8] sm:$0xff] %v4875
        %5068 = vst [vmem:[%s284 + $0x2d0] sm:$0xff] %v4876
        %5069 = vst [vmem:[%s284 + $0x2d8] sm:$0xff] %v4877
        %5070 = vst [vmem:[%s284 + $0x2e0] sm:$0xff] %v4878
        %5071 = vst [vmem:[%s284 + $0x2e8] sm:$0xff] %v4879
        %5072 = vst [vmem:[%s284 + $0x2f0] sm:$0xff] %v4880
        %5073 = vst [vmem:[%s284 + $0x2f8] sm:$0xff] %v4881
        %5074 = vst [vmem:[%s284 + $0x300] sm:$0xff] %v4882
        %5075 = vst [vmem:[%s284 + $0x308] sm:$0xff] %v4883
        %5076 = vst [vmem:[%s284 + $0x310] sm:$0xff] %v4884
        %5077 = vst [vmem:[%s284 + $0x318] sm:$0xff] %v4885
        %5078 = vst [vmem:[%s284 + $0x320] sm:$0xff] %v4886
        %5079 = vst [vmem:[%s284 + $0x328] sm:$0xff] %v4887
        %5080 = vst [vmem:[%s284 + $0x330] sm:$0xff] %v4888
        %5081 = vst [vmem:[%s284 + $0x338] sm:$0xff] %v4889
        %5082 = vst [vmem:[%s284 + $0x340] sm:$0xff] %v4890
        %5083 = vst [vmem:[%s284 + $0x348] sm:$0xff] %v4891
        %5084 = vst [vmem:[%s284 + $0x350] sm:$0xff] %v4892
        %5085 = vst [vmem:[%s284 + $0x358] sm:$0xff] %v4893
        %5086 = vst [vmem:[%s284 + $0x360] sm:$0xff] %v4894
        %5087 = vst [vmem:[%s284 + $0x368] sm:$0xff] %v4895
        %5088 = vst [vmem:[%s284 + $0x370] sm:$0xff] %v4896
        %5089 = vst [vmem:[%s284 + $0x378] sm:$0xff] %v4897
        %5090 = vst [vmem:[%s284 + $0x380] sm:$0xff] %v4898
        %5091 = vst [vmem:[%s284 + $0x388] sm:$0xff] %v4899
        %5092 = vst [vmem:[%s284 + $0x390] sm:$0xff] %v4900
        %5093 = vst [vmem:[%s284 + $0x398] sm:$0xff] %v4901
        %5094 = vst [vmem:[%s284 + $0x3a0] sm:$0xff] %v4902
        %5095 = vst [vmem:[%s284 + $0x3a8] sm:$0xff] %v4903
        %5096 = vst [vmem:[%s284 + $0x3b0] sm:$0xff] %v4904
        %5097 = vst [vmem:[%s284 + $0x3b8] sm:$0xff] %v4905
        %5098 = vst [vmem:[%s284 + $0x3c0] sm:$0xff] %v4906
        %5099 = vst [vmem:[%s284 + $0x3c8] sm:$0xff] %v4907
        %5100 = vst [vmem:[%s284 + $0x3d0] sm:$0xff] %v4908
        %5101 = vst [vmem:[%s284 + $0x3d8] sm:$0xff] %v4909
        %5102 = vst [vmem:[%s284 + $0x3e0] sm:$0xff] %v4910
        %5103 = vst [vmem:[%s284 + $0x3e8] sm:$0xff] %v4911
        %5104 = vst [vmem:[%s284 + $0x3f0] sm:$0xff] %v4912
        %5105 = vst [vmem:[%s284 + $0x3f8] sm:$0xff] %v4913
        %5106 = vst [vmem:[%s284 + $0x400] sm:$0xff] %v4914
        %5107 = vst [vmem:[%s284 + $0x408] sm:$0xff] %v4915
        %5108 = vst [vmem:[%s284 + $0x410] sm:$0xff] %v4916
        %5109 = vst [vmem:[%s284 + $0x418] sm:$0xff] %v4917
        %5110 = vst [vmem:[%s284 + $0x420] sm:$0xff] %v4918
        %5111 = vst [vmem:[%s284 + $0x428] sm:$0xff] %v4919
        %5112 = vst [vmem:[%s284 + $0x430] sm:$0xff] %v4920
        %5113 = vst [vmem:[%s284 + $0x438] sm:$0xff] %v4921
        %5114 = vst [vmem:[%s284 + $0x440] sm:$0xff] %v4922
        %5115 = vst [vmem:[%s284 + $0x448] sm:$0xff] %v4923
        %5116 = vst [vmem:[%s284 + $0x450] sm:$0xff] %v4924
        %5117 = vst [vmem:[%s284 + $0x458] sm:$0xff] %v4925
        %5118 = vst [vmem:[%s284 + $0x460] sm:$0xff] %v4926
        %5119 = vst [vmem:[%s284 + $0x468] sm:$0xff] %v4927
        %5120 = vst [vmem:[%s284 + $0x470] sm:$0xff] %v4928
        %5121 = vst [vmem:[%s284 + $0x478] sm:$0xff] %v4929
        %5122 = vst [vmem:[%s284 + $0x480] sm:$0xff] %v4930
        %5123 = vst [vmem:[%s284 + $0x488] sm:$0xff] %v4931
        %5124 = vst [vmem:[%s284 + $0x490] sm:$0xff] %v4932
        %5125 = vst [vmem:[%s284 + $0x498] sm:$0xff] %v4933
        %5126 = vst [vmem:[%s284 + $0x4a0] sm:$0xff] %v4934
        %5127 = vst [vmem:[%s284 + $0x4a8] sm:$0xff] %v4935
        %5128 = vst [vmem:[%s284 + $0x4b0] sm:$0xff] %v4936
        %5129 = vst [vmem:[%s284 + $0x4b8] sm:$0xff] %v4937
        %5130 = vst [vmem:[%s284 + $0x4c0] sm:$0xff] %v4938
        %5131 = vst [vmem:[%s284 + $0x4c8] sm:$0xff] %v4939
        %5132 = vst [vmem:[%s284 + $0x4d0] sm:$0xff] %v4940
        %5133 = vst [vmem:[%s284 + $0x4d8] sm:$0xff] %v4941
        %5134 = vst [vmem:[%s284 + $0x4e0] sm:$0xff] %v4942
        %5135 = vst [vmem:[%s284 + $0x4e8] sm:$0xff] %v4943
        %5136 = vst [vmem:[%s284 + $0x4f0] sm:$0xff] %v4944
        %5137 = vst [vmem:[%s284 + $0x4f8] sm:$0xff] %v4945
        %5138 = vst [vmem:[%s284 + $0x500] sm:$0xff] %v4946
        %5139 = vst [vmem:[%s284 + $0x508] sm:$0xff] %v4947
        %5140 = vst [vmem:[%s284 + $0x510] sm:$0xff] %v4948
        %5141 = vst [vmem:[%s284 + $0x518] sm:$0xff] %v4949
        %5142 = vst [vmem:[%s284 + $0x520] sm:$0xff] %v4950
        %5143 = vst [vmem:[%s284 + $0x528] sm:$0xff] %v4951
        %5144 = vst [vmem:[%s284 + $0x530] sm:$0xff] %v4952
        %5145 = vst [vmem:[%s284 + $0x538] sm:$0xff] %v4953
        %5146 = vst [vmem:[%s284 + $0x540] sm:$0xff] %v4954
        %5147 = vst [vmem:[%s284 + $0x548] sm:$0xff] %v4955
        %5148 = vst [vmem:[%s284 + $0x550] sm:$0xff] %v4956
        %5149 = vst [vmem:[%s284 + $0x558] sm:$0xff] %v4957
        %5150 = vst [vmem:[%s284 + $0x560] sm:$0xff] %v4958
        %5151 = vst [vmem:[%s284 + $0x568] sm:$0xff] %v4959
        %5152 = vst [vmem:[%s284 + $0x570] sm:$0xff] %v4960
        %5153 = vst [vmem:[%s284 + $0x578] sm:$0xff] %v4961
        %5154 = vst [vmem:[%s284 + $0x580] sm:$0xff] %v4962
        %5155 = vst [vmem:[%s284 + $0x588] sm:$0xff] %v4963
        %5156 = vst [vmem:[%s284 + $0x590] sm:$0xff] %v4964
        %5157 = vst [vmem:[%s284 + $0x598] sm:$0xff] %v4965
        %5158 = vst [vmem:[%s284 + $0x5a0] sm:$0xff] %v4966
        %5159 = vst [vmem:[%s284 + $0x5a8] sm:$0xff] %v4967
        %5160 = vst [vmem:[%s284 + $0x5b0] sm:$0xff] %v4968
        %5161 = vst [vmem:[%s284 + $0x5b8] sm:$0xff] %v4969
        %5162 = vst [vmem:[%s284 + $0x5c0] sm:$0xff] %v4970
        %5163 = vst [vmem:[%s284 + $0x5c8] sm:$0xff] %v4971
        %5164 = vst [vmem:[%s284 + $0x5d0] sm:$0xff] %v4972
        %5165 = vst [vmem:[%s284 + $0x5d8] sm:$0xff] %v4973
        %5166 = vst [vmem:[%s284 + $0x5e0] sm:$0xff] %v4974
        %5167 = vst [vmem:[%s284 + $0x5e8] sm:$0xff] %v4975
        %5168 = vst [vmem:[%s284 + $0x5f0] sm:$0xff] %v4976
        %5169 = vst [vmem:[%s284 + $0x5f8] sm:$0xff] %v4977
        %s5170 = sand.u32 %s134, 1
        %s5171 = scalar_lea.sflag [#allocation4], %s5170
        %s5172 = sand.u32 %s134, 1
        %s5173 = smul.addr %s5172, 1536
        %s5174 = scalar_lea.vmem [#allocation8], %s5173
        // Predicated region
        $region49: #{tpu_custom_call.1} parent=31 // pred_check
          %p5175 = pneg %p144
        $region50: #{tpu_custom_call.1} parent=31 // pred_check_branch
          %5177 = sbr.rel (%p5175) target = $region52
        $region51: #{tpu_custom_call.1} parent=31 // pred_region
          %s5178 = smul.u32 64, %s26
          %s5179 = smul.u32 3, %s27
          %s5181 = ssub.s32 24576, 24576
          %5182 = vsyncadd %s5171, %s5181
          %s5183 = smul.addr %s5178, 6
          %s5184 = sadd.s32 %s5179, %s5183
          %s5185 = smul.addr %s5184, 128
          %s5186 = scalar_lea.hbm %s3, %s5185
          %s5187 = sshll.u32 %s5174, 4
          %s5188 = int_to_ptr.vmem [resolvable:$true] %s5187
          %5193 = dma.vmem_to_hbm [thread:$0]  %s5188, 24576, %s5186, %s5171, 384, 768, 24
        $region52: #{tpu_custom_call.1} parent=31 // pred_fallthru
          _
      $region32: #{tpu_custom_call.1} parent=5 // pred_fallthru
        _
      %p5194 = scmp.le.s32.totalorder 2, %s16
      // Predicated region
      $region53: #{tpu_custom_call.1} parent=5 // pred_check
        %p5195 = pneg %p5194
      $region54: #{tpu_custom_call.1} parent=5 // pred_check_branch
        %5197 = sbr.rel (%p5195) target = $region56
      $region55: #{tpu_custom_call.1} parent=5 // pred_region
        %s5198 = ssub.s32 %s16, 2
        // Predicated region
        $region57: #{tpu_custom_call.1} parent=55 // pred_check
          %p5199 = pneg %p150
        $region58: #{tpu_custom_call.1} parent=55 // pred_check_branch
          %5201 = sbr.rel (%p5199) target = $region60
        $region59: #{tpu_custom_call.1} parent=55 // pred_region
          %s5202 = sand.u32 %s135, 1
          %s5203 = scalar_lea.sflag [#allocation4], %s5202
          %s5204 = sand.u32 %s135, 1
          %s5205 = smul.addr %s5204, 1536
          %s5206 = scalar_lea.vmem [#allocation8], %s5205
          %5207 = dma.done %s5203, 24576
        $region60: #{tpu_custom_call.1} parent=55 // pred_fallthru
          _
      $region56: #{tpu_custom_call.1} parent=5 // pred_fallthru
        _
    $region6: #{tpu_custom_call.1} parent=1 // loop_footer
      %s20 = sadd.s32 1, %s16
    $region7: #{tpu_custom_call.1} parent=1 // loop_footer_branch
      %15 = sbr.rel target = $region3
    $region8: #{tpu_custom_call.1} parent=1 // loop_exit
      _
    %5208 = vsyncpa [#allocation3], 1
    %s5209 = scalar_lea.sflag [#allocation3], 1
    %5210 = vsyncpa %s5209, 1
    %5211 = vsyncpa [#allocation6], 1
    %5212 = vsyncpa [#allocation4], 1
    %s5213 = scalar_lea.sflag [#allocation4], 1
    %5214 = vsyncpa %s5213, 1

</llo_original>
